<compile_context>
chip_gen: v7x
topology: tpu7x:2x2x1
jax: 0.10.0
libtpu: 0.0.40
codegen_flags: <defaults>
</compile_context>

<pallas_src>
import functools

import jax
import jax.numpy as jnp
from jax import lax
from jax.experimental import pallas as pl
from jax.experimental.pallas import tpu as pltpu

DROPOUT_RATE = 0.2      # eval mode -> identity
BLOCK_SIZE = 256        # max sequence length (causal mask size)
N_EMBEDDING = 384
N_HEAD = 6


def _mha_kernel(x_ref, wqkv_ref, wp_ref, bp_ref, o_ref, *,
                n_heads, head_size, n_embed):
    """grid = (B,).  All heads computed inside the body:
       - one fused QKV projection  (T, C) @ (C, 3*H*hs)
       - per-head causal softmax attention (hs = 64 is inherent to the algo)
       - one output projection     (T, H*hs) @ (H*hs, C)
    MXU inputs are bf16 with f32 accumulation; softmax math stays f32."""
    T = x_ref.shape[1]
    HD = n_heads * head_size

    x = x_ref[0].astype(jnp.bfloat16)              # (T, C)
    w_qkv = wqkv_ref[...].astype(jnp.bfloat16)     # (C, 3*HD)
    w_proj = wp_ref[...].astype(jnp.bfloat16)      # (HD, C)

    # Fused QKV projection: single MXU pass, K = C = 384, N = 3*HD = 1152.
    qkv = jnp.dot(x, w_qkv, preferred_element_type=jnp.float32)   # (T, 3*HD) f32

    # Faithful PyTorch scaling C ** (-0.5) (C = N_EMBEDDING), folded into q
    # (T x hs work instead of T x T on the score path).
    scale = jnp.float32(n_embed) ** jnp.float32(-0.5)
    q_all = (qkv[:, :HD] * scale).astype(jnp.bfloat16)            # (T, HD)
    k_all = qkv[:, HD:2 * HD].astype(jnp.bfloat16)                # (T, HD)
    v_all = qkv[:, 2 * HD:].astype(jnp.bfloat16)                  # (T, HD)

    # Causal (lower-triangular) mask, built once and reused by every head.
    row = lax.broadcasted_iota(jnp.int32, (T, T), 0)
    col = lax.broadcasted_iota(jnp.int32, (T, T), 1)
    causal = col <= row

    head_outs = []
    for h in range(n_heads):
        lo, hi = h * head_size, (h + 1) * head_size
        q = q_all[:, lo:hi]                                       # (T, hs)
        k = k_all[:, lo:hi]
        v = v_all[:, lo:hi]

        # q @ k.T without materializing the transpose.
        scores = lax.dot_general(q, k, (((1,), (1,)), ((), ())),
                                 preferred_element_type=jnp.float32)  # (T, T)
        scores = jnp.where(causal, scores, -jnp.inf)

        # softmax in f32; attention dropout is identity in eval mode.
        m = jnp.max(scores, axis=-1, keepdims=True)
        p = jnp.exp(scores - m)
        wei = p * pl.reciprocal(jnp.sum(p, axis=-1, keepdims=True),
                                approx=True)

        head_outs.append(
            jnp.dot(wei.astype(jnp.bfloat16), v,
                    preferred_element_type=jnp.float32))          # (T, hs)

    # concat(heads) then ONE output projection with K = HD = 384, N = C = 384.
    cat = jnp.concatenate(head_outs, axis=-1).astype(jnp.bfloat16)   # (T, HD)
    out = jnp.dot(cat, w_proj, preferred_element_type=jnp.float32)   # (T, C)

    # output dropout: eval mode -> identity
    o_ref[0] = (out + bp_ref[...]).astype(o_ref.dtype)


def multi_head_attention(x, wq, wk, wv, wp, bp):
    """x: (B, T, C) f32.  wq/wk/wv: (H, C, hs).  wp: (H, hs, C).  bp: (1, C)."""
    B, T, C = x.shape
    H, _, hs = wq.shape
    HD = H * hs

    # Fuse per-head weights once (layout prep, not per-step compute):
    #   W_qkv[:, h*hs:(h+1)*hs]          == Wq[h]
    #   W_qkv[:, HD + h*hs : ...]        == Wk[h]
    #   W_qkv[:, 2*HD + h*hs : ...]      == Wv[h]
    wq_full = jnp.transpose(wq, (1, 0, 2)).reshape(C, HD)
    wk_full = jnp.transpose(wk, (1, 0, 2)).reshape(C, HD)
    wv_full = jnp.transpose(wv, (1, 0, 2)).reshape(C, HD)
    w_qkv = jnp.concatenate([wq_full, wk_full, wv_full], axis=-1)   # (C, 3*HD)
    wp_full = wp.reshape(HD, C)                                     # (HD, C)

    kernel = functools.partial(_mha_kernel, n_heads=H, head_size=hs, n_embed=C)

    # NOTE(v7x): with grid=(B,) there are B parallel units of work; if B == 1,
    # add a query-row tile axis marked "parallel" so both TensorCores are used.
    return pl.pallas_call(
        kernel,
        out_shape=jax.ShapeDtypeStruct((B, T, C), x.dtype),
        grid_spec=pltpu.PrefetchScalarGridSpec(
            num_scalar_prefetch=0,
            grid=(B,),
            in_specs=[
                pl.BlockSpec((1, T, C), lambda b: (b, 0, 0)),   # x (per-batch)
                pl.BlockSpec((C, 3 * HD), lambda b: (0, 0)),    # fused W_qkv (resident)
                pl.BlockSpec((HD, C), lambda b: (0, 0)),        # W_proj (resident)
                pl.BlockSpec((1, C), lambda b: (0, 0)),         # b_proj
            ],
            out_specs=pl.BlockSpec((1, T, C), lambda b: (b, 0, 0)),
        ),
        compiler_params=pltpu.CompilerParams(
            dimension_semantics=("parallel",),
        ),
    )(x, w_qkv, wp_full, bp)


def _reference(x, wq, wk, wv, wp, bp):
    """Pure-JAX f32 reference mirroring the PyTorch forward (eval mode)."""
    B, T, C = x.shape
    H = wq.shape[0]
    outs = []
    for h in range(H):
        q = x @ wq[h]
        k = x @ wk[h]
        v = x @ wv[h]
        wei = (q @ jnp.swapaxes(k, -2, -1)) * (C ** -0.5)
        mask = jnp.tril(jnp.ones((T, T), dtype=bool))
        wei = jnp.where(mask, wei, -jnp.inf)
        wei = jax.nn.softmax(wei, axis=-1)
        outs.append(wei @ v)
    cat = jnp.concatenate(outs, axis=-1)                          # (B, T, H*hs)
    wp_full = jnp.concatenate([wp[h] for h in range(H)], axis=0)  # (H*hs, C)
    return cat @ wp_full + bp[0]


if __name__ == "__main__":
    B = 2
    T = 128                      # <= BLOCK_SIZE
    C = N_EMBEDDING              # 384 (fixed by the module)
    H = N_HEAD                   # 6
    hs = C // H                  # 64

    key = jax.random.PRNGKey(0)
    kx, kq, kk, kv, kp, kb = jax.random.split(key, 6)

    # nn.Linear-style init: U(-1/sqrt(fan_in), 1/sqrt(fan_in))
    lim_in = 1.0 / jnp.sqrt(jnp.float32(C))
    x = jax.random.normal(kx, (B, T, C), dtype=jnp.float32)
    wq = jax.random.uniform(kq, (H, C, hs), jnp.float32, -lim_in, lim_in)
    wk = jax.random.uniform(kk, (H, C, hs), jnp.float32, -lim_in, lim_in)
    wv = jax.random.uniform(kv, (H, C, hs), jnp.float32, -lim_in, lim_in)
    wp = jax.random.uniform(kp, (H, hs, C), jnp.float32, -lim_in, lim_in)
    bp = jax.random.uniform(kb, (1, C), jnp.float32, -lim_in, lim_in)

    out = multi_head_attention(x, wq, wk, wv, wp, bp)
    out = jax.block_until_ready(out)

    ref = _reference(x, wq, wk, wv, wp, bp)
    assert out.shape == (B, T, C)
    err = float(jnp.max(jnp.abs(out - ref)))
    # Tolerance loosened vs. pure-f32: MXU inputs are bf16 (f32 accumulation)
    # and the softmax denominator uses the approx (EUP) reciprocal.
    assert jnp.allclose(out, ref, atol=3e-2, rtol=3e-2), err

    print("KERNEL_OK")
</pallas_src>

<mosaic_0001>
module attributes {stable_mosaic.version = 11 : i64} {
  func.func @_mha_kernel(%arg0: i32, %arg1: memref<1x128x384xf32, #tpu.memory_space<vmem>>, %arg2: memref<384x1152xf32, #tpu.memory_space<vmem>>, %arg3: memref<384x384xf32, #tpu.memory_space<vmem>>, %arg4: memref<1x384xf32, #tpu.memory_space<vmem>>, %arg5: memref<1x128x384xf32, #tpu.memory_space<vmem>>) attributes {dimension_semantics = [#tpu.dimension_semantics<parallel>], iteration_bounds = array<i64: 2>, scalar_prefetch = 0 : i64, scratch_operands = 0 : i64, tpu.core_type = #tpu.core_type<tc>, window_params = [{transform_indices = @transform_0, window_bounds = array<i64: 1, 128, 384>}, {pipeline_mode = #tpu.pipeline_mode<synchronous>, transform_indices = @transform_1, window_bounds = array<i64: 384, 1152>}, {pipeline_mode = #tpu.pipeline_mode<synchronous>, transform_indices = @transform_2, window_bounds = array<i64: 384, 384>}, {pipeline_mode = #tpu.pipeline_mode<synchronous>, transform_indices = @transform_3, window_bounds = array<i64: 1, 384>}, {transform_indices = @transform_4, window_bounds = array<i64: 1, 128, 384>}]} {
    %c0 = arith.constant 0 : index
    %c0_0 = arith.constant 0 : index
    %c0_1 = arith.constant 0 : index
    %0 = vector.load %arg1[%c0, %c0_0, %c0_1] : memref<1x128x384xf32, #tpu.memory_space<vmem>>, vector<1x128x384xf32>
    %1 = vector.shape_cast %0 : vector<1x128x384xf32> to vector<128x384xf32>
    %2 = arith.truncf %1 : vector<128x384xf32> to vector<128x384xbf16>
    %c0_2 = arith.constant 0 : index
    %c0_3 = arith.constant 0 : index
    %3 = vector.load %arg2[%c0_2, %c0_3] : memref<384x1152xf32, #tpu.memory_space<vmem>>, vector<384x1152xf32>
    %4 = arith.truncf %3 : vector<384x1152xf32> to vector<384x1152xbf16>
    %c0_4 = arith.constant 0 : index
    %c0_5 = arith.constant 0 : index
    %5 = vector.load %arg3[%c0_4, %c0_5] : memref<384x384xf32, #tpu.memory_space<vmem>>, vector<384x384xf32>
    %6 = arith.truncf %5 : vector<384x384xf32> to vector<384x384xbf16>
    %cst = arith.constant dense<0.000000e+00> : vector<128x1152xf32>
    %7 = tpu.matmul %2, %4, %cst {dimension_numbers = #tpu.dot_dimension_numbers<[1], [0], [0], [1], [0, 0, 1, 1], [], []>} : vector<128x384xbf16>, vector<384x1152xbf16>, vector<128x1152xf32> -> vector<128x1152xf32>
    %cst_6 = arith.constant 3.840000e+02 : f32
    %cst_7 = arith.constant -5.000000e-01 : f32
    %8 = math.powf %cst_6, %cst_7 : f32
    %9 = vector.extract_strided_slice %7 {offsets = [0, 0], sizes = [128, 384], strides = [1, 1]} : vector<128x1152xf32> to vector<128x384xf32>
    %10 = vector.broadcast %8 : f32 to vector<128x384xf32>
    %11 = arith.mulf %9, %10 : vector<128x384xf32>
    %12 = arith.truncf %11 : vector<128x384xf32> to vector<128x384xbf16>
    %13 = vector.extract_strided_slice %7 {offsets = [0, 384], sizes = [128, 384], strides = [1, 1]} : vector<128x1152xf32> to vector<128x384xf32>
    %14 = arith.truncf %13 : vector<128x384xf32> to vector<128x384xbf16>
    %15 = vector.extract_strided_slice %7 {offsets = [0, 768], sizes = [128, 384], strides = [1, 1]} : vector<128x1152xf32> to vector<128x384xf32>
    %16 = arith.truncf %15 : vector<128x384xf32> to vector<128x384xbf16>
    %17 = tpu.iota {dimensions = array<i32: 0>} : vector<128x128xi32>
    %18 = tpu.iota {dimensions = array<i32: 1>} : vector<128x128xi32>
    %19 = arith.cmpi sle, %18, %17 : vector<128x128xi32>
    %20 = vector.extract_strided_slice %12 {offsets = [0, 0], sizes = [128, 64], strides = [1, 1]} : vector<128x384xbf16> to vector<128x64xbf16>
    %21 = vector.extract_strided_slice %14 {offsets = [0, 0], sizes = [128, 64], strides = [1, 1]} : vector<128x384xbf16> to vector<128x64xbf16>
    %22 = vector.extract_strided_slice %16 {offsets = [0, 0], sizes = [128, 64], strides = [1, 1]} : vector<128x384xbf16> to vector<128x64xbf16>
    %cst_8 = arith.constant dense<0.000000e+00> : vector<128x128xf32>
    %23 = tpu.matmul %20, %21, %cst_8 {dimension_numbers = #tpu.dot_dimension_numbers<[1], [1], [0], [0], [0, 0, 1, 0], [], []>} : vector<128x64xbf16>, vector<128x64xbf16>, vector<128x128xf32> -> vector<128x128xf32>
    %cst_9 = arith.constant 0xFF800000 : f32
    %24 = vector.broadcast %cst_9 : f32 to vector<128x128xf32>
    %25 = arith.select %19, %23, %24 : vector<128x128xi1>, vector<128x128xf32>
    %cst_10 = arith.constant dense<0xFF800000> : vector<128xf32>
    %26 = vector.multi_reduction <maximumf>, %25, %cst_10 [1] : vector<128x128xf32> to vector<128xf32>
    %27 = vector.shape_cast %26 : vector<128xf32> to vector<128x1xf32>
    %28 = vector.broadcast %27 : vector<128x1xf32> to vector<128x128xf32>
    %29 = arith.subf %25, %28 : vector<128x128xf32>
    %30 = math.exp %29 : vector<128x128xf32>
    %cst_11 = arith.constant dense<0.000000e+00> : vector<128xf32>
    %31 = vector.multi_reduction <add>, %30, %cst_11 [1] : vector<128x128xf32> to vector<128xf32>
    %32 = vector.shape_cast %31 : vector<128xf32> to vector<128x1xf32>
    %33 = tpu.reciprocal %32 {approx = true} : vector<128x1xf32> -> vector<128x1xf32>
    %34 = vector.broadcast %33 : vector<128x1xf32> to vector<128x128xf32>
    %35 = arith.mulf %30, %34 : vector<128x128xf32>
    %36 = arith.truncf %35 : vector<128x128xf32> to vector<128x128xbf16>
    %cst_12 = arith.constant dense<0.000000e+00> : vector<128x64xf32>
    %37 = tpu.matmul %36, %22, %cst_12 {dimension_numbers = #tpu.dot_dimension_numbers<[1], [0], [0], [1], [0, 0, 1, 1], [], []>} : vector<128x128xbf16>, vector<128x64xbf16>, vector<128x64xf32> -> vector<128x64xf32>
    %38 = vector.extract_strided_slice %12 {offsets = [0, 64], sizes = [128, 64], strides = [1, 1]} : vector<128x384xbf16> to vector<128x64xbf16>
    %39 = vector.extract_strided_slice %14 {offsets = [0, 64], sizes = [128, 64], strides = [1, 1]} : vector<128x384xbf16> to vector<128x64xbf16>
    %40 = vector.extract_strided_slice %16 {offsets = [0, 64], sizes = [128, 64], strides = [1, 1]} : vector<128x384xbf16> to vector<128x64xbf16>
    %cst_13 = arith.constant dense<0.000000e+00> : vector<128x128xf32>
    %41 = tpu.matmul %38, %39, %cst_13 {dimension_numbers = #tpu.dot_dimension_numbers<[1], [1], [0], [0], [0, 0, 1, 0], [], []>} : vector<128x64xbf16>, vector<128x64xbf16>, vector<128x128xf32> -> vector<128x128xf32>
    %cst_14 = arith.constant 0xFF800000 : f32
    %42 = vector.broadcast %cst_14 : f32 to vector<128x128xf32>
    %43 = arith.select %19, %41, %42 : vector<128x128xi1>, vector<128x128xf32>
    %cst_15 = arith.constant dense<0xFF800000> : vector<128xf32>
    %44 = vector.multi_reduction <maximumf>, %43, %cst_15 [1] : vector<128x128xf32> to vector<128xf32>
    %45 = vector.shape_cast %44 : vector<128xf32> to vector<128x1xf32>
    %46 = vector.broadcast %45 : vector<128x1xf32> to vector<128x128xf32>
    %47 = arith.subf %43, %46 : vector<128x128xf32>
    %48 = math.exp %47 : vector<128x128xf32>
    %cst_16 = arith.constant dense<0.000000e+00> : vector<128xf32>
    %49 = vector.multi_reduction <add>, %48, %cst_16 [1] : vector<128x128xf32> to vector<128xf32>
    %50 = vector.shape_cast %49 : vector<128xf32> to vector<128x1xf32>
    %51 = tpu.reciprocal %50 {approx = true} : vector<128x1xf32> -> vector<128x1xf32>
    %52 = vector.broadcast %51 : vector<128x1xf32> to vector<128x128xf32>
    %53 = arith.mulf %48, %52 : vector<128x128xf32>
    %54 = arith.truncf %53 : vector<128x128xf32> to vector<128x128xbf16>
    %cst_17 = arith.constant dense<0.000000e+00> : vector<128x64xf32>
    %55 = tpu.matmul %54, %40, %cst_17 {dimension_numbers = #tpu.dot_dimension_numbers<[1], [0], [0], [1], [0, 0, 1, 1], [], []>} : vector<128x128xbf16>, vector<128x64xbf16>, vector<128x64xf32> -> vector<128x64xf32>
    %56 = vector.extract_strided_slice %12 {offsets = [0, 128], sizes = [128, 64], strides = [1, 1]} : vector<128x384xbf16> to vector<128x64xbf16>
    %57 = vector.extract_strided_slice %14 {offsets = [0, 128], sizes = [128, 64], strides = [1, 1]} : vector<128x384xbf16> to vector<128x64xbf16>
    %58 = vector.extract_strided_slice %16 {offsets = [0, 128], sizes = [128, 64], strides = [1, 1]} : vector<128x384xbf16> to vector<128x64xbf16>
    %cst_18 = arith.constant dense<0.000000e+00> : vector<128x128xf32>
    %59 = tpu.matmul %56, %57, %cst_18 {dimension_numbers = #tpu.dot_dimension_numbers<[1], [1], [0], [0], [0, 0, 1, 0], [], []>} : vector<128x64xbf16>, vector<128x64xbf16>, vector<128x128xf32> -> vector<128x128xf32>
    %cst_19 = arith.constant 0xFF800000 : f32
    %60 = vector.broadcast %cst_19 : f32 to vector<128x128xf32>
    %61 = arith.select %19, %59, %60 : vector<128x128xi1>, vector<128x128xf32>
    %cst_20 = arith.constant dense<0xFF800000> : vector<128xf32>
    %62 = vector.multi_reduction <maximumf>, %61, %cst_20 [1] : vector<128x128xf32> to vector<128xf32>
    %63 = vector.shape_cast %62 : vector<128xf32> to vector<128x1xf32>
    %64 = vector.broadcast %63 : vector<128x1xf32> to vector<128x128xf32>
    %65 = arith.subf %61, %64 : vector<128x128xf32>
    %66 = math.exp %65 : vector<128x128xf32>
    %cst_21 = arith.constant dense<0.000000e+00> : vector<128xf32>
    %67 = vector.multi_reduction <add>, %66, %cst_21 [1] : vector<128x128xf32> to vector<128xf32>
    %68 = vector.shape_cast %67 : vector<128xf32> to vector<128x1xf32>
    %69 = tpu.reciprocal %68 {approx = true} : vector<128x1xf32> -> vector<128x1xf32>
    %70 = vector.broadcast %69 : vector<128x1xf32> to vector<128x128xf32>
    %71 = arith.mulf %66, %70 : vector<128x128xf32>
    %72 = arith.truncf %71 : vector<128x128xf32> to vector<128x128xbf16>
    %cst_22 = arith.constant dense<0.000000e+00> : vector<128x64xf32>
    %73 = tpu.matmul %72, %58, %cst_22 {dimension_numbers = #tpu.dot_dimension_numbers<[1], [0], [0], [1], [0, 0, 1, 1], [], []>} : vector<128x128xbf16>, vector<128x64xbf16>, vector<128x64xf32> -> vector<128x64xf32>
    %74 = vector.extract_strided_slice %12 {offsets = [0, 192], sizes = [128, 64], strides = [1, 1]} : vector<128x384xbf16> to vector<128x64xbf16>
    %75 = vector.extract_strided_slice %14 {offsets = [0, 192], sizes = [128, 64], strides = [1, 1]} : vector<128x384xbf16> to vector<128x64xbf16>
    %76 = vector.extract_strided_slice %16 {offsets = [0, 192], sizes = [128, 64], strides = [1, 1]} : vector<128x384xbf16> to vector<128x64xbf16>
    %cst_23 = arith.constant dense<0.000000e+00> : vector<128x128xf32>
    %77 = tpu.matmul %74, %75, %cst_23 {dimension_numbers = #tpu.dot_dimension_numbers<[1], [1], [0], [0], [0, 0, 1, 0], [], []>} : vector<128x64xbf16>, vector<128x64xbf16>, vector<128x128xf32> -> vector<128x128xf32>
    %cst_24 = arith.constant 0xFF800000 : f32
    %78 = vector.broadcast %cst_24 : f32 to vector<128x128xf32>
    %79 = arith.select %19, %77, %78 : vector<128x128xi1>, vector<128x128xf32>
    %cst_25 = arith.constant dense<0xFF800000> : vector<128xf32>
    %80 = vector.multi_reduction <maximumf>, %79, %cst_25 [1] : vector<128x128xf32> to vector<128xf32>
    %81 = vector.shape_cast %80 : vector<128xf32> to vector<128x1xf32>
    %82 = vector.broadcast %81 : vector<128x1xf32> to vector<128x128xf32>
    %83 = arith.subf %79, %82 : vector<128x128xf32>
    %84 = math.exp %83 : vector<128x128xf32>
    %cst_26 = arith.constant dense<0.000000e+00> : vector<128xf32>
    %85 = vector.multi_reduction <add>, %84, %cst_26 [1] : vector<128x128xf32> to vector<128xf32>
    %86 = vector.shape_cast %85 : vector<128xf32> to vector<128x1xf32>
    %87 = tpu.reciprocal %86 {approx = true} : vector<128x1xf32> -> vector<128x1xf32>
    %88 = vector.broadcast %87 : vector<128x1xf32> to vector<128x128xf32>
    %89 = arith.mulf %84, %88 : vector<128x128xf32>
    %90 = arith.truncf %89 : vector<128x128xf32> to vector<128x128xbf16>
    %cst_27 = arith.constant dense<0.000000e+00> : vector<128x64xf32>
    %91 = tpu.matmul %90, %76, %cst_27 {dimension_numbers = #tpu.dot_dimension_numbers<[1], [0], [0], [1], [0, 0, 1, 1], [], []>} : vector<128x128xbf16>, vector<128x64xbf16>, vector<128x64xf32> -> vector<128x64xf32>
    %92 = vector.extract_strided_slice %12 {offsets = [0, 256], sizes = [128, 64], strides = [1, 1]} : vector<128x384xbf16> to vector<128x64xbf16>
    %93 = vector.extract_strided_slice %14 {offsets = [0, 256], sizes = [128, 64], strides = [1, 1]} : vector<128x384xbf16> to vector<128x64xbf16>
    %94 = vector.extract_strided_slice %16 {offsets = [0, 256], sizes = [128, 64], strides = [1, 1]} : vector<128x384xbf16> to vector<128x64xbf16>
    %cst_28 = arith.constant dense<0.000000e+00> : vector<128x128xf32>
    %95 = tpu.matmul %92, %93, %cst_28 {dimension_numbers = #tpu.dot_dimension_numbers<[1], [1], [0], [0], [0, 0, 1, 0], [], []>} : vector<128x64xbf16>, vector<128x64xbf16>, vector<128x128xf32> -> vector<128x128xf32>
    %cst_29 = arith.constant 0xFF800000 : f32
    %96 = vector.broadcast %cst_29 : f32 to vector<128x128xf32>
    %97 = arith.select %19, %95, %96 : vector<128x128xi1>, vector<128x128xf32>
    %cst_30 = arith.constant dense<0xFF800000> : vector<128xf32>
    %98 = vector.multi_reduction <maximumf>, %97, %cst_30 [1] : vector<128x128xf32> to vector<128xf32>
    %99 = vector.shape_cast %98 : vector<128xf32> to vector<128x1xf32>
    %100 = vector.broadcast %99 : vector<128x1xf32> to vector<128x128xf32>
    %101 = arith.subf %97, %100 : vector<128x128xf32>
    %102 = math.exp %101 : vector<128x128xf32>
    %cst_31 = arith.constant dense<0.000000e+00> : vector<128xf32>
    %103 = vector.multi_reduction <add>, %102, %cst_31 [1] : vector<128x128xf32> to vector<128xf32>
    %104 = vector.shape_cast %103 : vector<128xf32> to vector<128x1xf32>
    %105 = tpu.reciprocal %104 {approx = true} : vector<128x1xf32> -> vector<128x1xf32>
    %106 = vector.broadcast %105 : vector<128x1xf32> to vector<128x128xf32>
    %107 = arith.mulf %102, %106 : vector<128x128xf32>
    %108 = arith.truncf %107 : vector<128x128xf32> to vector<128x128xbf16>
    %cst_32 = arith.constant dense<0.000000e+00> : vector<128x64xf32>
    %109 = tpu.matmul %108, %94, %cst_32 {dimension_numbers = #tpu.dot_dimension_numbers<[1], [0], [0], [1], [0, 0, 1, 1], [], []>} : vector<128x128xbf16>, vector<128x64xbf16>, vector<128x64xf32> -> vector<128x64xf32>
    %110 = vector.extract_strided_slice %12 {offsets = [0, 320], sizes = [128, 64], strides = [1, 1]} : vector<128x384xbf16> to vector<128x64xbf16>
    %111 = vector.extract_strided_slice %14 {offsets = [0, 320], sizes = [128, 64], strides = [1, 1]} : vector<128x384xbf16> to vector<128x64xbf16>
    %112 = vector.extract_strided_slice %16 {offsets = [0, 320], sizes = [128, 64], strides = [1, 1]} : vector<128x384xbf16> to vector<128x64xbf16>
    %cst_33 = arith.constant dense<0.000000e+00> : vector<128x128xf32>
    %113 = tpu.matmul %110, %111, %cst_33 {dimension_numbers = #tpu.dot_dimension_numbers<[1], [1], [0], [0], [0, 0, 1, 0], [], []>} : vector<128x64xbf16>, vector<128x64xbf16>, vector<128x128xf32> -> vector<128x128xf32>
    %cst_34 = arith.constant 0xFF800000 : f32
    %114 = vector.broadcast %cst_34 : f32 to vector<128x128xf32>
    %115 = arith.select %19, %113, %114 : vector<128x128xi1>, vector<128x128xf32>
    %cst_35 = arith.constant dense<0xFF800000> : vector<128xf32>
    %116 = vector.multi_reduction <maximumf>, %115, %cst_35 [1] : vector<128x128xf32> to vector<128xf32>
    %117 = vector.shape_cast %116 : vector<128xf32> to vector<128x1xf32>
    %118 = vector.broadcast %117 : vector<128x1xf32> to vector<128x128xf32>
    %119 = arith.subf %115, %118 : vector<128x128xf32>
    %120 = math.exp %119 : vector<128x128xf32>
    %cst_36 = arith.constant dense<0.000000e+00> : vector<128xf32>
    %121 = vector.multi_reduction <add>, %120, %cst_36 [1] : vector<128x128xf32> to vector<128xf32>
    %122 = vector.shape_cast %121 : vector<128xf32> to vector<128x1xf32>
    %123 = tpu.reciprocal %122 {approx = true} : vector<128x1xf32> -> vector<128x1xf32>
    %124 = vector.broadcast %123 : vector<128x1xf32> to vector<128x128xf32>
    %125 = arith.mulf %120, %124 : vector<128x128xf32>
    %126 = arith.truncf %125 : vector<128x128xf32> to vector<128x128xbf16>
    %cst_37 = arith.constant dense<0.000000e+00> : vector<128x64xf32>
    %127 = tpu.matmul %126, %112, %cst_37 {dimension_numbers = #tpu.dot_dimension_numbers<[1], [0], [0], [1], [0, 0, 1, 1], [], []>} : vector<128x128xbf16>, vector<128x64xbf16>, vector<128x64xf32> -> vector<128x64xf32>
    %128 = tpu.concatenate %37, %55, %73, %91, %109, %127 in 1 : vector<128x64xf32>, vector<128x64xf32>, vector<128x64xf32>, vector<128x64xf32>, vector<128x64xf32>, vector<128x64xf32> -> vector<128x384xf32>
    %129 = arith.truncf %128 : vector<128x384xf32> to vector<128x384xbf16>
    %cst_38 = arith.constant dense<0.000000e+00> : vector<128x384xf32>
    %130 = tpu.matmul %129, %6, %cst_38 {dimension_numbers = #tpu.dot_dimension_numbers<[1], [0], [0], [1], [0, 0, 1, 1], [], []>} : vector<128x384xbf16>, vector<384x384xbf16>, vector<128x384xf32> -> vector<128x384xf32>
    %c0_39 = arith.constant 0 : index
    %c0_40 = arith.constant 0 : index
    %131 = vector.load %arg4[%c0_39, %c0_40] : memref<1x384xf32, #tpu.memory_space<vmem>>, vector<1x384xf32>
    %132 = vector.broadcast %131 : vector<1x384xf32> to vector<128x384xf32>
    %133 = arith.addf %130, %132 : vector<128x384xf32>
    %c0_41 = arith.constant 0 : index
    %c0_42 = arith.constant 0 : index
    %c0_43 = arith.constant 0 : index
    %134 = vector.load %arg5[%c0_41, %c0_42, %c0_43] : memref<1x128x384xf32, #tpu.memory_space<vmem>>, vector<1x128x384xf32>
    %135 = vector.shape_cast %134 : vector<1x128x384xf32> to vector<128x384xf32>
    %136 = vector.shape_cast %133 : vector<128x384xf32> to vector<1x128x384xf32>
    tpu.vector_store %arg5[%c0_41, %c0_42, %c0_43], %136 {strides = array<i32>} : memref<1x128x384xf32, #tpu.memory_space<vmem>>, vector<1x128x384xf32>,
    return
  }
  func.func @transform_0(%arg0: i32) -> (i32, i32, i32) {
    %c0_i32 = arith.constant 0 : i32
    %c0_i32_0 = arith.constant 0 : i32
    %c0_i32_1 = arith.constant 0 : i32
    return %arg0, %c0_i32, %c0_i32_0 : i32, i32, i32
  }
  func.func @transform_1(%arg0: i32) -> (i32, i32) {
    %c0_i32 = arith.constant 0 : i32
    %c0_i32_0 = arith.constant 0 : i32
    %c0_i32_1 = arith.constant 0 : i32
    return %c0_i32, %c0_i32_0 : i32, i32
  }
  func.func @transform_2(%arg0: i32) -> (i32, i32) {
    %c0_i32 = arith.constant 0 : i32
    %c0_i32_0 = arith.constant 0 : i32
    %c0_i32_1 = arith.constant 0 : i32
    return %c0_i32, %c0_i32_0 : i32, i32
  }
  func.func @transform_3(%arg0: i32) -> (i32, i32) {
    %c0_i32 = arith.constant 0 : i32
    %c0_i32_0 = arith.constant 0 : i32
    %c0_i32_1 = arith.constant 0 : i32
    return %c0_i32, %c0_i32_0 : i32, i32
  }
  func.func @transform_4(%arg0: i32) -> (i32, i32, i32) {
    %c0_i32 = arith.constant 0 : i32
    %c0_i32_0 = arith.constant 0 : i32
    %c0_i32_1 = arith.constant 0 : i32
    return %arg0, %c0_i32, %c0_i32_0 : i32, i32, i32
  }
}

</mosaic_0001>

<llo_original>
// kernel: tpu_custom_call.1
$region0: #{tpu_custom_call.1}
  #allocation0 [shape = 'u32[]', space=smem, size = 0x4, offset = 0x4, fixed_abs, tag = 'smem constant byte address 0x4 - core index']
  #allocation1 [shape = 'u32[144,128]{1,0:T(1,128)}', space=vmem, size = 0x12000, scoped, tag = 'internal scratch']
  %s0 = inlined_call_operand.hbm [shape: f32[2,128,384], index: 0, kind: input, shape index: {}]
  %s1 = inlined_call_operand.hbm [shape: f32[384,1152], index: 1, kind: input, shape index: {}]
  %s2 = inlined_call_operand.hbm [shape: f32[384,384], index: 2, kind: input, shape index: {}]
  %s3 = inlined_call_operand.hbm [shape: f32[1,384], index: 3, kind: input, shape index: {}]
  %s4 = inlined_call_operand.hbm [shape: f32[2,128,384], index: 4, kind: output, shape index: {}]
  %s5 = sld [smem:[#allocation0]]
  $region65: #{tpu_custom_call.1} parent=0
    _
  %s7 = ssub.s32 1, %s5
  %s8 = scalar_select 0, %s7, %s5
  $region1: #{tpu_custom_call.1} parent=0
    #allocation2 [shape = 'u8[393216]{0}', space=vmem, size = 0x60000, scoped, tag = 'input window, operand 0']
    #allocation3 [shape = 's32[2]{0}', space=sflag, size = 0x8, scoped, tag = 'scoped memory for tpu_custom_call.1']
    #allocation4 [shape = 's32[2]{0}', space=sflag, size = 0x8, scoped, tag = 'scoped memory for tpu_custom_call.1']
    #allocation5 [shape = 'u8[1769472]{0}', space=vmem, size = 0x1b0000, scoped, tag = 'input window, operand 1, single buffered']
    #allocation6 [shape = 's32[1]{0}', space=sflag, size = 0x4, scoped, tag = 'scoped memory for tpu_custom_call.1']
    #allocation7 [shape = 'u8[589824]{0}', space=vmem, size = 0x90000, scoped, tag = 'input window, operand 2, single buffered']
    #allocation8 [shape = 'u8[1536]{0}', space=vmem, size = 0x800, scoped, tag = 'input window, operand 3, single buffered']
    #allocation9 [shape = 's32[1]{0}', space=sflag, size = 0x4, scoped, tag = 'scoped memory for tpu_custom_call.1']
    #allocation10 [shape = 'u8[393216]{0}', space=vmem, size = 0x60000, scoped, tag = 'output window, operand 0']
    %9 = vsyncpa [#allocation3], 0
    %s10 = scalar_lea.sflag [#allocation3], 1
    %11 = vsyncpa %s10, 0
    %12 = vsyncpa [#allocation6], 0
    %13 = vsyncpa [#allocation9], 0
    %14 = vsyncpa [#allocation4], 0
    %s15 = scalar_lea.sflag [#allocation4], 1
    %16 = vsyncpa %s15, 0
    loop: start=0, step=1, limit=4
    $region2: #{tpu_custom_call.1} parent=1 // loop_pre_header
      _
    $region3: #{tpu_custom_call.1} parent=1 // loop_header
      %s18 = sphi 0, %s22
      %p19 = scmp.ge.s32.totalorder %s18, 4
      %s28 = sphi 0, %s30
      %s31 = sphi 0, %s28
      %s32 = sphi 0, %s31
      %s48 = sphi 0, %s32
      %s52 = sphi 0, %s52
      %s54 = sphi 0, %s52
      %s55 = sphi 0, %s54
      %s69 = sphi 0, %s55
      %s73 = sphi 0, %s73
      %s75 = sphi 0, %s73
      %s76 = sphi 0, %s75
      %s90 = sphi 0, %s76
      %s94 = sphi 0, %s94
      %s96 = sphi 0, %s94
      %s97 = sphi 0, %s96
      %s111 = sphi 0, %s97
      %s117 = sphi 0, %s119
      %s120 = sphi 0, %s117
      %s121 = sphi 0, %s120
      %s137 = sphi 0, %s121
    $region4: #{tpu_custom_call.1} parent=1 // loop_header_branch
      %21 = sbr.rel (%p19) target = $region8
    $region5: #{tpu_custom_call.1} parent=1 // loop_body
      %s23 = ssub.s32 %s18, 1
      %s24 = ssub.s32 %s18, 2
      %s25 = sadd.s32 %s18, 1
      %s26 = ssub.s32 %s18, %s25
      %p27 = scmp.eq.s32.totalorder %s26, 0
      %s29 = sadd.s32 %s28, 1
      %s30 = scalar_select %p27, %s28, %s29
      %p33 = pneg %p27
      %p34 = scmp.eq.s32.totalorder %s18, 1
      %p35 = por %p33, %p34
      %p36 = scmp.ne.s32.totalorder %s28, %s31
      %p37 = scmp.eq.s32.totalorder %s18, 0
      %p38 = por %p36, %p37
      %p39 = scmp.ne.s32.totalorder %s28, %s31
      %p40 = scmp.eq.s32.totalorder %s23, 1
      %p41 = por %p39, %p40
      %p42 = scmp.ne.s32.totalorder %s31, %s32
      %p43 = scmp.eq.s32.totalorder %s23, 0
      %p44 = por %p42, %p43
      %p45 = scmp.ne.s32.totalorder %s31, %s32
      %p46 = scmp.eq.s32.totalorder %s24, 1
      %p47 = por %p45, %p46
      %p49 = scmp.ne.s32.totalorder %s32, %s48
      %p50 = scmp.eq.s32.totalorder %s24, 0
      %p51 = por %p49, %p50
      %s53 = sadd.s32 %s52, 1
      %p56 = scmp.eq.s32.totalorder %s18, 1
      %p57 = scmp.ne.s32.totalorder %s52, %s54
      %p58 = scmp.eq.s32.totalorder %s18, 0
      %p59 = por %p57, %p58
      %p60 = scmp.ne.s32.totalorder %s52, %s54
      %p61 = scmp.eq.s32.totalorder %s23, 1
      %p62 = por %p60, %p61
      %p63 = scmp.ne.s32.totalorder %s54, %s55
      %p64 = scmp.eq.s32.totalorder %s23, 0
      %p65 = por %p63, %p64
      %p66 = scmp.ne.s32.totalorder %s54, %s55
      %p67 = scmp.eq.s32.totalorder %s24, 1
      %p68 = por %p66, %p67
      %p70 = scmp.ne.s32.totalorder %s55, %s69
      %p71 = scmp.eq.s32.totalorder %s24, 0
      %p72 = por %p70, %p71
      %s74 = sadd.s32 %s73, 1
      %p77 = scmp.eq.s32.totalorder %s18, 1
      %p78 = scmp.ne.s32.totalorder %s73, %s75
      %p79 = scmp.eq.s32.totalorder %s18, 0
      %p80 = por %p78, %p79
      %p81 = scmp.ne.s32.totalorder %s73, %s75
      %p82 = scmp.eq.s32.totalorder %s23, 1
      %p83 = por %p81, %p82
      %p84 = scmp.ne.s32.totalorder %s75, %s76
      %p85 = scmp.eq.s32.totalorder %s23, 0
      %p86 = por %p84, %p85
      %p87 = scmp.ne.s32.totalorder %s75, %s76
      %p88 = scmp.eq.s32.totalorder %s24, 1
      %p89 = por %p87, %p88
      %p91 = scmp.ne.s32.totalorder %s76, %s90
      %p92 = scmp.eq.s32.totalorder %s24, 0
      %p93 = por %p91, %p92
      %s95 = sadd.s32 %s94, 1
      %p98 = scmp.eq.s32.totalorder %s18, 1
      %p99 = scmp.ne.s32.totalorder %s94, %s96
      %p100 = scmp.eq.s32.totalorder %s18, 0
      %p101 = por %p99, %p100
      %p102 = scmp.ne.s32.totalorder %s94, %s96
      %p103 = scmp.eq.s32.totalorder %s23, 1
      %p104 = por %p102, %p103
      %p105 = scmp.ne.s32.totalorder %s96, %s97
      %p106 = scmp.eq.s32.totalorder %s23, 0
      %p107 = por %p105, %p106
      %p108 = scmp.ne.s32.totalorder %s96, %s97
      %p109 = scmp.eq.s32.totalorder %s24, 1
      %p110 = por %p108, %p109
      %p112 = scmp.ne.s32.totalorder %s97, %s111
      %p113 = scmp.eq.s32.totalorder %s24, 0
      %p114 = por %p112, %p113
      %s115 = ssub.s32 %s18, %s25
      %p116 = scmp.eq.s32.totalorder %s115, 0
      %s118 = sadd.s32 %s117, 1
      %s119 = scalar_select %p116, %s117, %s118
      %p122 = pneg %p116
      %p123 = scmp.eq.s32.totalorder %s18, 1
      %p124 = por %p122, %p123
      %p125 = scmp.ne.s32.totalorder %s117, %s120
      %p126 = scmp.eq.s32.totalorder %s18, 0
      %p127 = por %p125, %p126
      %p128 = scmp.ne.s32.totalorder %s117, %s120
      %p129 = scmp.eq.s32.totalorder %s23, 1
      %p130 = por %p128, %p129
      %p131 = scmp.ne.s32.totalorder %s120, %s121
      %p132 = scmp.eq.s32.totalorder %s23, 0
      %p133 = por %p131, %p132
      %p134 = scmp.ne.s32.totalorder %s120, %s121
      %p135 = scmp.eq.s32.totalorder %s24, 1
      %p136 = por %p134, %p135
      %p138 = scmp.ne.s32.totalorder %s121, %s137
      %p139 = scmp.eq.s32.totalorder %s24, 0
      %p140 = por %p138, %p139
      %p141 = scmp.le.s32.totalorder 1, %s18
      %p142 = scmp.lt.s32.totalorder %s18, 3
      %p143 = pnand %p141, %p142
      %p144 = pneg %p143
      // Predicated region
      $region9: #{tpu_custom_call.1} parent=5 // pred_check
        _
      $region10: #{tpu_custom_call.1} parent=5 // pred_check_branch
        %146 = sbr.rel (%p143) target = $region12
      $region11: #{tpu_custom_call.1} parent=5 // pred_region
        %s147 = ssub.s32 %s18, 1
        // Predicated region
        $region13: #{tpu_custom_call.1} parent=11 // pred_check
          %p148 = pneg %p65
        $region14: #{tpu_custom_call.1} parent=11 // pred_check_branch
          %150 = sbr.rel (%p148) target = $region16
        $region15: #{tpu_custom_call.1} parent=11 // pred_region
          %s152 = ssub.s32 55296, 55296
          %153 = vsyncadd [#allocation6], %s152
          %s154 = sshll.u32 [#allocation5], 4
          %s155 = int_to_ptr.vmem [resolvable:$true] %s154
          %160 = dma.hbm_to_vmem [thread:$0]  %s1, 55296, %s155, [#allocation6], 1152, 1152, 72
        $region16: #{tpu_custom_call.1} parent=11 // pred_fallthru
          _
        // Predicated region
        $region17: #{tpu_custom_call.1} parent=11 // pred_check
          %p161 = pneg %p86
        $region18: #{tpu_custom_call.1} parent=11 // pred_check_branch
          %163 = sbr.rel (%p161) target = $region20
        $region19: #{tpu_custom_call.1} parent=11 // pred_region
          %s165 = ssub.s32 18432, 18432
          %166 = vsyncadd [#allocation6], %s165
          %s167 = sshll.u32 [#allocation7], 4
          %s168 = int_to_ptr.vmem [resolvable:$true] %s167
          %173 = dma.hbm_to_vmem [thread:$0]  %s2, 18432, %s168, [#allocation6], 384, 384, 24
        $region20: #{tpu_custom_call.1} parent=11 // pred_fallthru
          _
        // Predicated region
        $region21: #{tpu_custom_call.1} parent=11 // pred_check
          %p174 = pneg %p107
        $region22: #{tpu_custom_call.1} parent=11 // pred_check_branch
          %176 = sbr.rel (%p174) target = $region24
        $region23: #{tpu_custom_call.1} parent=11 // pred_region
          %s178 = ssub.s32 48, 48
          %179 = vsyncadd [#allocation9], %s178
          %s181 = sshll.u32 [#allocation8], 4
          %s182 = int_to_ptr.vmem [resolvable:$true] %s181
          %184 = dma.hbm_to_vmem [thread:$0]  %s3, 48, %s182, [#allocation9]
        $region24: #{tpu_custom_call.1} parent=11 // pred_fallthru
          _
      $region12: #{tpu_custom_call.1} parent=5 // pred_fallthru
        _
      %p185 = scmp.lt.s32.totalorder %s18, 2
      // Predicated region
      $region25: #{tpu_custom_call.1} parent=5 // pred_check
        %p186 = pneg %p185
      $region26: #{tpu_custom_call.1} parent=5 // pred_check_branch
        %188 = sbr.rel (%p186) target = $region28
      $region27: #{tpu_custom_call.1} parent=5 // pred_region
        // Predicated region
        $region29: #{tpu_custom_call.1} parent=27 // pred_check
          %p189 = pneg %p38
        $region30: #{tpu_custom_call.1} parent=27 // pred_check_branch
          %191 = sbr.rel (%p189) target = $region32
        $region31: #{tpu_custom_call.1} parent=27 // pred_region
          %s192 = sand.u32 %s28, 1
          %s193 = scalar_lea.sflag [#allocation3], %s192
          %s194 = sand.u32 %s28, 1
          %s195 = smul.addr %s194, 384
          %s196 = scalar_lea.vmem [#allocation2], %s195
          %s198 = ssub.s32 6144, 6144
          %199 = vsyncadd %s193, %s198
          %s200 = smul.addr %s18, 48
          %s201 = smul.addr %s200, 128
          %s202 = scalar_lea.hbm %s0, %s201
          %s203 = sshll.u32 %s196, 4
          %s204 = int_to_ptr.vmem [resolvable:$true] %s203
          %209 = dma.hbm_to_vmem [thread:$0]  %s202, 6144, %s204, %s193, 384, 384, 24
        $region32: #{tpu_custom_call.1} parent=27 // pred_fallthru
          _
      $region28: #{tpu_custom_call.1} parent=5 // pred_fallthru
        _
      %p210 = scmp.le.s32.totalorder 1, %s18
      %p211 = scmp.lt.s32.totalorder %s18, 3
      %p212 = pnand %p210, %p211
      %p213 = pneg %p212
      // Predicated region
      $region33: #{tpu_custom_call.1} parent=5 // pred_check
        _
      $region34: #{tpu_custom_call.1} parent=5 // pred_check_branch
        %215 = sbr.rel (%p212) target = $region36
      $region35: #{tpu_custom_call.1} parent=5 // pred_region
        %s216 = ssub.s32 %s18, 1
        %s217 = sand.u32 %s31, 1
        %s218 = scalar_lea.sflag [#allocation3], %s217
        %s219 = sand.u32 %s31, 1
        %s220 = smul.addr %s219, 384
        %s221 = scalar_lea.vmem [#allocation2], %s220
        // Predicated region
        $region37: #{tpu_custom_call.1} parent=35 // pred_check
          %p222 = pneg %p44
        $region38: #{tpu_custom_call.1} parent=35 // pred_check_branch
          %224 = sbr.rel (%p222) target = $region40
        $region39: #{tpu_custom_call.1} parent=35 // pred_region
          %225 = dma.done %s218, 6144
        $region40: #{tpu_custom_call.1} parent=35 // pred_fallthru
          _
        // Predicated region
        $region41: #{tpu_custom_call.1} parent=35 // pred_check
          %p226 = pneg %p65
        $region42: #{tpu_custom_call.1} parent=35 // pred_check_branch
          %228 = sbr.rel (%p226) target = $region44
        $region43: #{tpu_custom_call.1} parent=35 // pred_region
          %229 = dma.done [#allocation6], 55296
        $region44: #{tpu_custom_call.1} parent=35 // pred_fallthru
          _
        // Predicated region
        $region45: #{tpu_custom_call.1} parent=35 // pred_check
          %p230 = pneg %p86
        $region46: #{tpu_custom_call.1} parent=35 // pred_check_branch
          %232 = sbr.rel (%p230) target = $region48
        $region47: #{tpu_custom_call.1} parent=35 // pred_region
          %233 = dma.done [#allocation6], 18432
        $region48: #{tpu_custom_call.1} parent=35 // pred_fallthru
          _
        // Predicated region
        $region49: #{tpu_custom_call.1} parent=35 // pred_check
          %p234 = pneg %p107
        $region50: #{tpu_custom_call.1} parent=35 // pred_check_branch
          %236 = sbr.rel (%p234) target = $region52
        $region51: #{tpu_custom_call.1} parent=35 // pred_region
          %237 = dma.done [#allocation9], 48
        $region52: #{tpu_custom_call.1} parent=35 // pred_fallthru
          _
        %s238 = sand.u32 %s31, 1
        %s239 = scalar_lea.sflag [#allocation3], %s238
        %s240 = sand.u32 %s31, 1
        %s241 = smul.addr %s240, 384
        %s242 = scalar_lea.vmem [#allocation2], %s241
        %p243 = pneg %p44
        %p244 = pneg %p41
        %p245 = pneg %p65
        %p246 = pneg %p62
        %p247 = pneg %p86
        %p248 = pneg %p83
        %p249 = pneg %p107
        %p250 = pneg %p104
        %p251 = pneg %p133
        %p252 = pneg %p130
        %s253 = sand.u32 %s120, 1
        %s254 = scalar_lea.sflag [#allocation4], %s253
        %s255 = sand.u32 %s120, 1
        %s256 = smul.addr %s255, 384
        %s257 = scalar_lea.vmem [#allocation10], %s256
        %v259 = vld [vmem:[%s221] sm:$0xff]
        %v260 = vld [vmem:[%s221 + $0x8] sm:$0xff]
        %v261 = vld [vmem:[%s221 + $0x10] sm:$0xff]
        %v262 = vld [vmem:[%s221 + $0x18] sm:$0xff]
        %v263 = vld [vmem:[%s221 + $0x20] sm:$0xff]
        %v264 = vld [vmem:[%s221 + $0x28] sm:$0xff]
        %v265 = vld [vmem:[%s221 + $0x30] sm:$0xff]
        %v266 = vld [vmem:[%s221 + $0x38] sm:$0xff]
        %v267 = vld [vmem:[%s221 + $0x40] sm:$0xff]
        %v268 = vld [vmem:[%s221 + $0x48] sm:$0xff]
        %v269 = vld [vmem:[%s221 + $0x50] sm:$0xff]
        %v270 = vld [vmem:[%s221 + $0x58] sm:$0xff]
        %v271 = vld [vmem:[%s221 + $0x60] sm:$0xff]
        %v272 = vld [vmem:[%s221 + $0x68] sm:$0xff]
        %v273 = vld [vmem:[%s221 + $0x70] sm:$0xff]
        %v274 = vld [vmem:[%s221 + $0x78] sm:$0xff]
        %v275 = vld [vmem:[%s221 + $0x80] sm:$0xff]
        %v276 = vld [vmem:[%s221 + $0x88] sm:$0xff]
        %v277 = vld [vmem:[%s221 + $0x90] sm:$0xff]
        %v278 = vld [vmem:[%s221 + $0x98] sm:$0xff]
        %v279 = vld [vmem:[%s221 + $0xa0] sm:$0xff]
        %v280 = vld [vmem:[%s221 + $0xa8] sm:$0xff]
        %v281 = vld [vmem:[%s221 + $0xb0] sm:$0xff]
        %v282 = vld [vmem:[%s221 + $0xb8] sm:$0xff]
        %v283 = vld [vmem:[%s221 + $0xc0] sm:$0xff]
        %v284 = vld [vmem:[%s221 + $0xc8] sm:$0xff]
        %v285 = vld [vmem:[%s221 + $0xd0] sm:$0xff]
        %v286 = vld [vmem:[%s221 + $0xd8] sm:$0xff]
        %v287 = vld [vmem:[%s221 + $0xe0] sm:$0xff]
        %v288 = vld [vmem:[%s221 + $0xe8] sm:$0xff]
        %v289 = vld [vmem:[%s221 + $0xf0] sm:$0xff]
        %v290 = vld [vmem:[%s221 + $0xf8] sm:$0xff]
        %v291 = vld [vmem:[%s221 + $0x100] sm:$0xff]
        %v292 = vld [vmem:[%s221 + $0x108] sm:$0xff]
        %v293 = vld [vmem:[%s221 + $0x110] sm:$0xff]
        %v294 = vld [vmem:[%s221 + $0x118] sm:$0xff]
        %v295 = vld [vmem:[%s221 + $0x120] sm:$0xff]
        %v296 = vld [vmem:[%s221 + $0x128] sm:$0xff]
        %v297 = vld [vmem:[%s221 + $0x130] sm:$0xff]
        %v298 = vld [vmem:[%s221 + $0x138] sm:$0xff]
        %v299 = vld [vmem:[%s221 + $0x140] sm:$0xff]
        %v300 = vld [vmem:[%s221 + $0x148] sm:$0xff]
        %v301 = vld [vmem:[%s221 + $0x150] sm:$0xff]
        %v302 = vld [vmem:[%s221 + $0x158] sm:$0xff]
        %v303 = vld [vmem:[%s221 + $0x160] sm:$0xff]
        %v304 = vld [vmem:[%s221 + $0x168] sm:$0xff]
        %v305 = vld [vmem:[%s221 + $0x170] sm:$0xff]
        %v306 = vld [vmem:[%s221 + $0x178] sm:$0xff]
        %v307 = vpack.c.bf16 %v262, %v259
        %v308 = vpack.c.bf16 %v263, %v260
        %v309 = vpack.c.bf16 %v264, %v261
        %v310 = vpack.c.bf16 %v268, %v265
        %v311 = vpack.c.bf16 %v269, %v266
        %v312 = vpack.c.bf16 %v270, %v267
        %v313 = vpack.c.bf16 %v274, %v271
        %v314 = vpack.c.bf16 %v275, %v272
        %v315 = vpack.c.bf16 %v276, %v273
        %v316 = vpack.c.bf16 %v280, %v277
        %v317 = vpack.c.bf16 %v281, %v278
        %v318 = vpack.c.bf16 %v282, %v279
        %v319 = vpack.c.bf16 %v286, %v283
        %v320 = vpack.c.bf16 %v287, %v284
        %v321 = vpack.c.bf16 %v288, %v285
        %v322 = vpack.c.bf16 %v292, %v289
        %v323 = vpack.c.bf16 %v293, %v290
        %v324 = vpack.c.bf16 %v294, %v291
        %v325 = vpack.c.bf16 %v298, %v295
        %v326 = vpack.c.bf16 %v299, %v296
        %v327 = vpack.c.bf16 %v300, %v297
        %v328 = vpack.c.bf16 %v304, %v301
        %v329 = vpack.c.bf16 %v305, %v302
        %v330 = vpack.c.bf16 %v306, %v303
        %v331 = vld [vmem:[#allocation5] sm:$0xff]
        %v332 = vld [vmem:[#allocation5 + $0x8] sm:$0xff]
        %v333 = vld [vmem:[#allocation5 + $0x10] sm:$0xff]
        %v334 = vld [vmem:[#allocation5 + $0x18] sm:$0xff]
        %v335 = vld [vmem:[#allocation5 + $0x20] sm:$0xff]
        %v336 = vld [vmem:[#allocation5 + $0x28] sm:$0xff]
        %v337 = vld [vmem:[#allocation5 + $0x30] sm:$0xff]
        %v338 = vld [vmem:[#allocation5 + $0x38] sm:$0xff]
        %v339 = vld [vmem:[#allocation5 + $0x40] sm:$0xff]
        %v340 = vld [vmem:[#allocation5 + $0x48] sm:$0xff]
        %v341 = vld [vmem:[#allocation5 + $0x50] sm:$0xff]
        %v342 = vld [vmem:[#allocation5 + $0x58] sm:$0xff]
        %v343 = vld [vmem:[#allocation5 + $0x60] sm:$0xff]
        %v344 = vld [vmem:[#allocation5 + $0x68] sm:$0xff]
        %v345 = vld [vmem:[#allocation5 + $0x70] sm:$0xff]
        %v346 = vld [vmem:[#allocation5 + $0x78] sm:$0xff]
        %v347 = vld [vmem:[#allocation5 + $0x80] sm:$0xff]
        %v348 = vld [vmem:[#allocation5 + $0x88] sm:$0xff]
        %v349 = vld [vmem:[#allocation5 + $0x90] sm:$0xff]
        %v350 = vld [vmem:[#allocation5 + $0x98] sm:$0xff]
        %v351 = vld [vmem:[#allocation5 + $0xa0] sm:$0xff]
        %v352 = vld [vmem:[#allocation5 + $0xa8] sm:$0xff]
        %v353 = vld [vmem:[#allocation5 + $0xb0] sm:$0xff]
        %v354 = vld [vmem:[#allocation5 + $0xb8] sm:$0xff]
        %v355 = vld [vmem:[#allocation5 + $0xc0] sm:$0xff]
        %v356 = vld [vmem:[#allocation5 + $0xc8] sm:$0xff]
        %v357 = vld [vmem:[#allocation5 + $0xd0] sm:$0xff]
        %v358 = vld [vmem:[#allocation5 + $0xd8] sm:$0xff]
        %v359 = vld [vmem:[#allocation5 + $0xe0] sm:$0xff]
        %v360 = vld [vmem:[#allocation5 + $0xe8] sm:$0xff]
        %v361 = vld [vmem:[#allocation5 + $0xf0] sm:$0xff]
        %v362 = vld [vmem:[#allocation5 + $0xf8] sm:$0xff]
        %v363 = vld [vmem:[#allocation5 + $0x100] sm:$0xff]
        %v364 = vld [vmem:[#allocation5 + $0x108] sm:$0xff]
        %v365 = vld [vmem:[#allocation5 + $0x110] sm:$0xff]
        %v366 = vld [vmem:[#allocation5 + $0x118] sm:$0xff]
        %v367 = vld [vmem:[#allocation5 + $0x120] sm:$0xff]
        %v368 = vld [vmem:[#allocation5 + $0x128] sm:$0xff]
        %v369 = vld [vmem:[#allocation5 + $0x130] sm:$0xff]
        %v370 = vld [vmem:[#allocation5 + $0x138] sm:$0xff]
        %v371 = vld [vmem:[#allocation5 + $0x140] sm:$0xff]
        %v372 = vld [vmem:[#allocation5 + $0x148] sm:$0xff]
        %v373 = vld [vmem:[#allocation5 + $0x150] sm:$0xff]
        %v374 = vld [vmem:[#allocation5 + $0x158] sm:$0xff]
        %v375 = vld [vmem:[#allocation5 + $0x160] sm:$0xff]
        %v376 = vld [vmem:[#allocation5 + $0x168] sm:$0xff]
        %v377 = vld [vmem:[#allocation5 + $0x170] sm:$0xff]
        %v378 = vld [vmem:[#allocation5 + $0x178] sm:$0xff]
        %v379 = vld [vmem:[#allocation5 + $0x180] sm:$0xff]
        %v380 = vld [vmem:[#allocation5 + $0x188] sm:$0xff]
        %v381 = vld [vmem:[#allocation5 + $0x190] sm:$0xff]
        %v382 = vld [vmem:[#allocation5 + $0x198] sm:$0xff]
        %v383 = vld [vmem:[#allocation5 + $0x1a0] sm:$0xff]
        %v384 = vld [vmem:[#allocation5 + $0x1a8] sm:$0xff]
        %v385 = vld [vmem:[#allocation5 + $0x1b0] sm:$0xff]
        %v386 = vld [vmem:[#allocation5 + $0x1b8] sm:$0xff]
        %v387 = vld [vmem:[#allocation5 + $0x1c0] sm:$0xff]
        %v388 = vld [vmem:[#allocation5 + $0x1c8] sm:$0xff]
        %v389 = vld [vmem:[#allocation5 + $0x1d0] sm:$0xff]
        %v390 = vld [vmem:[#allocation5 + $0x1d8] sm:$0xff]
        %v391 = vld [vmem:[#allocation5 + $0x1e0] sm:$0xff]
        %v392 = vld [vmem:[#allocation5 + $0x1e8] sm:$0xff]
        %v393 = vld [vmem:[#allocation5 + $0x1f0] sm:$0xff]
        %v394 = vld [vmem:[#allocation5 + $0x1f8] sm:$0xff]
        %v395 = vld [vmem:[#allocation5 + $0x200] sm:$0xff]
        %v396 = vld [vmem:[#allocation5 + $0x208] sm:$0xff]
        %v397 = vld [vmem:[#allocation5 + $0x210] sm:$0xff]
        %v398 = vld [vmem:[#allocation5 + $0x218] sm:$0xff]
        %v399 = vld [vmem:[#allocation5 + $0x220] sm:$0xff]
        %v400 = vld [vmem:[#allocation5 + $0x228] sm:$0xff]
        %v401 = vld [vmem:[#allocation5 + $0x230] sm:$0xff]
        %v402 = vld [vmem:[#allocation5 + $0x238] sm:$0xff]
        %v403 = vld [vmem:[#allocation5 + $0x240] sm:$0xff]
        %v404 = vld [vmem:[#allocation5 + $0x248] sm:$0xff]
        %v405 = vld [vmem:[#allocation5 + $0x250] sm:$0xff]
        %v406 = vld [vmem:[#allocation5 + $0x258] sm:$0xff]
        %v407 = vld [vmem:[#allocation5 + $0x260] sm:$0xff]
        %v408 = vld [vmem:[#allocation5 + $0x268] sm:$0xff]
        %v409 = vld [vmem:[#allocation5 + $0x270] sm:$0xff]
        %v410 = vld [vmem:[#allocation5 + $0x278] sm:$0xff]
        %v411 = vld [vmem:[#allocation5 + $0x280] sm:$0xff]
        %v412 = vld [vmem:[#allocation5 + $0x288] sm:$0xff]
        %v413 = vld [vmem:[#allocation5 + $0x290] sm:$0xff]
        %v414 = vld [vmem:[#allocation5 + $0x298] sm:$0xff]
        %v415 = vld [vmem:[#allocation5 + $0x2a0] sm:$0xff]
        %v416 = vld [vmem:[#allocation5 + $0x2a8] sm:$0xff]
        %v417 = vld [vmem:[#allocation5 + $0x2b0] sm:$0xff]
        %v418 = vld [vmem:[#allocation5 + $0x2b8] sm:$0xff]
        %v419 = vld [vmem:[#allocation5 + $0x2c0] sm:$0xff]
        %v420 = vld [vmem:[#allocation5 + $0x2c8] sm:$0xff]
        %v421 = vld [vmem:[#allocation5 + $0x2d0] sm:$0xff]
        %v422 = vld [vmem:[#allocation5 + $0x2d8] sm:$0xff]
        %v423 = vld [vmem:[#allocation5 + $0x2e0] sm:$0xff]
        %v424 = vld [vmem:[#allocation5 + $0x2e8] sm:$0xff]
        %v425 = vld [vmem:[#allocation5 + $0x2f0] sm:$0xff]
        %v426 = vld [vmem:[#allocation5 + $0x2f8] sm:$0xff]
        %v427 = vld [vmem:[#allocation5 + $0x300] sm:$0xff]
        %v428 = vld [vmem:[#allocation5 + $0x308] sm:$0xff]
        %v429 = vld [vmem:[#allocation5 + $0x310] sm:$0xff]
        %v430 = vld [vmem:[#allocation5 + $0x318] sm:$0xff]
        %v431 = vld [vmem:[#allocation5 + $0x320] sm:$0xff]
        %v432 = vld [vmem:[#allocation5 + $0x328] sm:$0xff]
        %v433 = vld [vmem:[#allocation5 + $0x330] sm:$0xff]
        %v434 = vld [vmem:[#allocation5 + $0x338] sm:$0xff]
        %v435 = vld [vmem:[#allocation5 + $0x340] sm:$0xff]
        %v436 = vld [vmem:[#allocation5 + $0x348] sm:$0xff]
        %v437 = vld [vmem:[#allocation5 + $0x350] sm:$0xff]
        %v438 = vld [vmem:[#allocation5 + $0x358] sm:$0xff]
        %v439 = vld [vmem:[#allocation5 + $0x360] sm:$0xff]
        %v440 = vld [vmem:[#allocation5 + $0x368] sm:$0xff]
        %v441 = vld [vmem:[#allocation5 + $0x370] sm:$0xff]
        %v442 = vld [vmem:[#allocation5 + $0x378] sm:$0xff]
        %v443 = vld [vmem:[#allocation5 + $0x380] sm:$0xff]
        %v444 = vld [vmem:[#allocation5 + $0x388] sm:$0xff]
        %v445 = vld [vmem:[#allocation5 + $0x390] sm:$0xff]
        %v446 = vld [vmem:[#allocation5 + $0x398] sm:$0xff]
        %v447 = vld [vmem:[#allocation5 + $0x3a0] sm:$0xff]
        %v448 = vld [vmem:[#allocation5 + $0x3a8] sm:$0xff]
        %v449 = vld [vmem:[#allocation5 + $0x3b0] sm:$0xff]
        %v450 = vld [vmem:[#allocation5 + $0x3b8] sm:$0xff]
        %v451 = vld [vmem:[#allocation5 + $0x3c0] sm:$0xff]
        %v452 = vld [vmem:[#allocation5 + $0x3c8] sm:$0xff]
        %v453 = vld [vmem:[#allocation5 + $0x3d0] sm:$0xff]
        %v454 = vld [vmem:[#allocation5 + $0x3d8] sm:$0xff]
        %v455 = vld [vmem:[#allocation5 + $0x3e0] sm:$0xff]
        %v456 = vld [vmem:[#allocation5 + $0x3e8] sm:$0xff]
        %v457 = vld [vmem:[#allocation5 + $0x3f0] sm:$0xff]
        %v458 = vld [vmem:[#allocation5 + $0x3f8] sm:$0xff]
        %v459 = vld [vmem:[#allocation5 + $0x400] sm:$0xff]
        %v460 = vld [vmem:[#allocation5 + $0x408] sm:$0xff]
        %v461 = vld [vmem:[#allocation5 + $0x410] sm:$0xff]
        %v462 = vld [vmem:[#allocation5 + $0x418] sm:$0xff]
        %v463 = vld [vmem:[#allocation5 + $0x420] sm:$0xff]
        %v464 = vld [vmem:[#allocation5 + $0x428] sm:$0xff]
        %v465 = vld [vmem:[#allocation5 + $0x430] sm:$0xff]
        %v466 = vld [vmem:[#allocation5 + $0x438] sm:$0xff]
        %v467 = vld [vmem:[#allocation5 + $0x440] sm:$0xff]
        %v468 = vld [vmem:[#allocation5 + $0x448] sm:$0xff]
        %v469 = vld [vmem:[#allocation5 + $0x450] sm:$0xff]
        %v470 = vld [vmem:[#allocation5 + $0x458] sm:$0xff]
        %v471 = vld [vmem:[#allocation5 + $0x460] sm:$0xff]
        %v472 = vld [vmem:[#allocation5 + $0x468] sm:$0xff]
        %v473 = vld [vmem:[#allocation5 + $0x470] sm:$0xff]
        %v474 = vld [vmem:[#allocation5 + $0x478] sm:$0xff]
        %v475 = vld [vmem:[#allocation5 + $0x480] sm:$0xff]
        %v476 = vld [vmem:[#allocation5 + $0x488] sm:$0xff]
        %v477 = vld [vmem:[#allocation5 + $0x490] sm:$0xff]
        %v478 = vld [vmem:[#allocation5 + $0x498] sm:$0xff]
        %v479 = vld [vmem:[#allocation5 + $0x4a0] sm:$0xff]
        %v480 = vld [vmem:[#allocation5 + $0x4a8] sm:$0xff]
        %v481 = vld [vmem:[#allocation5 + $0x4b0] sm:$0xff]
        %v482 = vld [vmem:[#allocation5 + $0x4b8] sm:$0xff]
        %v483 = vld [vmem:[#allocation5 + $0x4c0] sm:$0xff]
        %v484 = vld [vmem:[#allocation5 + $0x4c8] sm:$0xff]
        %v485 = vld [vmem:[#allocation5 + $0x4d0] sm:$0xff]
        %v486 = vld [vmem:[#allocation5 + $0x4d8] sm:$0xff]
        %v487 = vld [vmem:[#allocation5 + $0x4e0] sm:$0xff]
        %v488 = vld [vmem:[#allocation5 + $0x4e8] sm:$0xff]
        %v489 = vld [vmem:[#allocation5 + $0x4f0] sm:$0xff]
        %v490 = vld [vmem:[#allocation5 + $0x4f8] sm:$0xff]
        %v491 = vld [vmem:[#allocation5 + $0x500] sm:$0xff]
        %v492 = vld [vmem:[#allocation5 + $0x508] sm:$0xff]
        %v493 = vld [vmem:[#allocation5 + $0x510] sm:$0xff]
        %v494 = vld [vmem:[#allocation5 + $0x518] sm:$0xff]
        %v495 = vld [vmem:[#allocation5 + $0x520] sm:$0xff]
        %v496 = vld [vmem:[#allocation5 + $0x528] sm:$0xff]
        %v497 = vld [vmem:[#allocation5 + $0x530] sm:$0xff]
        %v498 = vld [vmem:[#allocation5 + $0x538] sm:$0xff]
        %v499 = vld [vmem:[#allocation5 + $0x540] sm:$0xff]
        %v500 = vld [vmem:[#allocation5 + $0x548] sm:$0xff]
        %v501 = vld [vmem:[#allocation5 + $0x550] sm:$0xff]
        %v502 = vld [vmem:[#allocation5 + $0x558] sm:$0xff]
        %v503 = vld [vmem:[#allocation5 + $0x560] sm:$0xff]
        %v504 = vld [vmem:[#allocation5 + $0x568] sm:$0xff]
        %v505 = vld [vmem:[#allocation5 + $0x570] sm:$0xff]
        %v506 = vld [vmem:[#allocation5 + $0x578] sm:$0xff]
        %v507 = vld [vmem:[#allocation5 + $0x580] sm:$0xff]
        %v508 = vld [vmem:[#allocation5 + $0x588] sm:$0xff]
        %v509 = vld [vmem:[#allocation5 + $0x590] sm:$0xff]
        %v510 = vld [vmem:[#allocation5 + $0x598] sm:$0xff]
        %v511 = vld [vmem:[#allocation5 + $0x5a0] sm:$0xff]
        %v512 = vld [vmem:[#allocation5 + $0x5a8] sm:$0xff]
        %v513 = vld [vmem:[#allocation5 + $0x5b0] sm:$0xff]
        %v514 = vld [vmem:[#allocation5 + $0x5b8] sm:$0xff]
        %v515 = vld [vmem:[#allocation5 + $0x5c0] sm:$0xff]
        %v516 = vld [vmem:[#allocation5 + $0x5c8] sm:$0xff]
        %v517 = vld [vmem:[#allocation5 + $0x5d0] sm:$0xff]
        %v518 = vld [vmem:[#allocation5 + $0x5d8] sm:$0xff]
        %v519 = vld [vmem:[#allocation5 + $0x5e0] sm:$0xff]
        %v520 = vld [vmem:[#allocation5 + $0x5e8] sm:$0xff]
        %v521 = vld [vmem:[#allocation5 + $0x5f0] sm:$0xff]
        %v522 = vld [vmem:[#allocation5 + $0x5f8] sm:$0xff]
        %v523 = vld [vmem:[#allocation5 + $0x600] sm:$0xff]
        %v524 = vld [vmem:[#allocation5 + $0x608] sm:$0xff]
        %v525 = vld [vmem:[#allocation5 + $0x610] sm:$0xff]
        %v526 = vld [vmem:[#allocation5 + $0x618] sm:$0xff]
        %v527 = vld [vmem:[#allocation5 + $0x620] sm:$0xff]
        %v528 = vld [vmem:[#allocation5 + $0x628] sm:$0xff]
        %v529 = vld [vmem:[#allocation5 + $0x630] sm:$0xff]
        %v530 = vld [vmem:[#allocation5 + $0x638] sm:$0xff]
        %v531 = vld [vmem:[#allocation5 + $0x640] sm:$0xff]
        %v532 = vld [vmem:[#allocation5 + $0x648] sm:$0xff]
        %v533 = vld [vmem:[#allocation5 + $0x650] sm:$0xff]
        %v534 = vld [vmem:[#allocation5 + $0x658] sm:$0xff]
        %v535 = vld [vmem:[#allocation5 + $0x660] sm:$0xff]
        %v536 = vld [vmem:[#allocation5 + $0x668] sm:$0xff]
        %v537 = vld [vmem:[#allocation5 + $0x670] sm:$0xff]
        %v538 = vld [vmem:[#allocation5 + $0x678] sm:$0xff]
        %v539 = vld [vmem:[#allocation5 + $0x680] sm:$0xff]
        %v540 = vld [vmem:[#allocation5 + $0x688] sm:$0xff]
        %v541 = vld [vmem:[#allocation5 + $0x690] sm:$0xff]
        %v542 = vld [vmem:[#allocation5 + $0x698] sm:$0xff]
        %v543 = vld [vmem:[#allocation5 + $0x6a0] sm:$0xff]
        %v544 = vld [vmem:[#allocation5 + $0x6a8] sm:$0xff]
        %v545 = vld [vmem:[#allocation5 + $0x6b0] sm:$0xff]
        %v546 = vld [vmem:[#allocation5 + $0x6b8] sm:$0xff]
        %v547 = vld [vmem:[#allocation5 + $0x6c0] sm:$0xff]
        %v548 = vld [vmem:[#allocation5 + $0x6c8] sm:$0xff]
        %v549 = vld [vmem:[#allocation5 + $0x6d0] sm:$0xff]
        %v550 = vld [vmem:[#allocation5 + $0x6d8] sm:$0xff]
        %v551 = vld [vmem:[#allocation5 + $0x6e0] sm:$0xff]
        %v552 = vld [vmem:[#allocation5 + $0x6e8] sm:$0xff]
        %v553 = vld [vmem:[#allocation5 + $0x6f0] sm:$0xff]
        %v554 = vld [vmem:[#allocation5 + $0x6f8] sm:$0xff]
        %v555 = vld [vmem:[#allocation5 + $0x700] sm:$0xff]
        %v556 = vld [vmem:[#allocation5 + $0x708] sm:$0xff]
        %v557 = vld [vmem:[#allocation5 + $0x710] sm:$0xff]
        %v558 = vld [vmem:[#allocation5 + $0x718] sm:$0xff]
        %v559 = vld [vmem:[#allocation5 + $0x720] sm:$0xff]
        %v560 = vld [vmem:[#allocation5 + $0x728] sm:$0xff]
        %v561 = vld [vmem:[#allocation5 + $0x730] sm:$0xff]
        %v562 = vld [vmem:[#allocation5 + $0x738] sm:$0xff]
        %v563 = vld [vmem:[#allocation5 + $0x740] sm:$0xff]
        %v564 = vld [vmem:[#allocation5 + $0x748] sm:$0xff]
        %v565 = vld [vmem:[#allocation5 + $0x750] sm:$0xff]
        %v566 = vld [vmem:[#allocation5 + $0x758] sm:$0xff]
        %v567 = vld [vmem:[#allocation5 + $0x760] sm:$0xff]
        %v568 = vld [vmem:[#allocation5 + $0x768] sm:$0xff]
        %v569 = vld [vmem:[#allocation5 + $0x770] sm:$0xff]
        %v570 = vld [vmem:[#allocation5 + $0x778] sm:$0xff]
        %v571 = vld [vmem:[#allocation5 + $0x780] sm:$0xff]
        %v572 = vld [vmem:[#allocation5 + $0x788] sm:$0xff]
        %v573 = vld [vmem:[#allocation5 + $0x790] sm:$0xff]
        %v574 = vld [vmem:[#allocation5 + $0x798] sm:$0xff]
        %v575 = vld [vmem:[#allocation5 + $0x7a0] sm:$0xff]
        %v576 = vld [vmem:[#allocation5 + $0x7a8] sm:$0xff]
        %v577 = vld [vmem:[#allocation5 + $0x7b0] sm:$0xff]
        %v578 = vld [vmem:[#allocation5 + $0x7b8] sm:$0xff]
        %v579 = vld [vmem:[#allocation5 + $0x7c0] sm:$0xff]
        %v580 = vld [vmem:[#allocation5 + $0x7c8] sm:$0xff]
        %v581 = vld [vmem:[#allocation5 + $0x7d0] sm:$0xff]
        %v582 = vld [vmem:[#allocation5 + $0x7d8] sm:$0xff]
        %v583 = vld [vmem:[#allocation5 + $0x7e0] sm:$0xff]
        %v584 = vld [vmem:[#allocation5 + $0x7e8] sm:$0xff]
        %v585 = vld [vmem:[#allocation5 + $0x7f0] sm:$0xff]
        %v586 = vld [vmem:[#allocation5 + $0x7f8] sm:$0xff]
        %v587 = vld [vmem:[#allocation5 + $0x800] sm:$0xff]
        %v588 = vld [vmem:[#allocation5 + $0x808] sm:$0xff]
        %v589 = vld [vmem:[#allocation5 + $0x810] sm:$0xff]
        %v590 = vld [vmem:[#allocation5 + $0x818] sm:$0xff]
        %v591 = vld [vmem:[#allocation5 + $0x820] sm:$0xff]
        %v592 = vld [vmem:[#allocation5 + $0x828] sm:$0xff]
        %v593 = vld [vmem:[#allocation5 + $0x830] sm:$0xff]
        %v594 = vld [vmem:[#allocation5 + $0x838] sm:$0xff]
        %v595 = vld [vmem:[#allocation5 + $0x840] sm:$0xff]
        %v596 = vld [vmem:[#allocation5 + $0x848] sm:$0xff]
        %v597 = vld [vmem:[#allocation5 + $0x850] sm:$0xff]
        %v598 = vld [vmem:[#allocation5 + $0x858] sm:$0xff]
        %v599 = vld [vmem:[#allocation5 + $0x860] sm:$0xff]
        %v600 = vld [vmem:[#allocation5 + $0x868] sm:$0xff]
        %v601 = vld [vmem:[#allocation5 + $0x870] sm:$0xff]
        %v602 = vld [vmem:[#allocation5 + $0x878] sm:$0xff]
        %v603 = vld [vmem:[#allocation5 + $0x880] sm:$0xff]
        %v604 = vld [vmem:[#allocation5 + $0x888] sm:$0xff]
        %v605 = vld [vmem:[#allocation5 + $0x890] sm:$0xff]
        %v606 = vld [vmem:[#allocation5 + $0x898] sm:$0xff]
        %v607 = vld [vmem:[#allocation5 + $0x8a0] sm:$0xff]
        %v608 = vld [vmem:[#allocation5 + $0x8a8] sm:$0xff]
        %v609 = vld [vmem:[#allocation5 + $0x8b0] sm:$0xff]
        %v610 = vld [vmem:[#allocation5 + $0x8b8] sm:$0xff]
        %v611 = vld [vmem:[#allocation5 + $0x8c0] sm:$0xff]
        %v612 = vld [vmem:[#allocation5 + $0x8c8] sm:$0xff]
        %v613 = vld [vmem:[#allocation5 + $0x8d0] sm:$0xff]
        %v614 = vld [vmem:[#allocation5 + $0x8d8] sm:$0xff]
        %v615 = vld [vmem:[#allocation5 + $0x8e0] sm:$0xff]
        %v616 = vld [vmem:[#allocation5 + $0x8e8] sm:$0xff]
        %v617 = vld [vmem:[#allocation5 + $0x8f0] sm:$0xff]
        %v618 = vld [vmem:[#allocation5 + $0x8f8] sm:$0xff]
        %v619 = vld [vmem:[#allocation5 + $0x900] sm:$0xff]
        %v620 = vld [vmem:[#allocation5 + $0x908] sm:$0xff]
        %v621 = vld [vmem:[#allocation5 + $0x910] sm:$0xff]
        %v622 = vld [vmem:[#allocation5 + $0x918] sm:$0xff]
        %v623 = vld [vmem:[#allocation5 + $0x920] sm:$0xff]
        %v624 = vld [vmem:[#allocation5 + $0x928] sm:$0xff]
        %v625 = vld [vmem:[#allocation5 + $0x930] sm:$0xff]
        %v626 = vld [vmem:[#allocation5 + $0x938] sm:$0xff]
        %v627 = vld [vmem:[#allocation5 + $0x940] sm:$0xff]
        %v628 = vld [vmem:[#allocation5 + $0x948] sm:$0xff]
        %v629 = vld [vmem:[#allocation5 + $0x950] sm:$0xff]
        %v630 = vld [vmem:[#allocation5 + $0x958] sm:$0xff]
        %v631 = vld [vmem:[#allocation5 + $0x960] sm:$0xff]
        %v632 = vld [vmem:[#allocation5 + $0x968] sm:$0xff]
        %v633 = vld [vmem:[#allocation5 + $0x970] sm:$0xff]
        %v634 = vld [vmem:[#allocation5 + $0x978] sm:$0xff]
        %v635 = vld [vmem:[#allocation5 + $0x980] sm:$0xff]
        %v636 = vld [vmem:[#allocation5 + $0x988] sm:$0xff]
        %v637 = vld [vmem:[#allocation5 + $0x990] sm:$0xff]
        %v638 = vld [vmem:[#allocation5 + $0x998] sm:$0xff]
        %v639 = vld [vmem:[#allocation5 + $0x9a0] sm:$0xff]
        %v640 = vld [vmem:[#allocation5 + $0x9a8] sm:$0xff]
        %v641 = vld [vmem:[#allocation5 + $0x9b0] sm:$0xff]
        %v642 = vld [vmem:[#allocation5 + $0x9b8] sm:$0xff]
        %v643 = vld [vmem:[#allocation5 + $0x9c0] sm:$0xff]
        %v644 = vld [vmem:[#allocation5 + $0x9c8] sm:$0xff]
        %v645 = vld [vmem:[#allocation5 + $0x9d0] sm:$0xff]
        %v646 = vld [vmem:[#allocation5 + $0x9d8] sm:$0xff]
        %v647 = vld [vmem:[#allocation5 + $0x9e0] sm:$0xff]
        %v648 = vld [vmem:[#allocation5 + $0x9e8] sm:$0xff]
        %v649 = vld [vmem:[#allocation5 + $0x9f0] sm:$0xff]
        %v650 = vld [vmem:[#allocation5 + $0x9f8] sm:$0xff]
        %v651 = vld [vmem:[#allocation5 + $0xa00] sm:$0xff]
        %v652 = vld [vmem:[#allocation5 + $0xa08] sm:$0xff]
        %v653 = vld [vmem:[#allocation5 + $0xa10] sm:$0xff]
        %v654 = vld [vmem:[#allocation5 + $0xa18] sm:$0xff]
        %v655 = vld [vmem:[#allocation5 + $0xa20] sm:$0xff]
        %v656 = vld [vmem:[#allocation5 + $0xa28] sm:$0xff]
        %v657 = vld [vmem:[#allocation5 + $0xa30] sm:$0xff]
        %v658 = vld [vmem:[#allocation5 + $0xa38] sm:$0xff]
        %v659 = vld [vmem:[#allocation5 + $0xa40] sm:$0xff]
        %v660 = vld [vmem:[#allocation5 + $0xa48] sm:$0xff]
        %v661 = vld [vmem:[#allocation5 + $0xa50] sm:$0xff]
        %v662 = vld [vmem:[#allocation5 + $0xa58] sm:$0xff]
        %v663 = vld [vmem:[#allocation5 + $0xa60] sm:$0xff]
        %v664 = vld [vmem:[#allocation5 + $0xa68] sm:$0xff]
        %v665 = vld [vmem:[#allocation5 + $0xa70] sm:$0xff]
        %v666 = vld [vmem:[#allocation5 + $0xa78] sm:$0xff]
        %v667 = vld [vmem:[#allocation5 + $0xa80] sm:$0xff]
        %v668 = vld [vmem:[#allocation5 + $0xa88] sm:$0xff]
        %v669 = vld [vmem:[#allocation5 + $0xa90] sm:$0xff]
        %v670 = vld [vmem:[#allocation5 + $0xa98] sm:$0xff]
        %v671 = vld [vmem:[#allocation5 + $0xaa0] sm:$0xff]
        %v672 = vld [vmem:[#allocation5 + $0xaa8] sm:$0xff]
        %v673 = vld [vmem:[#allocation5 + $0xab0] sm:$0xff]
        %v674 = vld [vmem:[#allocation5 + $0xab8] sm:$0xff]
        %v675 = vld [vmem:[#allocation5 + $0xac0] sm:$0xff]
        %v676 = vld [vmem:[#allocation5 + $0xac8] sm:$0xff]
        %v677 = vld [vmem:[#allocation5 + $0xad0] sm:$0xff]
        %v678 = vld [vmem:[#allocation5 + $0xad8] sm:$0xff]
        %v679 = vld [vmem:[#allocation5 + $0xae0] sm:$0xff]
        %v680 = vld [vmem:[#allocation5 + $0xae8] sm:$0xff]
        %v681 = vld [vmem:[#allocation5 + $0xaf0] sm:$0xff]
        %v682 = vld [vmem:[#allocation5 + $0xaf8] sm:$0xff]
        %v683 = vld [vmem:[#allocation5 + $0xb00] sm:$0xff]
        %v684 = vld [vmem:[#allocation5 + $0xb08] sm:$0xff]
        %v685 = vld [vmem:[#allocation5 + $0xb10] sm:$0xff]
        %v686 = vld [vmem:[#allocation5 + $0xb18] sm:$0xff]
        %v687 = vld [vmem:[#allocation5 + $0xb20] sm:$0xff]
        %v688 = vld [vmem:[#allocation5 + $0xb28] sm:$0xff]
        %v689 = vld [vmem:[#allocation5 + $0xb30] sm:$0xff]
        %v690 = vld [vmem:[#allocation5 + $0xb38] sm:$0xff]
        %v691 = vld [vmem:[#allocation5 + $0xb40] sm:$0xff]
        %v692 = vld [vmem:[#allocation5 + $0xb48] sm:$0xff]
        %v693 = vld [vmem:[#allocation5 + $0xb50] sm:$0xff]
        %v694 = vld [vmem:[#allocation5 + $0xb58] sm:$0xff]
        %v695 = vld [vmem:[#allocation5 + $0xb60] sm:$0xff]
        %v696 = vld [vmem:[#allocation5 + $0xb68] sm:$0xff]
        %v697 = vld [vmem:[#allocation5 + $0xb70] sm:$0xff]
        %v698 = vld [vmem:[#allocation5 + $0xb78] sm:$0xff]
        %v699 = vld [vmem:[#allocation5 + $0xb80] sm:$0xff]
        %v700 = vld [vmem:[#allocation5 + $0xb88] sm:$0xff]
        %v701 = vld [vmem:[#allocation5 + $0xb90] sm:$0xff]
        %v702 = vld [vmem:[#allocation5 + $0xb98] sm:$0xff]
        %v703 = vld [vmem:[#allocation5 + $0xba0] sm:$0xff]
        %v704 = vld [vmem:[#allocation5 + $0xba8] sm:$0xff]
        %v705 = vld [vmem:[#allocation5 + $0xbb0] sm:$0xff]
        %v706 = vld [vmem:[#allocation5 + $0xbb8] sm:$0xff]
        %v707 = vld [vmem:[#allocation5 + $0xbc0] sm:$0xff]
        %v708 = vld [vmem:[#allocation5 + $0xbc8] sm:$0xff]
        %v709 = vld [vmem:[#allocation5 + $0xbd0] sm:$0xff]
        %v710 = vld [vmem:[#allocation5 + $0xbd8] sm:$0xff]
        %v711 = vld [vmem:[#allocation5 + $0xbe0] sm:$0xff]
        %v712 = vld [vmem:[#allocation5 + $0xbe8] sm:$0xff]
        %v713 = vld [vmem:[#allocation5 + $0xbf0] sm:$0xff]
        %v714 = vld [vmem:[#allocation5 + $0xbf8] sm:$0xff]
        %v715 = vld [vmem:[#allocation5 + $0xc00] sm:$0xff]
        %v716 = vld [vmem:[#allocation5 + $0xc08] sm:$0xff]
        %v717 = vld [vmem:[#allocation5 + $0xc10] sm:$0xff]
        %v718 = vld [vmem:[#allocation5 + $0xc18] sm:$0xff]
        %v719 = vld [vmem:[#allocation5 + $0xc20] sm:$0xff]
        %v720 = vld [vmem:[#allocation5 + $0xc28] sm:$0xff]
        %v721 = vld [vmem:[#allocation5 + $0xc30] sm:$0xff]
        %v722 = vld [vmem:[#allocation5 + $0xc38] sm:$0xff]
        %v723 = vld [vmem:[#allocation5 + $0xc40] sm:$0xff]
        %v724 = vld [vmem:[#allocation5 + $0xc48] sm:$0xff]
        %v725 = vld [vmem:[#allocation5 + $0xc50] sm:$0xff]
        %v726 = vld [vmem:[#allocation5 + $0xc58] sm:$0xff]
        %v727 = vld [vmem:[#allocation5 + $0xc60] sm:$0xff]
        %v728 = vld [vmem:[#allocation5 + $0xc68] sm:$0xff]
        %v729 = vld [vmem:[#allocation5 + $0xc70] sm:$0xff]
        %v730 = vld [vmem:[#allocation5 + $0xc78] sm:$0xff]
        %v731 = vld [vmem:[#allocation5 + $0xc80] sm:$0xff]
        %v732 = vld [vmem:[#allocation5 + $0xc88] sm:$0xff]
        %v733 = vld [vmem:[#allocation5 + $0xc90] sm:$0xff]
        %v734 = vld [vmem:[#allocation5 + $0xc98] sm:$0xff]
        %v735 = vld [vmem:[#allocation5 + $0xca0] sm:$0xff]
        %v736 = vld [vmem:[#allocation5 + $0xca8] sm:$0xff]
        %v737 = vld [vmem:[#allocation5 + $0xcb0] sm:$0xff]
        %v738 = vld [vmem:[#allocation5 + $0xcb8] sm:$0xff]
        %v739 = vld [vmem:[#allocation5 + $0xcc0] sm:$0xff]
        %v740 = vld [vmem:[#allocation5 + $0xcc8] sm:$0xff]
        %v741 = vld [vmem:[#allocation5 + $0xcd0] sm:$0xff]
        %v742 = vld [vmem:[#allocation5 + $0xcd8] sm:$0xff]
        %v743 = vld [vmem:[#allocation5 + $0xce0] sm:$0xff]
        %v744 = vld [vmem:[#allocation5 + $0xce8] sm:$0xff]
        %v745 = vld [vmem:[#allocation5 + $0xcf0] sm:$0xff]
        %v746 = vld [vmem:[#allocation5 + $0xcf8] sm:$0xff]
        %v747 = vld [vmem:[#allocation5 + $0xd00] sm:$0xff]
        %v748 = vld [vmem:[#allocation5 + $0xd08] sm:$0xff]
        %v749 = vld [vmem:[#allocation5 + $0xd10] sm:$0xff]
        %v750 = vld [vmem:[#allocation5 + $0xd18] sm:$0xff]
        %v751 = vld [vmem:[#allocation5 + $0xd20] sm:$0xff]
        %v752 = vld [vmem:[#allocation5 + $0xd28] sm:$0xff]
        %v753 = vld [vmem:[#allocation5 + $0xd30] sm:$0xff]
        %v754 = vld [vmem:[#allocation5 + $0xd38] sm:$0xff]
        %v755 = vld [vmem:[#allocation5 + $0xd40] sm:$0xff]
        %v756 = vld [vmem:[#allocation5 + $0xd48] sm:$0xff]
        %v757 = vld [vmem:[#allocation5 + $0xd50] sm:$0xff]
        %v758 = vld [vmem:[#allocation5 + $0xd58] sm:$0xff]
        %v759 = vld [vmem:[#allocation5 + $0xd60] sm:$0xff]
        %v760 = vld [vmem:[#allocation5 + $0xd68] sm:$0xff]
        %v761 = vld [vmem:[#allocation5 + $0xd70] sm:$0xff]
        %v762 = vld [vmem:[#allocation5 + $0xd78] sm:$0xff]
        %v763 = vpack.c.bf16 %v340, %v331
        %v764 = vpack.c.bf16 %v341, %v332
        %v765 = vpack.c.bf16 %v342, %v333
        %v766 = vpack.c.bf16 %v343, %v334
        %v767 = vpack.c.bf16 %v344, %v335
        %v768 = vpack.c.bf16 %v345, %v336
        %v769 = vpack.c.bf16 %v346, %v337
        %v770 = vpack.c.bf16 %v347, %v338
        %v771 = vpack.c.bf16 %v348, %v339
        %v772 = vpack.c.bf16 %v358, %v349
        %v773 = vpack.c.bf16 %v359, %v350
        %v774 = vpack.c.bf16 %v360, %v351
        %v775 = vpack.c.bf16 %v361, %v352
        %v776 = vpack.c.bf16 %v362, %v353
        %v777 = vpack.c.bf16 %v363, %v354
        %v778 = vpack.c.bf16 %v364, %v355
        %v779 = vpack.c.bf16 %v365, %v356
        %v780 = vpack.c.bf16 %v366, %v357
        %v781 = vpack.c.bf16 %v376, %v367
        %v782 = vpack.c.bf16 %v377, %v368
        %v783 = vpack.c.bf16 %v378, %v369
        %v784 = vpack.c.bf16 %v379, %v370
        %v785 = vpack.c.bf16 %v380, %v371
        %v786 = vpack.c.bf16 %v381, %v372
        %v787 = vpack.c.bf16 %v382, %v373
        %v788 = vpack.c.bf16 %v383, %v374
        %v789 = vpack.c.bf16 %v384, %v375
        %v790 = vpack.c.bf16 %v394, %v385
        %v791 = vpack.c.bf16 %v395, %v386
        %v792 = vpack.c.bf16 %v396, %v387
        %v793 = vpack.c.bf16 %v397, %v388
        %v794 = vpack.c.bf16 %v398, %v389
        %v795 = vpack.c.bf16 %v399, %v390
        %v796 = vpack.c.bf16 %v400, %v391
        %v797 = vpack.c.bf16 %v401, %v392
        %v798 = vpack.c.bf16 %v402, %v393
        %v799 = vpack.c.bf16 %v412, %v403
        %v800 = vpack.c.bf16 %v413, %v404
        %v801 = vpack.c.bf16 %v414, %v405
        %v802 = vpack.c.bf16 %v415, %v406
        %v803 = vpack.c.bf16 %v416, %v407
        %v804 = vpack.c.bf16 %v417, %v408
        %v805 = vpack.c.bf16 %v418, %v409
        %v806 = vpack.c.bf16 %v419, %v410
        %v807 = vpack.c.bf16 %v420, %v411
        %v808 = vpack.c.bf16 %v430, %v421
        %v809 = vpack.c.bf16 %v431, %v422
        %v810 = vpack.c.bf16 %v432, %v423
        %v811 = vpack.c.bf16 %v433, %v424
        %v812 = vpack.c.bf16 %v434, %v425
        %v813 = vpack.c.bf16 %v435, %v426
        %v814 = vpack.c.bf16 %v436, %v427
        %v815 = vpack.c.bf16 %v437, %v428
        %v816 = vpack.c.bf16 %v438, %v429
        %v817 = vpack.c.bf16 %v448, %v439
        %v818 = vpack.c.bf16 %v449, %v440
        %v819 = vpack.c.bf16 %v450, %v441
        %v820 = vpack.c.bf16 %v451, %v442
        %v821 = vpack.c.bf16 %v452, %v443
        %v822 = vpack.c.bf16 %v453, %v444
        %v823 = vpack.c.bf16 %v454, %v445
        %v824 = vpack.c.bf16 %v455, %v446
        %v825 = vpack.c.bf16 %v456, %v447
        %v826 = vpack.c.bf16 %v466, %v457
        %v827 = vpack.c.bf16 %v467, %v458
        %v828 = vpack.c.bf16 %v468, %v459
        %v829 = vpack.c.bf16 %v469, %v460
        %v830 = vpack.c.bf16 %v470, %v461
        %v831 = vpack.c.bf16 %v471, %v462
        %v832 = vpack.c.bf16 %v472, %v463
        %v833 = vpack.c.bf16 %v473, %v464
        %v834 = vpack.c.bf16 %v474, %v465
        %v835 = vpack.c.bf16 %v484, %v475
        %v836 = vpack.c.bf16 %v485, %v476
        %v837 = vpack.c.bf16 %v486, %v477
        %v838 = vpack.c.bf16 %v487, %v478
        %v839 = vpack.c.bf16 %v488, %v479
        %v840 = vpack.c.bf16 %v489, %v480
        %v841 = vpack.c.bf16 %v490, %v481
        %v842 = vpack.c.bf16 %v491, %v482
        %v843 = vpack.c.bf16 %v492, %v483
        %v844 = vpack.c.bf16 %v502, %v493
        %v845 = vpack.c.bf16 %v503, %v494
        %v846 = vpack.c.bf16 %v504, %v495
        %v847 = vpack.c.bf16 %v505, %v496
        %v848 = vpack.c.bf16 %v506, %v497
        %v849 = vpack.c.bf16 %v507, %v498
        %v850 = vpack.c.bf16 %v508, %v499
        %v851 = vpack.c.bf16 %v509, %v500
        %v852 = vpack.c.bf16 %v510, %v501
        %v853 = vpack.c.bf16 %v520, %v511
        %v854 = vpack.c.bf16 %v521, %v512
        %v855 = vpack.c.bf16 %v522, %v513
        %v856 = vpack.c.bf16 %v523, %v514
        %v857 = vpack.c.bf16 %v524, %v515
        %v858 = vpack.c.bf16 %v525, %v516
        %v859 = vpack.c.bf16 %v526, %v517
        %v860 = vpack.c.bf16 %v527, %v518
        %v861 = vpack.c.bf16 %v528, %v519
        %v862 = vpack.c.bf16 %v538, %v529
        %v863 = vpack.c.bf16 %v539, %v530
        %v864 = vpack.c.bf16 %v540, %v531
        %v865 = vpack.c.bf16 %v541, %v532
        %v866 = vpack.c.bf16 %v542, %v533
        %v867 = vpack.c.bf16 %v543, %v534
        %v868 = vpack.c.bf16 %v544, %v535
        %v869 = vpack.c.bf16 %v545, %v536
        %v870 = vpack.c.bf16 %v546, %v537
        %v871 = vpack.c.bf16 %v556, %v547
        %v872 = vpack.c.bf16 %v557, %v548
        %v873 = vpack.c.bf16 %v558, %v549
        %v874 = vpack.c.bf16 %v559, %v550
        %v875 = vpack.c.bf16 %v560, %v551
        %v876 = vpack.c.bf16 %v561, %v552
        %v877 = vpack.c.bf16 %v562, %v553
        %v878 = vpack.c.bf16 %v563, %v554
        %v879 = vpack.c.bf16 %v564, %v555
        %v880 = vpack.c.bf16 %v574, %v565
        %v881 = vpack.c.bf16 %v575, %v566
        %v882 = vpack.c.bf16 %v576, %v567
        %v883 = vpack.c.bf16 %v577, %v568
        %v884 = vpack.c.bf16 %v578, %v569
        %v885 = vpack.c.bf16 %v579, %v570
        %v886 = vpack.c.bf16 %v580, %v571
        %v887 = vpack.c.bf16 %v581, %v572
        %v888 = vpack.c.bf16 %v582, %v573
        %v889 = vpack.c.bf16 %v592, %v583
        %v890 = vpack.c.bf16 %v593, %v584
        %v891 = vpack.c.bf16 %v594, %v585
        %v892 = vpack.c.bf16 %v595, %v586
        %v893 = vpack.c.bf16 %v596, %v587
        %v894 = vpack.c.bf16 %v597, %v588
        %v895 = vpack.c.bf16 %v598, %v589
        %v896 = vpack.c.bf16 %v599, %v590
        %v897 = vpack.c.bf16 %v600, %v591
        %v898 = vpack.c.bf16 %v610, %v601
        %v899 = vpack.c.bf16 %v611, %v602
        %v900 = vpack.c.bf16 %v612, %v603
        %v901 = vpack.c.bf16 %v613, %v604
        %v902 = vpack.c.bf16 %v614, %v605
        %v903 = vpack.c.bf16 %v615, %v606
        %v904 = vpack.c.bf16 %v616, %v607
        %v905 = vpack.c.bf16 %v617, %v608
        %v906 = vpack.c.bf16 %v618, %v609
        %v907 = vpack.c.bf16 %v628, %v619
        %v908 = vpack.c.bf16 %v629, %v620
        %v909 = vpack.c.bf16 %v630, %v621
        %v910 = vpack.c.bf16 %v631, %v622
        %v911 = vpack.c.bf16 %v632, %v623
        %v912 = vpack.c.bf16 %v633, %v624
        %v913 = vpack.c.bf16 %v634, %v625
        %v914 = vpack.c.bf16 %v635, %v626
        %v915 = vpack.c.bf16 %v636, %v627
        %v916 = vpack.c.bf16 %v646, %v637
        %v917 = vpack.c.bf16 %v647, %v638
        %v918 = vpack.c.bf16 %v648, %v639
        %v919 = vpack.c.bf16 %v649, %v640
        %v920 = vpack.c.bf16 %v650, %v641
        %v921 = vpack.c.bf16 %v651, %v642
        %v922 = vpack.c.bf16 %v652, %v643
        %v923 = vpack.c.bf16 %v653, %v644
        %v924 = vpack.c.bf16 %v654, %v645
        %v925 = vpack.c.bf16 %v664, %v655
        %v926 = vpack.c.bf16 %v665, %v656
        %v927 = vpack.c.bf16 %v666, %v657
        %v928 = vpack.c.bf16 %v667, %v658
        %v929 = vpack.c.bf16 %v668, %v659
        %v930 = vpack.c.bf16 %v669, %v660
        %v931 = vpack.c.bf16 %v670, %v661
        %v932 = vpack.c.bf16 %v671, %v662
        %v933 = vpack.c.bf16 %v672, %v663
        %v934 = vpack.c.bf16 %v682, %v673
        %v935 = vpack.c.bf16 %v683, %v674
        %v936 = vpack.c.bf16 %v684, %v675
        %v937 = vpack.c.bf16 %v685, %v676
        %v938 = vpack.c.bf16 %v686, %v677
        %v939 = vpack.c.bf16 %v687, %v678
        %v940 = vpack.c.bf16 %v688, %v679
        %v941 = vpack.c.bf16 %v689, %v680
        %v942 = vpack.c.bf16 %v690, %v681
        %v943 = vpack.c.bf16 %v700, %v691
        %v944 = vpack.c.bf16 %v701, %v692
        %v945 = vpack.c.bf16 %v702, %v693
        %v946 = vpack.c.bf16 %v703, %v694
        %v947 = vpack.c.bf16 %v704, %v695
        %v948 = vpack.c.bf16 %v705, %v696
        %v949 = vpack.c.bf16 %v706, %v697
        %v950 = vpack.c.bf16 %v707, %v698
        %v951 = vpack.c.bf16 %v708, %v699
        %v952 = vpack.c.bf16 %v718, %v709
        %v953 = vpack.c.bf16 %v719, %v710
        %v954 = vpack.c.bf16 %v720, %v711
        %v955 = vpack.c.bf16 %v721, %v712
        %v956 = vpack.c.bf16 %v722, %v713
        %v957 = vpack.c.bf16 %v723, %v714
        %v958 = vpack.c.bf16 %v724, %v715
        %v959 = vpack.c.bf16 %v725, %v716
        %v960 = vpack.c.bf16 %v726, %v717
        %v961 = vpack.c.bf16 %v736, %v727
        %v962 = vpack.c.bf16 %v737, %v728
        %v963 = vpack.c.bf16 %v738, %v729
        %v964 = vpack.c.bf16 %v739, %v730
        %v965 = vpack.c.bf16 %v740, %v731
        %v966 = vpack.c.bf16 %v741, %v732
        %v967 = vpack.c.bf16 %v742, %v733
        %v968 = vpack.c.bf16 %v743, %v734
        %v969 = vpack.c.bf16 %v744, %v735
        %v970 = vpack.c.bf16 %v754, %v745
        %v971 = vpack.c.bf16 %v755, %v746
        %v972 = vpack.c.bf16 %v756, %v747
        %v973 = vpack.c.bf16 %v757, %v748
        %v974 = vpack.c.bf16 %v758, %v749
        %v975 = vpack.c.bf16 %v759, %v750
        %v976 = vpack.c.bf16 %v760, %v751
        %v977 = vpack.c.bf16 %v761, %v752
        %v978 = vpack.c.bf16 %v762, %v753
        %v979 = vld [vmem:[#allocation7] sm:$0xff]
        %v980 = vld [vmem:[#allocation7 + $0x8] sm:$0xff]
        %v981 = vld [vmem:[#allocation7 + $0x10] sm:$0xff]
        %v982 = vld [vmem:[#allocation7 + $0x18] sm:$0xff]
        %v983 = vld [vmem:[#allocation7 + $0x20] sm:$0xff]
        %v984 = vld [vmem:[#allocation7 + $0x28] sm:$0xff]
        %v985 = vld [vmem:[#allocation7 + $0x30] sm:$0xff]
        %v986 = vld [vmem:[#allocation7 + $0x38] sm:$0xff]
        %v987 = vld [vmem:[#allocation7 + $0x40] sm:$0xff]
        %v988 = vld [vmem:[#allocation7 + $0x48] sm:$0xff]
        %v989 = vld [vmem:[#allocation7 + $0x50] sm:$0xff]
        %v990 = vld [vmem:[#allocation7 + $0x58] sm:$0xff]
        %v991 = vld [vmem:[#allocation7 + $0x60] sm:$0xff]
        %v992 = vld [vmem:[#allocation7 + $0x68] sm:$0xff]
        %v993 = vld [vmem:[#allocation7 + $0x70] sm:$0xff]
        %v994 = vld [vmem:[#allocation7 + $0x78] sm:$0xff]
        %v995 = vld [vmem:[#allocation7 + $0x80] sm:$0xff]
        %v996 = vld [vmem:[#allocation7 + $0x88] sm:$0xff]
        %v997 = vld [vmem:[#allocation7 + $0x90] sm:$0xff]
        %v998 = vld [vmem:[#allocation7 + $0x98] sm:$0xff]
        %v999 = vld [vmem:[#allocation7 + $0xa0] sm:$0xff]
        %v1000 = vld [vmem:[#allocation7 + $0xa8] sm:$0xff]
        %v1001 = vld [vmem:[#allocation7 + $0xb0] sm:$0xff]
        %v1002 = vld [vmem:[#allocation7 + $0xb8] sm:$0xff]
        %v1003 = vld [vmem:[#allocation7 + $0xc0] sm:$0xff]
        %v1004 = vld [vmem:[#allocation7 + $0xc8] sm:$0xff]
        %v1005 = vld [vmem:[#allocation7 + $0xd0] sm:$0xff]
        %v1006 = vld [vmem:[#allocation7 + $0xd8] sm:$0xff]
        %v1007 = vld [vmem:[#allocation7 + $0xe0] sm:$0xff]
        %v1008 = vld [vmem:[#allocation7 + $0xe8] sm:$0xff]
        %v1009 = vld [vmem:[#allocation7 + $0xf0] sm:$0xff]
        %v1010 = vld [vmem:[#allocation7 + $0xf8] sm:$0xff]
        %v1011 = vld [vmem:[#allocation7 + $0x100] sm:$0xff]
        %v1012 = vld [vmem:[#allocation7 + $0x108] sm:$0xff]
        %v1013 = vld [vmem:[#allocation7 + $0x110] sm:$0xff]
        %v1014 = vld [vmem:[#allocation7 + $0x118] sm:$0xff]
        %v1015 = vld [vmem:[#allocation7 + $0x120] sm:$0xff]
        %v1016 = vld [vmem:[#allocation7 + $0x128] sm:$0xff]
        %v1017 = vld [vmem:[#allocation7 + $0x130] sm:$0xff]
        %v1018 = vld [vmem:[#allocation7 + $0x138] sm:$0xff]
        %v1019 = vld [vmem:[#allocation7 + $0x140] sm:$0xff]
        %v1020 = vld [vmem:[#allocation7 + $0x148] sm:$0xff]
        %v1021 = vld [vmem:[#allocation7 + $0x150] sm:$0xff]
        %v1022 = vld [vmem:[#allocation7 + $0x158] sm:$0xff]
        %v1023 = vld [vmem:[#allocation7 + $0x160] sm:$0xff]
        %v1024 = vld [vmem:[#allocation7 + $0x168] sm:$0xff]
        %v1025 = vld [vmem:[#allocation7 + $0x170] sm:$0xff]
        %v1026 = vld [vmem:[#allocation7 + $0x178] sm:$0xff]
        %v1027 = vld [vmem:[#allocation7 + $0x180] sm:$0xff]
        %v1028 = vld [vmem:[#allocation7 + $0x188] sm:$0xff]
        %v1029 = vld [vmem:[#allocation7 + $0x190] sm:$0xff]
        %v1030 = vld [vmem:[#allocation7 + $0x198] sm:$0xff]
        %v1031 = vld [vmem:[#allocation7 + $0x1a0] sm:$0xff]
        %v1032 = vld [vmem:[#allocation7 + $0x1a8] sm:$0xff]
        %v1033 = vld [vmem:[#allocation7 + $0x1b0] sm:$0xff]
        %v1034 = vld [vmem:[#allocation7 + $0x1b8] sm:$0xff]
        %v1035 = vld [vmem:[#allocation7 + $0x1c0] sm:$0xff]
        %v1036 = vld [vmem:[#allocation7 + $0x1c8] sm:$0xff]
        %v1037 = vld [vmem:[#allocation7 + $0x1d0] sm:$0xff]
        %v1038 = vld [vmem:[#allocation7 + $0x1d8] sm:$0xff]
        %v1039 = vld [vmem:[#allocation7 + $0x1e0] sm:$0xff]
        %v1040 = vld [vmem:[#allocation7 + $0x1e8] sm:$0xff]
        %v1041 = vld [vmem:[#allocation7 + $0x1f0] sm:$0xff]
        %v1042 = vld [vmem:[#allocation7 + $0x1f8] sm:$0xff]
        %v1043 = vld [vmem:[#allocation7 + $0x200] sm:$0xff]
        %v1044 = vld [vmem:[#allocation7 + $0x208] sm:$0xff]
        %v1045 = vld [vmem:[#allocation7 + $0x210] sm:$0xff]
        %v1046 = vld [vmem:[#allocation7 + $0x218] sm:$0xff]
        %v1047 = vld [vmem:[#allocation7 + $0x220] sm:$0xff]
        %v1048 = vld [vmem:[#allocation7 + $0x228] sm:$0xff]
        %v1049 = vld [vmem:[#allocation7 + $0x230] sm:$0xff]
        %v1050 = vld [vmem:[#allocation7 + $0x238] sm:$0xff]
        %v1051 = vld [vmem:[#allocation7 + $0x240] sm:$0xff]
        %v1052 = vld [vmem:[#allocation7 + $0x248] sm:$0xff]
        %v1053 = vld [vmem:[#allocation7 + $0x250] sm:$0xff]
        %v1054 = vld [vmem:[#allocation7 + $0x258] sm:$0xff]
        %v1055 = vld [vmem:[#allocation7 + $0x260] sm:$0xff]
        %v1056 = vld [vmem:[#allocation7 + $0x268] sm:$0xff]
        %v1057 = vld [vmem:[#allocation7 + $0x270] sm:$0xff]
        %v1058 = vld [vmem:[#allocation7 + $0x278] sm:$0xff]
        %v1059 = vld [vmem:[#allocation7 + $0x280] sm:$0xff]
        %v1060 = vld [vmem:[#allocation7 + $0x288] sm:$0xff]
        %v1061 = vld [vmem:[#allocation7 + $0x290] sm:$0xff]
        %v1062 = vld [vmem:[#allocation7 + $0x298] sm:$0xff]
        %v1063 = vld [vmem:[#allocation7 + $0x2a0] sm:$0xff]
        %v1064 = vld [vmem:[#allocation7 + $0x2a8] sm:$0xff]
        %v1065 = vld [vmem:[#allocation7 + $0x2b0] sm:$0xff]
        %v1066 = vld [vmem:[#allocation7 + $0x2b8] sm:$0xff]
        %v1067 = vld [vmem:[#allocation7 + $0x2c0] sm:$0xff]
        %v1068 = vld [vmem:[#allocation7 + $0x2c8] sm:$0xff]
        %v1069 = vld [vmem:[#allocation7 + $0x2d0] sm:$0xff]
        %v1070 = vld [vmem:[#allocation7 + $0x2d8] sm:$0xff]
        %v1071 = vld [vmem:[#allocation7 + $0x2e0] sm:$0xff]
        %v1072 = vld [vmem:[#allocation7 + $0x2e8] sm:$0xff]
        %v1073 = vld [vmem:[#allocation7 + $0x2f0] sm:$0xff]
        %v1074 = vld [vmem:[#allocation7 + $0x2f8] sm:$0xff]
        %v1075 = vld [vmem:[#allocation7 + $0x300] sm:$0xff]
        %v1076 = vld [vmem:[#allocation7 + $0x308] sm:$0xff]
        %v1077 = vld [vmem:[#allocation7 + $0x310] sm:$0xff]
        %v1078 = vld [vmem:[#allocation7 + $0x318] sm:$0xff]
        %v1079 = vld [vmem:[#allocation7 + $0x320] sm:$0xff]
        %v1080 = vld [vmem:[#allocation7 + $0x328] sm:$0xff]
        %v1081 = vld [vmem:[#allocation7 + $0x330] sm:$0xff]
        %v1082 = vld [vmem:[#allocation7 + $0x338] sm:$0xff]
        %v1083 = vld [vmem:[#allocation7 + $0x340] sm:$0xff]
        %v1084 = vld [vmem:[#allocation7 + $0x348] sm:$0xff]
        %v1085 = vld [vmem:[#allocation7 + $0x350] sm:$0xff]
        %v1086 = vld [vmem:[#allocation7 + $0x358] sm:$0xff]
        %v1087 = vld [vmem:[#allocation7 + $0x360] sm:$0xff]
        %v1088 = vld [vmem:[#allocation7 + $0x368] sm:$0xff]
        %v1089 = vld [vmem:[#allocation7 + $0x370] sm:$0xff]
        %v1090 = vld [vmem:[#allocation7 + $0x378] sm:$0xff]
        %v1091 = vld [vmem:[#allocation7 + $0x380] sm:$0xff]
        %v1092 = vld [vmem:[#allocation7 + $0x388] sm:$0xff]
        %v1093 = vld [vmem:[#allocation7 + $0x390] sm:$0xff]
        %v1094 = vld [vmem:[#allocation7 + $0x398] sm:$0xff]
        %v1095 = vld [vmem:[#allocation7 + $0x3a0] sm:$0xff]
        %v1096 = vld [vmem:[#allocation7 + $0x3a8] sm:$0xff]
        %v1097 = vld [vmem:[#allocation7 + $0x3b0] sm:$0xff]
        %v1098 = vld [vmem:[#allocation7 + $0x3b8] sm:$0xff]
        %v1099 = vld [vmem:[#allocation7 + $0x3c0] sm:$0xff]
        %v1100 = vld [vmem:[#allocation7 + $0x3c8] sm:$0xff]
        %v1101 = vld [vmem:[#allocation7 + $0x3d0] sm:$0xff]
        %v1102 = vld [vmem:[#allocation7 + $0x3d8] sm:$0xff]
        %v1103 = vld [vmem:[#allocation7 + $0x3e0] sm:$0xff]
        %v1104 = vld [vmem:[#allocation7 + $0x3e8] sm:$0xff]
        %v1105 = vld [vmem:[#allocation7 + $0x3f0] sm:$0xff]
        %v1106 = vld [vmem:[#allocation7 + $0x3f8] sm:$0xff]
        %v1107 = vld [vmem:[#allocation7 + $0x400] sm:$0xff]
        %v1108 = vld [vmem:[#allocation7 + $0x408] sm:$0xff]
        %v1109 = vld [vmem:[#allocation7 + $0x410] sm:$0xff]
        %v1110 = vld [vmem:[#allocation7 + $0x418] sm:$0xff]
        %v1111 = vld [vmem:[#allocation7 + $0x420] sm:$0xff]
        %v1112 = vld [vmem:[#allocation7 + $0x428] sm:$0xff]
        %v1113 = vld [vmem:[#allocation7 + $0x430] sm:$0xff]
        %v1114 = vld [vmem:[#allocation7 + $0x438] sm:$0xff]
        %v1115 = vld [vmem:[#allocation7 + $0x440] sm:$0xff]
        %v1116 = vld [vmem:[#allocation7 + $0x448] sm:$0xff]
        %v1117 = vld [vmem:[#allocation7 + $0x450] sm:$0xff]
        %v1118 = vld [vmem:[#allocation7 + $0x458] sm:$0xff]
        %v1119 = vld [vmem:[#allocation7 + $0x460] sm:$0xff]
        %v1120 = vld [vmem:[#allocation7 + $0x468] sm:$0xff]
        %v1121 = vld [vmem:[#allocation7 + $0x470] sm:$0xff]
        %v1122 = vld [vmem:[#allocation7 + $0x478] sm:$0xff]
        %v1123 = vpack.c.bf16 %v982, %v979
        %v1124 = vpack.c.bf16 %v983, %v980
        %v1125 = vpack.c.bf16 %v984, %v981
        %v1126 = vpack.c.bf16 %v988, %v985
        %v1127 = vpack.c.bf16 %v989, %v986
        %v1128 = vpack.c.bf16 %v990, %v987
        %v1129 = vpack.c.bf16 %v994, %v991
        %v1130 = vpack.c.bf16 %v995, %v992
        %v1131 = vpack.c.bf16 %v996, %v993
        %v1132 = vpack.c.bf16 %v1000, %v997
        %v1133 = vpack.c.bf16 %v1001, %v998
        %v1134 = vpack.c.bf16 %v1002, %v999
        %v1135 = vpack.c.bf16 %v1006, %v1003
        %v1136 = vpack.c.bf16 %v1007, %v1004
        %v1137 = vpack.c.bf16 %v1008, %v1005
        %v1138 = vpack.c.bf16 %v1012, %v1009
        %v1139 = vpack.c.bf16 %v1013, %v1010
        %v1140 = vpack.c.bf16 %v1014, %v1011
        %v1141 = vpack.c.bf16 %v1018, %v1015
        %v1142 = vpack.c.bf16 %v1019, %v1016
        %v1143 = vpack.c.bf16 %v1020, %v1017
        %v1144 = vpack.c.bf16 %v1024, %v1021
        %v1145 = vpack.c.bf16 %v1025, %v1022
        %v1146 = vpack.c.bf16 %v1026, %v1023
        %v1147 = vpack.c.bf16 %v1030, %v1027
        %v1148 = vpack.c.bf16 %v1031, %v1028
        %v1149 = vpack.c.bf16 %v1032, %v1029
        %v1150 = vpack.c.bf16 %v1036, %v1033
        %v1151 = vpack.c.bf16 %v1037, %v1034
        %v1152 = vpack.c.bf16 %v1038, %v1035
        %v1153 = vpack.c.bf16 %v1042, %v1039
        %v1154 = vpack.c.bf16 %v1043, %v1040
        %v1155 = vpack.c.bf16 %v1044, %v1041
        %v1156 = vpack.c.bf16 %v1048, %v1045
        %v1157 = vpack.c.bf16 %v1049, %v1046
        %v1158 = vpack.c.bf16 %v1050, %v1047
        %v1159 = vpack.c.bf16 %v1054, %v1051
        %v1160 = vpack.c.bf16 %v1055, %v1052
        %v1161 = vpack.c.bf16 %v1056, %v1053
        %v1162 = vpack.c.bf16 %v1060, %v1057
        %v1163 = vpack.c.bf16 %v1061, %v1058
        %v1164 = vpack.c.bf16 %v1062, %v1059
        %v1165 = vpack.c.bf16 %v1066, %v1063
        %v1166 = vpack.c.bf16 %v1067, %v1064
        %v1167 = vpack.c.bf16 %v1068, %v1065
        %v1168 = vpack.c.bf16 %v1072, %v1069
        %v1169 = vpack.c.bf16 %v1073, %v1070
        %v1170 = vpack.c.bf16 %v1074, %v1071
        %v1171 = vpack.c.bf16 %v1078, %v1075
        %v1172 = vpack.c.bf16 %v1079, %v1076
        %v1173 = vpack.c.bf16 %v1080, %v1077
        %v1174 = vpack.c.bf16 %v1084, %v1081
        %v1175 = vpack.c.bf16 %v1085, %v1082
        %v1176 = vpack.c.bf16 %v1086, %v1083
        %v1177 = vpack.c.bf16 %v1090, %v1087
        %v1178 = vpack.c.bf16 %v1091, %v1088
        %v1179 = vpack.c.bf16 %v1092, %v1089
        %v1180 = vpack.c.bf16 %v1096, %v1093
        %v1181 = vpack.c.bf16 %v1097, %v1094
        %v1182 = vpack.c.bf16 %v1098, %v1095
        %v1183 = vpack.c.bf16 %v1102, %v1099
        %v1184 = vpack.c.bf16 %v1103, %v1100
        %v1185 = vpack.c.bf16 %v1104, %v1101
        %v1186 = vpack.c.bf16 %v1108, %v1105
        %v1187 = vpack.c.bf16 %v1109, %v1106
        %v1188 = vpack.c.bf16 %v1110, %v1107
        %v1189 = vpack.c.bf16 %v1114, %v1111
        %v1190 = vpack.c.bf16 %v1115, %v1112
        %v1191 = vpack.c.bf16 %v1116, %v1113
        %v1192 = vpack.c.bf16 %v1120, %v1117
        %v1193 = vpack.c.bf16 %v1121, %v1118
        %v1194 = vpack.c.bf16 %v1122, %v1119
        %1195 = vmatprep.subr.bf16.mxu0 %v764
        %1196 = vmatpush1.bf16.msra.mxu0 %v763
        %1197 = vmatprep.subr.bf16.mxu0 %v773
        %1198 = vmatpush1.bf16.msra.mxu0 %v772
        %1199 = vmatprep.subr.bf16.mxu0 %v782
        %1200 = vmatpush1.bf16.msra.mxu0 %v781
        %1201 = vmatprep.subr.bf16.mxu0 %v791
        %1202 = vmatpush1.bf16.msra.mxu0 %v790
        %1203 = vmatprep.subr.bf16.mxu0 %v800
        %1204 = vmatpush1.bf16.msra.mxu0 %v799
        %1205 = vmatprep.subr.bf16.mxu0 %v809
        %1206 = vmatpush1.bf16.msra.mxu0 %v808
        %1207 = vmatprep.subr.bf16.mxu0 %v818
        %1208 = vmatpush1.bf16.msra.mxu0 %v817
        %1209 = vmatprep.subr.bf16.mxu0 %v827
        %1210 = vmatpush1.bf16.msra.mxu0 %v826
        %1211 = vmatprep.subr.bf16.mxu0 %v836
        %1212 = vmatpush1.bf16.msra.mxu0 %v835
        %1213 = vmatprep.subr.bf16.mxu0 %v845
        %1214 = vmatpush1.bf16.msra.mxu0 %v844
        %1215 = vmatprep.subr.bf16.mxu0 %v854
        %1216 = vmatpush1.bf16.msra.mxu0 %v853
        %1217 = vmatprep.subr.bf16.mxu0 %v863
        %1218 = vmatpush1.bf16.msra.mxu0 %v862
        %1219 = vmatprep.subr.bf16.mxu0 %v872
        %1220 = vmatpush1.bf16.msra.mxu0 %v871
        %1221 = vmatprep.subr.bf16.mxu0 %v881
        %1222 = vmatpush1.bf16.msra.mxu0 %v880
        %1223 = vmatprep.subr.bf16.mxu0 %v890
        %1224 = vmatpush1.bf16.msra.mxu0 %v889
        %1225 = vmatprep.subr.bf16.mxu0 %v899
        %1226 = vmatpush1.bf16.msra.mxu0 %v898
        %1227 = vmatprep.mubr.bf16.mxu0 %v308
        %1228 = vmatmul.mubr.bf16.gmra.mrb[0].mxu0 %v307
        %v1229 = vpop.f32.mrb[0].mxu0
        %v1230 = vadd.f32 0.0, %v1229
        %v1231 = vpop.f32.mrb[0].mxu0
        %v1232 = vadd.f32 0.0, %v1231
        %v1233 = vpop.f32.mrb[0].mxu0
        %v1234 = vadd.f32 0.0, %v1233
        %v1235 = vpop.f32.mrb[0].mxu0
        %v1236 = vadd.f32 0.0, %v1235
        %1237 = vmatprep.mubr.bf16.mxu0 %v311
        %1238 = vmatmul.mubr.bf16.gmra.mrb[0].mxu0 %v310
        %v1239 = vpop.f32.mrb[0].mxu0
        %v1240 = vadd.f32 0.0, %v1239
        %v1241 = vpop.f32.mrb[0].mxu0
        %v1242 = vadd.f32 0.0, %v1241
        %v1243 = vpop.f32.mrb[0].mxu0
        %v1244 = vadd.f32 0.0, %v1243
        %v1245 = vpop.f32.mrb[0].mxu0
        %v1246 = vadd.f32 0.0, %v1245
        %1247 = vmatprep.mubr.bf16.mxu0 %v314
        %1248 = vmatmul.mubr.bf16.gmra.mrb[0].mxu0 %v313
        %v1249 = vpop.f32.mrb[0].mxu0
        %v1250 = vadd.f32 0.0, %v1249
        %v1251 = vpop.f32.mrb[0].mxu0
        %v1252 = vadd.f32 0.0, %v1251
        %v1253 = vpop.f32.mrb[0].mxu0
        %v1254 = vadd.f32 0.0, %v1253
        %v1255 = vpop.f32.mrb[0].mxu0
        %v1256 = vadd.f32 0.0, %v1255
        %1257 = vmatprep.mubr.bf16.mxu0 %v317
        %1258 = vmatmul.mubr.bf16.gmra.mrb[0].mxu0 %v316
        %v1259 = vpop.f32.mrb[0].mxu0
        %v1260 = vadd.f32 0.0, %v1259
        %v1261 = vpop.f32.mrb[0].mxu0
        %v1262 = vadd.f32 0.0, %v1261
        %v1263 = vpop.f32.mrb[0].mxu0
        %v1264 = vadd.f32 0.0, %v1263
        %v1265 = vpop.f32.mrb[0].mxu0
        %v1266 = vadd.f32 0.0, %v1265
        %1267 = vmatprep.mubr.bf16.mxu0 %v320
        %1268 = vmatmul.mubr.bf16.gmra.mrb[0].mxu0 %v319
        %v1269 = vpop.f32.mrb[0].mxu0
        %v1270 = vadd.f32 0.0, %v1269
        %v1271 = vpop.f32.mrb[0].mxu0
        %v1272 = vadd.f32 0.0, %v1271
        %v1273 = vpop.f32.mrb[0].mxu0
        %v1274 = vadd.f32 0.0, %v1273
        %v1275 = vpop.f32.mrb[0].mxu0
        %v1276 = vadd.f32 0.0, %v1275
        %1277 = vmatprep.mubr.bf16.mxu0 %v323
        %1278 = vmatmul.mubr.bf16.gmra.mrb[0].mxu0 %v322
        %v1279 = vpop.f32.mrb[0].mxu0
        %v1280 = vadd.f32 0.0, %v1279
        %v1281 = vpop.f32.mrb[0].mxu0
        %v1282 = vadd.f32 0.0, %v1281
        %v1283 = vpop.f32.mrb[0].mxu0
        %v1284 = vadd.f32 0.0, %v1283
        %v1285 = vpop.f32.mrb[0].mxu0
        %v1286 = vadd.f32 0.0, %v1285
        %1287 = vmatprep.mubr.bf16.mxu0 %v326
        %1288 = vmatmul.mubr.bf16.gmra.mrb[0].mxu0 %v325
        %v1289 = vpop.f32.mrb[0].mxu0
        %v1290 = vadd.f32 0.0, %v1289
        %v1291 = vpop.f32.mrb[0].mxu0
        %v1292 = vadd.f32 0.0, %v1291
        %v1293 = vpop.f32.mrb[0].mxu0
        %v1294 = vadd.f32 0.0, %v1293
        %v1295 = vpop.f32.mrb[0].mxu0
        %v1296 = vadd.f32 0.0, %v1295
        %1297 = vmatprep.mubr.bf16.mxu0 %v329
        %1298 = vmatmul.mubr.bf16.gmra.mrb[0].mxu0 %v328
        %v1299 = vpop.f32.mrb[0].mxu0
        %v1300 = vadd.f32 0.0, %v1299
        %v1301 = vpop.f32.mrb[0].mxu0
        %v1302 = vadd.f32 0.0, %v1301
        %v1303 = vpop.f32.mrb[0].mxu0
        %v1304 = vadd.f32 0.0, %v1303
        %v1305 = vpop.f32.mrb[0].mxu0
        %v1306 = vadd.f32 0.0, %v1305
        %1307 = vdwg.mxu0
        %1308 = vmatprep.subr.bf16.mxu0 %v908
        %1309 = vmatpush1.bf16.msra.mxu0 %v907
        %1310 = vmatprep.subr.bf16.mxu0 %v917
        %1311 = vmatpush1.bf16.msra.mxu0 %v916
        %1312 = vmatprep.subr.bf16.mxu0 %v926
        %1313 = vmatpush1.bf16.msra.mxu0 %v925
        %1314 = vmatprep.subr.bf16.mxu0 %v935
        %1315 = vmatpush1.bf16.msra.mxu0 %v934
        %1316 = vmatprep.subr.bf16.mxu0 %v944
        %1317 = vmatpush1.bf16.msra.mxu0 %v943
        %1318 = vmatprep.subr.bf16.mxu0 %v953
        %1319 = vmatpush1.bf16.msra.mxu0 %v952
        %1320 = vmatprep.subr.bf16.mxu0 %v962
        %1321 = vmatpush1.bf16.msra.mxu0 %v961
        %1322 = vmatprep.subr.bf16.mxu0 %v971
        %1323 = vmatpush1.bf16.msra.mxu0 %v970
        %1324 = vmatprep.subr.bf16.mxu0 0
        %1325 = vmatpush1.bf16.msra.mxu0 0
        %1326 = vmatprep.subr.bf16.mxu0 0
        %1327 = vmatpush1.bf16.msra.mxu0 0
        %1328 = vmatprep.subr.bf16.mxu0 0
        %1329 = vmatpush1.bf16.msra.mxu0 0
        %1330 = vmatprep.subr.bf16.mxu0 0
        %1331 = vmatpush1.bf16.msra.mxu0 0
        %1332 = vmatprep.subr.bf16.mxu0 0
        %1333 = vmatpush1.bf16.msra.mxu0 0
        %1334 = vmatprep.subr.bf16.mxu0 0
        %1335 = vmatpush1.bf16.msra.mxu0 0
        %1336 = vmatprep.subr.bf16.mxu0 0
        %1337 = vmatpush1.bf16.msra.mxu0 0
        %1338 = vmatprep.subr.bf16.mxu0 0
        %1339 = vmatpush1.bf16.msra.mxu0 0
        %1340 = vmatprep.mubr.bf16.mxu0 0
        %1341 = vmatmul.mubr.bf16.gmra.mrb[0].mxu0 %v309
        %v1342 = vpop.f32.mrb[0].mxu0
        %v1343 = vadd.f32 %v1230, %v1342
        %v1344 = vpop.f32.mrb[0].mxu0
        %v1345 = vadd.f32 %v1232, %v1344
        %v1346 = vpop.f32.mrb[0].mxu0
        %v1347 = vadd.f32 %v1234, %v1346
        %v1348 = vpop.f32.mrb[0].mxu0
        %v1349 = vadd.f32 %v1236, %v1348
        %1350 = vmatprep.mubr.bf16.mxu0 0
        %1351 = vmatmul.mubr.bf16.gmra.mrb[0].mxu0 %v312
        %v1352 = vpop.f32.mrb[0].mxu0
        %v1353 = vadd.f32 %v1240, %v1352
        %v1354 = vpop.f32.mrb[0].mxu0
        %v1355 = vadd.f32 %v1242, %v1354
        %v1356 = vpop.f32.mrb[0].mxu0
        %v1357 = vadd.f32 %v1244, %v1356
        %v1358 = vpop.f32.mrb[0].mxu0
        %v1359 = vadd.f32 %v1246, %v1358
        %1360 = vmatprep.mubr.bf16.mxu0 0
        %1361 = vmatmul.mubr.bf16.gmra.mrb[0].mxu0 %v315
        %v1362 = vpop.f32.mrb[0].mxu0
        %v1363 = vadd.f32 %v1250, %v1362
        %v1364 = vpop.f32.mrb[0].mxu0
        %v1365 = vadd.f32 %v1252, %v1364
        %v1366 = vpop.f32.mrb[0].mxu0
        %v1367 = vadd.f32 %v1254, %v1366
        %v1368 = vpop.f32.mrb[0].mxu0
        %v1369 = vadd.f32 %v1256, %v1368
        %1370 = vmatprep.mubr.bf16.mxu0 0
        %1371 = vmatmul.mubr.bf16.gmra.mrb[0].mxu0 %v318
        %v1372 = vpop.f32.mrb[0].mxu0
        %v1373 = vadd.f32 %v1260, %v1372
        %v1374 = vpop.f32.mrb[0].mxu0
        %v1375 = vadd.f32 %v1262, %v1374
        %v1376 = vpop.f32.mrb[0].mxu0
        %v1377 = vadd.f32 %v1264, %v1376
        %v1378 = vpop.f32.mrb[0].mxu0
        %v1379 = vadd.f32 %v1266, %v1378
        %1380 = vmatprep.mubr.bf16.mxu0 0
        %1381 = vmatmul.mubr.bf16.gmra.mrb[0].mxu0 %v321
        %v1382 = vpop.f32.mrb[0].mxu0
        %v1383 = vadd.f32 %v1270, %v1382
        %v1384 = vpop.f32.mrb[0].mxu0
        %v1385 = vadd.f32 %v1272, %v1384
        %v1386 = vpop.f32.mrb[0].mxu0
        %v1387 = vadd.f32 %v1274, %v1386
        %v1388 = vpop.f32.mrb[0].mxu0
        %v1389 = vadd.f32 %v1276, %v1388
        %1390 = vmatprep.mubr.bf16.mxu0 0
        %1391 = vmatmul.mubr.bf16.gmra.mrb[0].mxu0 %v324
        %v1392 = vpop.f32.mrb[0].mxu0
        %v1393 = vadd.f32 %v1280, %v1392
        %v1394 = vpop.f32.mrb[0].mxu0
        %v1395 = vadd.f32 %v1282, %v1394
        %v1396 = vpop.f32.mrb[0].mxu0
        %v1397 = vadd.f32 %v1284, %v1396
        %v1398 = vpop.f32.mrb[0].mxu0
        %v1399 = vadd.f32 %v1286, %v1398
        %1400 = vmatprep.mubr.bf16.mxu0 0
        %1401 = vmatmul.mubr.bf16.gmra.mrb[0].mxu0 %v327
        %v1402 = vpop.f32.mrb[0].mxu0
        %v1403 = vadd.f32 %v1290, %v1402
        %v1404 = vpop.f32.mrb[0].mxu0
        %v1405 = vadd.f32 %v1292, %v1404
        %v1406 = vpop.f32.mrb[0].mxu0
        %v1407 = vadd.f32 %v1294, %v1406
        %v1408 = vpop.f32.mrb[0].mxu0
        %v1409 = vadd.f32 %v1296, %v1408
        %1410 = vmatprep.mubr.bf16.mxu0 0
        %1411 = vmatmul.mubr.bf16.gmra.mrb[0].mxu0 %v330
        %v1412 = vpop.f32.mrb[0].mxu0
        %v1413 = vadd.f32 %v1300, %v1412
        %v1414 = vpop.f32.mrb[0].mxu0
        %v1415 = vadd.f32 %v1302, %v1414
        %v1416 = vpop.f32.mrb[0].mxu0
        %v1417 = vadd.f32 %v1304, %v1416
        %v1418 = vpop.f32.mrb[0].mxu0
        %v1419 = vadd.f32 %v1306, %v1418
        %1420 = vdwg.mxu0
        %1421 = vmatprep.subr.bf16.mxu0 %v766
        %1422 = vmatpush1.bf16.msra.mxu0 %v765
        %1423 = vmatprep.subr.bf16.mxu0 %v775
        %1424 = vmatpush1.bf16.msra.mxu0 %v774
        %1425 = vmatprep.subr.bf16.mxu0 %v784
        %1426 = vmatpush1.bf16.msra.mxu0 %v783
        %1427 = vmatprep.subr.bf16.mxu0 %v793
        %1428 = vmatpush1.bf16.msra.mxu0 %v792
        %1429 = vmatprep.subr.bf16.mxu0 %v802
        %1430 = vmatpush1.bf16.msra.mxu0 %v801
        %1431 = vmatprep.subr.bf16.mxu0 %v811
        %1432 = vmatpush1.bf16.msra.mxu0 %v810
        %1433 = vmatprep.subr.bf16.mxu0 %v820
        %1434 = vmatpush1.bf16.msra.mxu0 %v819
        %1435 = vmatprep.subr.bf16.mxu0 %v829
        %1436 = vmatpush1.bf16.msra.mxu0 %v828
        %1437 = vmatprep.subr.bf16.mxu0 %v838
        %1438 = vmatpush1.bf16.msra.mxu0 %v837
        %1439 = vmatprep.subr.bf16.mxu0 %v847
        %1440 = vmatpush1.bf16.msra.mxu0 %v846
        %1441 = vmatprep.subr.bf16.mxu0 %v856
        %1442 = vmatpush1.bf16.msra.mxu0 %v855
        %1443 = vmatprep.subr.bf16.mxu0 %v865
        %1444 = vmatpush1.bf16.msra.mxu0 %v864
        %1445 = vmatprep.subr.bf16.mxu0 %v874
        %1446 = vmatpush1.bf16.msra.mxu0 %v873
        %1447 = vmatprep.subr.bf16.mxu0 %v883
        %1448 = vmatpush1.bf16.msra.mxu0 %v882
        %1449 = vmatprep.subr.bf16.mxu0 %v892
        %1450 = vmatpush1.bf16.msra.mxu0 %v891
        %1451 = vmatprep.subr.bf16.mxu0 %v901
        %1452 = vmatpush1.bf16.msra.mxu0 %v900
        %1453 = vmatprep.mubr.bf16.mxu0 %v308
        %1454 = vmatmul.mubr.bf16.gmra.mrb[0].mxu0 %v307
        %v1455 = vpop.f32.mrb[0].mxu0
        %v1456 = vadd.f32 0.0, %v1455
        %v1457 = vpop.f32.mrb[0].mxu0
        %v1458 = vadd.f32 0.0, %v1457
        %v1459 = vpop.f32.mrb[0].mxu0
        %v1460 = vadd.f32 0.0, %v1459
        %v1461 = vpop.f32.mrb[0].mxu0
        %v1462 = vadd.f32 0.0, %v1461
        %1463 = vmatprep.mubr.bf16.mxu0 %v311
        %1464 = vmatmul.mubr.bf16.gmra.mrb[0].mxu0 %v310
        %v1465 = vpop.f32.mrb[0].mxu0
        %v1466 = vadd.f32 0.0, %v1465
        %v1467 = vpop.f32.mrb[0].mxu0
        %v1468 = vadd.f32 0.0, %v1467
        %v1469 = vpop.f32.mrb[0].mxu0
        %v1470 = vadd.f32 0.0, %v1469
        %v1471 = vpop.f32.mrb[0].mxu0
        %v1472 = vadd.f32 0.0, %v1471
        %1473 = vmatprep.mubr.bf16.mxu0 %v314
        %1474 = vmatmul.mubr.bf16.gmra.mrb[0].mxu0 %v313
        %v1475 = vpop.f32.mrb[0].mxu0
        %v1476 = vadd.f32 0.0, %v1475
        %v1477 = vpop.f32.mrb[0].mxu0
        %v1478 = vadd.f32 0.0, %v1477
        %v1479 = vpop.f32.mrb[0].mxu0
        %v1480 = vadd.f32 0.0, %v1479
        %v1481 = vpop.f32.mrb[0].mxu0
        %v1482 = vadd.f32 0.0, %v1481
        %1483 = vmatprep.mubr.bf16.mxu0 %v317
        %1484 = vmatmul.mubr.bf16.gmra.mrb[0].mxu0 %v316
        %v1485 = vpop.f32.mrb[0].mxu0
        %v1486 = vadd.f32 0.0, %v1485
        %v1487 = vpop.f32.mrb[0].mxu0
        %v1488 = vadd.f32 0.0, %v1487
        %v1489 = vpop.f32.mrb[0].mxu0
        %v1490 = vadd.f32 0.0, %v1489
        %v1491 = vpop.f32.mrb[0].mxu0
        %v1492 = vadd.f32 0.0, %v1491
        %1493 = vmatprep.mubr.bf16.mxu0 %v320
        %1494 = vmatmul.mubr.bf16.gmra.mrb[0].mxu0 %v319
        %v1495 = vpop.f32.mrb[0].mxu0
        %v1496 = vadd.f32 0.0, %v1495
        %v1497 = vpop.f32.mrb[0].mxu0
        %v1498 = vadd.f32 0.0, %v1497
        %v1499 = vpop.f32.mrb[0].mxu0
        %v1500 = vadd.f32 0.0, %v1499
        %v1501 = vpop.f32.mrb[0].mxu0
        %v1502 = vadd.f32 0.0, %v1501
        %1503 = vmatprep.mubr.bf16.mxu0 %v323
        %1504 = vmatmul.mubr.bf16.gmra.mrb[0].mxu0 %v322
        %v1505 = vpop.f32.mrb[0].mxu0
        %v1506 = vadd.f32 0.0, %v1505
        %v1507 = vpop.f32.mrb[0].mxu0
        %v1508 = vadd.f32 0.0, %v1507
        %v1509 = vpop.f32.mrb[0].mxu0
        %v1510 = vadd.f32 0.0, %v1509
        %v1511 = vpop.f32.mrb[0].mxu0
        %v1512 = vadd.f32 0.0, %v1511
        %1513 = vmatprep.mubr.bf16.mxu0 %v326
        %1514 = vmatmul.mubr.bf16.gmra.mrb[0].mxu0 %v325
        %v1515 = vpop.f32.mrb[0].mxu0
        %v1516 = vadd.f32 0.0, %v1515
        %v1517 = vpop.f32.mrb[0].mxu0
        %v1518 = vadd.f32 0.0, %v1517
        %v1519 = vpop.f32.mrb[0].mxu0
        %v1520 = vadd.f32 0.0, %v1519
        %v1521 = vpop.f32.mrb[0].mxu0
        %v1522 = vadd.f32 0.0, %v1521
        %1523 = vmatprep.mubr.bf16.mxu0 %v329
        %1524 = vmatmul.mubr.bf16.gmra.mrb[0].mxu0 %v328
        %v1525 = vpop.f32.mrb[0].mxu0
        %v1526 = vadd.f32 0.0, %v1525
        %v1527 = vpop.f32.mrb[0].mxu0
        %v1528 = vadd.f32 0.0, %v1527
        %v1529 = vpop.f32.mrb[0].mxu0
        %v1530 = vadd.f32 0.0, %v1529
        %v1531 = vpop.f32.mrb[0].mxu0
        %v1532 = vadd.f32 0.0, %v1531
        %1533 = vdwg.mxu0
        %1534 = vmatprep.subr.bf16.mxu0 %v910
        %1535 = vmatpush1.bf16.msra.mxu0 %v909
        %1536 = vmatprep.subr.bf16.mxu0 %v919
        %1537 = vmatpush1.bf16.msra.mxu0 %v918
        %1538 = vmatprep.subr.bf16.mxu0 %v928
        %1539 = vmatpush1.bf16.msra.mxu0 %v927
        %1540 = vmatprep.subr.bf16.mxu0 %v937
        %1541 = vmatpush1.bf16.msra.mxu0 %v936
        %1542 = vmatprep.subr.bf16.mxu0 %v946
        %1543 = vmatpush1.bf16.msra.mxu0 %v945
        %1544 = vmatprep.subr.bf16.mxu0 %v955
        %1545 = vmatpush1.bf16.msra.mxu0 %v954
        %1546 = vmatprep.subr.bf16.mxu0 %v964
        %1547 = vmatpush1.bf16.msra.mxu0 %v963
        %1548 = vmatprep.subr.bf16.mxu0 %v973
        %1549 = vmatpush1.bf16.msra.mxu0 %v972
        %1550 = vmatprep.subr.bf16.mxu0 0
        %1551 = vmatpush1.bf16.msra.mxu0 0
        %1552 = vmatprep.subr.bf16.mxu0 0
        %1553 = vmatpush1.bf16.msra.mxu0 0
        %1554 = vmatprep.subr.bf16.mxu0 0
        %1555 = vmatpush1.bf16.msra.mxu0 0
        %1556 = vmatprep.subr.bf16.mxu0 0
        %1557 = vmatpush1.bf16.msra.mxu0 0
        %1558 = vmatprep.subr.bf16.mxu0 0
        %1559 = vmatpush1.bf16.msra.mxu0 0
        %1560 = vmatprep.subr.bf16.mxu0 0
        %1561 = vmatpush1.bf16.msra.mxu0 0
        %1562 = vmatprep.subr.bf16.mxu0 0
        %1563 = vmatpush1.bf16.msra.mxu0 0
        %1564 = vmatprep.subr.bf16.mxu0 0
        %1565 = vmatpush1.bf16.msra.mxu0 0
        %1566 = vmatprep.mubr.bf16.mxu0 0
        %1567 = vmatmul.mubr.bf16.gmra.mrb[0].mxu0 %v309
        %v1568 = vpop.f32.mrb[0].mxu0
        %v1569 = vadd.f32 %v1456, %v1568
        %v1570 = vpop.f32.mrb[0].mxu0
        %v1571 = vadd.f32 %v1458, %v1570
        %v1572 = vpop.f32.mrb[0].mxu0
        %v1573 = vadd.f32 %v1460, %v1572
        %v1574 = vpop.f32.mrb[0].mxu0
        %v1575 = vadd.f32 %v1462, %v1574
        %1576 = vmatprep.mubr.bf16.mxu0 0
        %1577 = vmatmul.mubr.bf16.gmra.mrb[0].mxu0 %v312
        %v1578 = vpop.f32.mrb[0].mxu0
        %v1579 = vadd.f32 %v1466, %v1578
        %v1580 = vpop.f32.mrb[0].mxu0
        %v1581 = vadd.f32 %v1468, %v1580
        %v1582 = vpop.f32.mrb[0].mxu0
        %v1583 = vadd.f32 %v1470, %v1582
        %v1584 = vpop.f32.mrb[0].mxu0
        %v1585 = vadd.f32 %v1472, %v1584
        %1586 = vmatprep.mubr.bf16.mxu0 0
        %1587 = vmatmul.mubr.bf16.gmra.mrb[0].mxu0 %v315
        %v1588 = vpop.f32.mrb[0].mxu0
        %v1589 = vadd.f32 %v1476, %v1588
        %v1590 = vpop.f32.mrb[0].mxu0
        %v1591 = vadd.f32 %v1478, %v1590
        %v1592 = vpop.f32.mrb[0].mxu0
        %v1593 = vadd.f32 %v1480, %v1592
        %v1594 = vpop.f32.mrb[0].mxu0
        %v1595 = vadd.f32 %v1482, %v1594
        %1596 = vmatprep.mubr.bf16.mxu0 0
        %1597 = vmatmul.mubr.bf16.gmra.mrb[0].mxu0 %v318
        %v1598 = vpop.f32.mrb[0].mxu0
        %v1599 = vadd.f32 %v1486, %v1598
        %v1600 = vpop.f32.mrb[0].mxu0
        %v1601 = vadd.f32 %v1488, %v1600
        %v1602 = vpop.f32.mrb[0].mxu0
        %v1603 = vadd.f32 %v1490, %v1602
        %v1604 = vpop.f32.mrb[0].mxu0
        %v1605 = vadd.f32 %v1492, %v1604
        %1606 = vmatprep.mubr.bf16.mxu0 0
        %1607 = vmatmul.mubr.bf16.gmra.mrb[0].mxu0 %v321
        %v1608 = vpop.f32.mrb[0].mxu0
        %v1609 = vadd.f32 %v1496, %v1608
        %v1610 = vpop.f32.mrb[0].mxu0
        %v1611 = vadd.f32 %v1498, %v1610
        %v1612 = vpop.f32.mrb[0].mxu0
        %v1613 = vadd.f32 %v1500, %v1612
        %v1614 = vpop.f32.mrb[0].mxu0
        %v1615 = vadd.f32 %v1502, %v1614
        %1616 = vmatprep.mubr.bf16.mxu0 0
        %1617 = vmatmul.mubr.bf16.gmra.mrb[0].mxu0 %v324
        %v1618 = vpop.f32.mrb[0].mxu0
        %v1619 = vadd.f32 %v1506, %v1618
        %v1620 = vpop.f32.mrb[0].mxu0
        %v1621 = vadd.f32 %v1508, %v1620
        %v1622 = vpop.f32.mrb[0].mxu0
        %v1623 = vadd.f32 %v1510, %v1622
        %v1624 = vpop.f32.mrb[0].mxu0
        %v1625 = vadd.f32 %v1512, %v1624
        %1626 = vmatprep.mubr.bf16.mxu0 0
        %1627 = vmatmul.mubr.bf16.gmra.mrb[0].mxu0 %v327
        %v1628 = vpop.f32.mrb[0].mxu0
        %v1629 = vadd.f32 %v1516, %v1628
        %v1630 = vpop.f32.mrb[0].mxu0
        %v1631 = vadd.f32 %v1518, %v1630
        %v1632 = vpop.f32.mrb[0].mxu0
        %v1633 = vadd.f32 %v1520, %v1632
        %v1634 = vpop.f32.mrb[0].mxu0
        %v1635 = vadd.f32 %v1522, %v1634
        %1636 = vmatprep.mubr.bf16.mxu0 0
        %1637 = vmatmul.mubr.bf16.gmra.mrb[0].mxu0 %v330
        %v1638 = vpop.f32.mrb[0].mxu0
        %v1639 = vadd.f32 %v1526, %v1638
        %v1640 = vpop.f32.mrb[0].mxu0
        %v1641 = vadd.f32 %v1528, %v1640
        %v1642 = vpop.f32.mrb[0].mxu0
        %v1643 = vadd.f32 %v1530, %v1642
        %v1644 = vpop.f32.mrb[0].mxu0
        %v1645 = vadd.f32 %v1532, %v1644
        %1646 = vdwg.mxu0
        %1647 = vmatprep.subr.bf16.mxu0 %v768
        %1648 = vmatpush1.bf16.msra.mxu0 %v767
        %1649 = vmatprep.subr.bf16.mxu0 %v777
        %1650 = vmatpush1.bf16.msra.mxu0 %v776
        %1651 = vmatprep.subr.bf16.mxu0 %v786
        %1652 = vmatpush1.bf16.msra.mxu0 %v785
        %1653 = vmatprep.subr.bf16.mxu0 %v795
        %1654 = vmatpush1.bf16.msra.mxu0 %v794
        %1655 = vmatprep.subr.bf16.mxu0 %v804
        %1656 = vmatpush1.bf16.msra.mxu0 %v803
        %1657 = vmatprep.subr.bf16.mxu0 %v813
        %1658 = vmatpush1.bf16.msra.mxu0 %v812
        %1659 = vmatprep.subr.bf16.mxu0 %v822
        %1660 = vmatpush1.bf16.msra.mxu0 %v821
        %1661 = vmatprep.subr.bf16.mxu0 %v831
        %1662 = vmatpush1.bf16.msra.mxu0 %v830
        %1663 = vmatprep.subr.bf16.mxu0 %v840
        %1664 = vmatpush1.bf16.msra.mxu0 %v839
        %1665 = vmatprep.subr.bf16.mxu0 %v849
        %1666 = vmatpush1.bf16.msra.mxu0 %v848
        %1667 = vmatprep.subr.bf16.mxu0 %v858
        %1668 = vmatpush1.bf16.msra.mxu0 %v857
        %1669 = vmatprep.subr.bf16.mxu0 %v867
        %1670 = vmatpush1.bf16.msra.mxu0 %v866
        %1671 = vmatprep.subr.bf16.mxu0 %v876
        %1672 = vmatpush1.bf16.msra.mxu0 %v875
        %1673 = vmatprep.subr.bf16.mxu0 %v885
        %1674 = vmatpush1.bf16.msra.mxu0 %v884
        %1675 = vmatprep.subr.bf16.mxu0 %v894
        %1676 = vmatpush1.bf16.msra.mxu0 %v893
        %1677 = vmatprep.subr.bf16.mxu0 %v903
        %1678 = vmatpush1.bf16.msra.mxu0 %v902
        %1679 = vmatprep.mubr.bf16.mxu0 %v308
        %1680 = vmatmul.mubr.bf16.gmra.mrb[0].mxu0 %v307
        %v1681 = vpop.f32.mrb[0].mxu0
        %v1682 = vadd.f32 0.0, %v1681
        %v1683 = vpop.f32.mrb[0].mxu0
        %v1684 = vadd.f32 0.0, %v1683
        %v1685 = vpop.f32.mrb[0].mxu0
        %v1686 = vadd.f32 0.0, %v1685
        %v1687 = vpop.f32.mrb[0].mxu0
        %v1688 = vadd.f32 0.0, %v1687
        %1689 = vmatprep.mubr.bf16.mxu0 %v311
        %1690 = vmatmul.mubr.bf16.gmra.mrb[0].mxu0 %v310
        %v1691 = vpop.f32.mrb[0].mxu0
        %v1692 = vadd.f32 0.0, %v1691
        %v1693 = vpop.f32.mrb[0].mxu0
        %v1694 = vadd.f32 0.0, %v1693
        %v1695 = vpop.f32.mrb[0].mxu0
        %v1696 = vadd.f32 0.0, %v1695
        %v1697 = vpop.f32.mrb[0].mxu0
        %v1698 = vadd.f32 0.0, %v1697
        %1699 = vmatprep.mubr.bf16.mxu0 %v314
        %1700 = vmatmul.mubr.bf16.gmra.mrb[0].mxu0 %v313
        %v1701 = vpop.f32.mrb[0].mxu0
        %v1702 = vadd.f32 0.0, %v1701
        %v1703 = vpop.f32.mrb[0].mxu0
        %v1704 = vadd.f32 0.0, %v1703
        %v1705 = vpop.f32.mrb[0].mxu0
        %v1706 = vadd.f32 0.0, %v1705
        %v1707 = vpop.f32.mrb[0].mxu0
        %v1708 = vadd.f32 0.0, %v1707
        %1709 = vmatprep.mubr.bf16.mxu0 %v317
        %1710 = vmatmul.mubr.bf16.gmra.mrb[0].mxu0 %v316
        %v1711 = vpop.f32.mrb[0].mxu0
        %v1712 = vadd.f32 0.0, %v1711
        %v1713 = vpop.f32.mrb[0].mxu0
        %v1714 = vadd.f32 0.0, %v1713
        %v1715 = vpop.f32.mrb[0].mxu0
        %v1716 = vadd.f32 0.0, %v1715
        %v1717 = vpop.f32.mrb[0].mxu0
        %v1718 = vadd.f32 0.0, %v1717
        %1719 = vmatprep.mubr.bf16.mxu0 %v320
        %1720 = vmatmul.mubr.bf16.gmra.mrb[0].mxu0 %v319
        %v1721 = vpop.f32.mrb[0].mxu0
        %v1722 = vadd.f32 0.0, %v1721
        %v1723 = vpop.f32.mrb[0].mxu0
        %v1724 = vadd.f32 0.0, %v1723
        %v1725 = vpop.f32.mrb[0].mxu0
        %v1726 = vadd.f32 0.0, %v1725
        %v1727 = vpop.f32.mrb[0].mxu0
        %v1728 = vadd.f32 0.0, %v1727
        %1729 = vmatprep.mubr.bf16.mxu0 %v323
        %1730 = vmatmul.mubr.bf16.gmra.mrb[0].mxu0 %v322
        %v1731 = vpop.f32.mrb[0].mxu0
        %v1732 = vadd.f32 0.0, %v1731
        %v1733 = vpop.f32.mrb[0].mxu0
        %v1734 = vadd.f32 0.0, %v1733
        %v1735 = vpop.f32.mrb[0].mxu0
        %v1736 = vadd.f32 0.0, %v1735
        %v1737 = vpop.f32.mrb[0].mxu0
        %v1738 = vadd.f32 0.0, %v1737
        %1739 = vmatprep.mubr.bf16.mxu0 %v326
        %1740 = vmatmul.mubr.bf16.gmra.mrb[0].mxu0 %v325
        %v1741 = vpop.f32.mrb[0].mxu0
        %v1742 = vadd.f32 0.0, %v1741
        %v1743 = vpop.f32.mrb[0].mxu0
        %v1744 = vadd.f32 0.0, %v1743
        %v1745 = vpop.f32.mrb[0].mxu0
        %v1746 = vadd.f32 0.0, %v1745
        %v1747 = vpop.f32.mrb[0].mxu0
        %v1748 = vadd.f32 0.0, %v1747
        %1749 = vmatprep.mubr.bf16.mxu0 %v329
        %1750 = vmatmul.mubr.bf16.gmra.mrb[0].mxu0 %v328
        %v1751 = vpop.f32.mrb[0].mxu0
        %v1752 = vadd.f32 0.0, %v1751
        %v1753 = vpop.f32.mrb[0].mxu0
        %v1754 = vadd.f32 0.0, %v1753
        %v1755 = vpop.f32.mrb[0].mxu0
        %v1756 = vadd.f32 0.0, %v1755
        %v1757 = vpop.f32.mrb[0].mxu0
        %v1758 = vadd.f32 0.0, %v1757
        %1759 = vdwg.mxu0
        %1760 = vmatprep.subr.bf16.mxu0 %v912
        %1761 = vmatpush1.bf16.msra.mxu0 %v911
        %1762 = vmatprep.subr.bf16.mxu0 %v921
        %1763 = vmatpush1.bf16.msra.mxu0 %v920
        %1764 = vmatprep.subr.bf16.mxu0 %v930
        %1765 = vmatpush1.bf16.msra.mxu0 %v929
        %1766 = vmatprep.subr.bf16.mxu0 %v939
        %1767 = vmatpush1.bf16.msra.mxu0 %v938
        %1768 = vmatprep.subr.bf16.mxu0 %v948
        %1769 = vmatpush1.bf16.msra.mxu0 %v947
        %1770 = vmatprep.subr.bf16.mxu0 %v957
        %1771 = vmatpush1.bf16.msra.mxu0 %v956
        %1772 = vmatprep.subr.bf16.mxu0 %v966
        %1773 = vmatpush1.bf16.msra.mxu0 %v965
        %1774 = vmatprep.subr.bf16.mxu0 %v975
        %1775 = vmatpush1.bf16.msra.mxu0 %v974
        %1776 = vmatprep.subr.bf16.mxu0 0
        %1777 = vmatpush1.bf16.msra.mxu0 0
        %1778 = vmatprep.subr.bf16.mxu0 0
        %1779 = vmatpush1.bf16.msra.mxu0 0
        %1780 = vmatprep.subr.bf16.mxu0 0
        %1781 = vmatpush1.bf16.msra.mxu0 0
        %1782 = vmatprep.subr.bf16.mxu0 0
        %1783 = vmatpush1.bf16.msra.mxu0 0
        %1784 = vmatprep.subr.bf16.mxu0 0
        %1785 = vmatpush1.bf16.msra.mxu0 0
        %1786 = vmatprep.subr.bf16.mxu0 0
        %1787 = vmatpush1.bf16.msra.mxu0 0
        %1788 = vmatprep.subr.bf16.mxu0 0
        %1789 = vmatpush1.bf16.msra.mxu0 0
        %1790 = vmatprep.subr.bf16.mxu0 0
        %1791 = vmatpush1.bf16.msra.mxu0 0
        %1792 = vmatprep.mubr.bf16.mxu0 0
        %1793 = vmatmul.mubr.bf16.gmra.mrb[0].mxu0 %v309
        %v1794 = vpop.f32.mrb[0].mxu0
        %v1795 = vadd.f32 %v1682, %v1794
        %v1796 = vpop.f32.mrb[0].mxu0
        %v1797 = vadd.f32 %v1684, %v1796
        %v1798 = vpop.f32.mrb[0].mxu0
        %v1799 = vadd.f32 %v1686, %v1798
        %v1800 = vpop.f32.mrb[0].mxu0
        %v1801 = vadd.f32 %v1688, %v1800
        %1802 = vmatprep.mubr.bf16.mxu0 0
        %1803 = vmatmul.mubr.bf16.gmra.mrb[0].mxu0 %v312
        %v1804 = vpop.f32.mrb[0].mxu0
        %v1805 = vadd.f32 %v1692, %v1804
        %v1806 = vpop.f32.mrb[0].mxu0
        %v1807 = vadd.f32 %v1694, %v1806
        %v1808 = vpop.f32.mrb[0].mxu0
        %v1809 = vadd.f32 %v1696, %v1808
        %v1810 = vpop.f32.mrb[0].mxu0
        %v1811 = vadd.f32 %v1698, %v1810
        %1812 = vmatprep.mubr.bf16.mxu0 0
        %1813 = vmatmul.mubr.bf16.gmra.mrb[0].mxu0 %v315
        %v1814 = vpop.f32.mrb[0].mxu0
        %v1815 = vadd.f32 %v1702, %v1814
        %v1816 = vpop.f32.mrb[0].mxu0
        %v1817 = vadd.f32 %v1704, %v1816
        %v1818 = vpop.f32.mrb[0].mxu0
        %v1819 = vadd.f32 %v1706, %v1818
        %v1820 = vpop.f32.mrb[0].mxu0
        %v1821 = vadd.f32 %v1708, %v1820
        %1822 = vmatprep.mubr.bf16.mxu0 0
        %1823 = vmatmul.mubr.bf16.gmra.mrb[0].mxu0 %v318
        %v1824 = vpop.f32.mrb[0].mxu0
        %v1825 = vadd.f32 %v1712, %v1824
        %v1826 = vpop.f32.mrb[0].mxu0
        %v1827 = vadd.f32 %v1714, %v1826
        %v1828 = vpop.f32.mrb[0].mxu0
        %v1829 = vadd.f32 %v1716, %v1828
        %v1830 = vpop.f32.mrb[0].mxu0
        %v1831 = vadd.f32 %v1718, %v1830
        %1832 = vmatprep.mubr.bf16.mxu0 0
        %1833 = vmatmul.mubr.bf16.gmra.mrb[0].mxu0 %v321
        %v1834 = vpop.f32.mrb[0].mxu0
        %v1835 = vadd.f32 %v1722, %v1834
        %v1836 = vpop.f32.mrb[0].mxu0
        %v1837 = vadd.f32 %v1724, %v1836
        %v1838 = vpop.f32.mrb[0].mxu0
        %v1839 = vadd.f32 %v1726, %v1838
        %v1840 = vpop.f32.mrb[0].mxu0
        %v1841 = vadd.f32 %v1728, %v1840
        %1842 = vmatprep.mubr.bf16.mxu0 0
        %1843 = vmatmul.mubr.bf16.gmra.mrb[0].mxu0 %v324
        %v1844 = vpop.f32.mrb[0].mxu0
        %v1845 = vadd.f32 %v1732, %v1844
        %v1846 = vpop.f32.mrb[0].mxu0
        %v1847 = vadd.f32 %v1734, %v1846
        %v1848 = vpop.f32.mrb[0].mxu0
        %v1849 = vadd.f32 %v1736, %v1848
        %v1850 = vpop.f32.mrb[0].mxu0
        %v1851 = vadd.f32 %v1738, %v1850
        %1852 = vmatprep.mubr.bf16.mxu0 0
        %1853 = vmatmul.mubr.bf16.gmra.mrb[0].mxu0 %v327
        %v1854 = vpop.f32.mrb[0].mxu0
        %v1855 = vadd.f32 %v1742, %v1854
        %v1856 = vpop.f32.mrb[0].mxu0
        %v1857 = vadd.f32 %v1744, %v1856
        %v1858 = vpop.f32.mrb[0].mxu0
        %v1859 = vadd.f32 %v1746, %v1858
        %v1860 = vpop.f32.mrb[0].mxu0
        %v1861 = vadd.f32 %v1748, %v1860
        %1862 = vmatprep.mubr.bf16.mxu0 0
        %1863 = vmatmul.mubr.bf16.gmra.mrb[0].mxu0 %v330
        %v1864 = vpop.f32.mrb[0].mxu0
        %v1865 = vadd.f32 %v1752, %v1864
        %v1866 = vpop.f32.mrb[0].mxu0
        %v1867 = vadd.f32 %v1754, %v1866
        %v1868 = vpop.f32.mrb[0].mxu0
        %v1869 = vadd.f32 %v1756, %v1868
        %v1870 = vpop.f32.mrb[0].mxu0
        %v1871 = vadd.f32 %v1758, %v1870
        %1872 = vdwg.mxu0
        %1873 = vmatprep.subr.bf16.mxu0 %v770
        %1874 = vmatpush1.bf16.msra.mxu0 %v769
        %1875 = vmatprep.subr.bf16.mxu0 %v779
        %1876 = vmatpush1.bf16.msra.mxu0 %v778
        %1877 = vmatprep.subr.bf16.mxu0 %v788
        %1878 = vmatpush1.bf16.msra.mxu0 %v787
        %1879 = vmatprep.subr.bf16.mxu0 %v797
        %1880 = vmatpush1.bf16.msra.mxu0 %v796
        %1881 = vmatprep.subr.bf16.mxu0 %v806
        %1882 = vmatpush1.bf16.msra.mxu0 %v805
        %1883 = vmatprep.subr.bf16.mxu0 %v815
        %1884 = vmatpush1.bf16.msra.mxu0 %v814
        %1885 = vmatprep.subr.bf16.mxu0 %v824
        %1886 = vmatpush1.bf16.msra.mxu0 %v823
        %1887 = vmatprep.subr.bf16.mxu0 %v833
        %1888 = vmatpush1.bf16.msra.mxu0 %v832
        %1889 = vmatprep.subr.bf16.mxu0 %v842
        %1890 = vmatpush1.bf16.msra.mxu0 %v841
        %1891 = vmatprep.subr.bf16.mxu0 %v851
        %1892 = vmatpush1.bf16.msra.mxu0 %v850
        %1893 = vmatprep.subr.bf16.mxu0 %v860
        %1894 = vmatpush1.bf16.msra.mxu0 %v859
        %1895 = vmatprep.subr.bf16.mxu0 %v869
        %1896 = vmatpush1.bf16.msra.mxu0 %v868
        %1897 = vmatprep.subr.bf16.mxu0 %v878
        %1898 = vmatpush1.bf16.msra.mxu0 %v877
        %1899 = vmatprep.subr.bf16.mxu0 %v887
        %1900 = vmatpush1.bf16.msra.mxu0 %v886
        %1901 = vmatprep.subr.bf16.mxu0 %v896
        %1902 = vmatpush1.bf16.msra.mxu0 %v895
        %1903 = vmatprep.subr.bf16.mxu0 %v905
        %1904 = vmatpush1.bf16.msra.mxu0 %v904
        %1905 = vmatprep.mubr.bf16.mxu0 %v308
        %1906 = vmatmul.mubr.bf16.gmra.mrb[0].mxu0 %v307
        %v1907 = vpop.f32.mrb[0].mxu0
        %v1908 = vadd.f32 0.0, %v1907
        %v1909 = vpop.f32.mrb[0].mxu0
        %v1910 = vadd.f32 0.0, %v1909
        %v1911 = vpop.f32.mrb[0].mxu0
        %v1912 = vadd.f32 0.0, %v1911
        %v1913 = vpop.f32.mrb[0].mxu0
        %v1914 = vadd.f32 0.0, %v1913
        %1915 = vmatprep.mubr.bf16.mxu0 %v311
        %1916 = vmatmul.mubr.bf16.gmra.mrb[0].mxu0 %v310
        %v1917 = vpop.f32.mrb[0].mxu0
        %v1918 = vadd.f32 0.0, %v1917
        %v1919 = vpop.f32.mrb[0].mxu0
        %v1920 = vadd.f32 0.0, %v1919
        %v1921 = vpop.f32.mrb[0].mxu0
        %v1922 = vadd.f32 0.0, %v1921
        %v1923 = vpop.f32.mrb[0].mxu0
        %v1924 = vadd.f32 0.0, %v1923
        %1925 = vmatprep.mubr.bf16.mxu0 %v314
        %1926 = vmatmul.mubr.bf16.gmra.mrb[0].mxu0 %v313
        %v1927 = vpop.f32.mrb[0].mxu0
        %v1928 = vadd.f32 0.0, %v1927
        %v1929 = vpop.f32.mrb[0].mxu0
        %v1930 = vadd.f32 0.0, %v1929
        %v1931 = vpop.f32.mrb[0].mxu0
        %v1932 = vadd.f32 0.0, %v1931
        %v1933 = vpop.f32.mrb[0].mxu0
        %v1934 = vadd.f32 0.0, %v1933
        %1935 = vmatprep.mubr.bf16.mxu0 %v317
        %1936 = vmatmul.mubr.bf16.gmra.mrb[0].mxu0 %v316
        %v1937 = vpop.f32.mrb[0].mxu0
        %v1938 = vadd.f32 0.0, %v1937
        %v1939 = vpop.f32.mrb[0].mxu0
        %v1940 = vadd.f32 0.0, %v1939
        %v1941 = vpop.f32.mrb[0].mxu0
        %v1942 = vadd.f32 0.0, %v1941
        %v1943 = vpop.f32.mrb[0].mxu0
        %v1944 = vadd.f32 0.0, %v1943
        %1945 = vmatprep.mubr.bf16.mxu0 %v320
        %1946 = vmatmul.mubr.bf16.gmra.mrb[0].mxu0 %v319
        %v1947 = vpop.f32.mrb[0].mxu0
        %v1948 = vadd.f32 0.0, %v1947
        %v1949 = vpop.f32.mrb[0].mxu0
        %v1950 = vadd.f32 0.0, %v1949
        %v1951 = vpop.f32.mrb[0].mxu0
        %v1952 = vadd.f32 0.0, %v1951
        %v1953 = vpop.f32.mrb[0].mxu0
        %v1954 = vadd.f32 0.0, %v1953
        %1955 = vmatprep.mubr.bf16.mxu0 %v323
        %1956 = vmatmul.mubr.bf16.gmra.mrb[0].mxu0 %v322
        %v1957 = vpop.f32.mrb[0].mxu0
        %v1958 = vadd.f32 0.0, %v1957
        %v1959 = vpop.f32.mrb[0].mxu0
        %v1960 = vadd.f32 0.0, %v1959
        %v1961 = vpop.f32.mrb[0].mxu0
        %v1962 = vadd.f32 0.0, %v1961
        %v1963 = vpop.f32.mrb[0].mxu0
        %v1964 = vadd.f32 0.0, %v1963
        %1965 = vmatprep.mubr.bf16.mxu0 %v326
        %1966 = vmatmul.mubr.bf16.gmra.mrb[0].mxu0 %v325
        %v1967 = vpop.f32.mrb[0].mxu0
        %v1968 = vadd.f32 0.0, %v1967
        %v1969 = vpop.f32.mrb[0].mxu0
        %v1970 = vadd.f32 0.0, %v1969
        %v1971 = vpop.f32.mrb[0].mxu0
        %v1972 = vadd.f32 0.0, %v1971
        %v1973 = vpop.f32.mrb[0].mxu0
        %v1974 = vadd.f32 0.0, %v1973
        %1975 = vmatprep.mubr.bf16.mxu0 %v329
        %1976 = vmatmul.mubr.bf16.gmra.mrb[0].mxu0 %v328
        %v1977 = vpop.f32.mrb[0].mxu0
        %v1978 = vadd.f32 0.0, %v1977
        %v1979 = vpop.f32.mrb[0].mxu0
        %v1980 = vadd.f32 0.0, %v1979
        %v1981 = vpop.f32.mrb[0].mxu0
        %v1982 = vadd.f32 0.0, %v1981
        %v1983 = vpop.f32.mrb[0].mxu0
        %v1984 = vadd.f32 0.0, %v1983
        %1985 = vdwg.mxu0
        %1986 = vmatprep.subr.bf16.mxu0 %v914
        %1987 = vmatpush1.bf16.msra.mxu0 %v913
        %1988 = vmatprep.subr.bf16.mxu0 %v923
        %1989 = vmatpush1.bf16.msra.mxu0 %v922
        %1990 = vmatprep.subr.bf16.mxu0 %v932
        %1991 = vmatpush1.bf16.msra.mxu0 %v931
        %1992 = vmatprep.subr.bf16.mxu0 %v941
        %1993 = vmatpush1.bf16.msra.mxu0 %v940
        %1994 = vmatprep.subr.bf16.mxu0 %v950
        %1995 = vmatpush1.bf16.msra.mxu0 %v949
        %1996 = vmatprep.subr.bf16.mxu0 %v959
        %1997 = vmatpush1.bf16.msra.mxu0 %v958
        %1998 = vmatprep.subr.bf16.mxu0 %v968
        %1999 = vmatpush1.bf16.msra.mxu0 %v967
        %2000 = vmatprep.subr.bf16.mxu0 %v977
        %2001 = vmatpush1.bf16.msra.mxu0 %v976
        %2002 = vmatprep.subr.bf16.mxu0 0
        %2003 = vmatpush1.bf16.msra.mxu0 0
        %2004 = vmatprep.subr.bf16.mxu0 0
        %2005 = vmatpush1.bf16.msra.mxu0 0
        %2006 = vmatprep.subr.bf16.mxu0 0
        %2007 = vmatpush1.bf16.msra.mxu0 0
        %2008 = vmatprep.subr.bf16.mxu0 0
        %2009 = vmatpush1.bf16.msra.mxu0 0
        %2010 = vmatprep.subr.bf16.mxu0 0
        %2011 = vmatpush1.bf16.msra.mxu0 0
        %2012 = vmatprep.subr.bf16.mxu0 0
        %2013 = vmatpush1.bf16.msra.mxu0 0
        %2014 = vmatprep.subr.bf16.mxu0 0
        %2015 = vmatpush1.bf16.msra.mxu0 0
        %2016 = vmatprep.subr.bf16.mxu0 0
        %2017 = vmatpush1.bf16.msra.mxu0 0
        %2018 = vmatprep.mubr.bf16.mxu0 0
        %2019 = vmatmul.mubr.bf16.gmra.mrb[0].mxu0 %v309
        %v2020 = vpop.f32.mrb[0].mxu0
        %v2021 = vadd.f32 %v1908, %v2020
        %v2022 = vpop.f32.mrb[0].mxu0
        %v2023 = vadd.f32 %v1910, %v2022
        %v2024 = vpop.f32.mrb[0].mxu0
        %v2025 = vadd.f32 %v1912, %v2024
        %v2026 = vpop.f32.mrb[0].mxu0
        %v2027 = vadd.f32 %v1914, %v2026
        %2028 = vmatprep.mubr.bf16.mxu0 0
        %2029 = vmatmul.mubr.bf16.gmra.mrb[0].mxu0 %v312
        %v2030 = vpop.f32.mrb[0].mxu0
        %v2031 = vadd.f32 %v1918, %v2030
        %v2032 = vpop.f32.mrb[0].mxu0
        %v2033 = vadd.f32 %v1920, %v2032
        %v2034 = vpop.f32.mrb[0].mxu0
        %v2035 = vadd.f32 %v1922, %v2034
        %v2036 = vpop.f32.mrb[0].mxu0
        %v2037 = vadd.f32 %v1924, %v2036
        %2038 = vmatprep.mubr.bf16.mxu0 0
        %2039 = vmatmul.mubr.bf16.gmra.mrb[0].mxu0 %v315
        %v2040 = vpop.f32.mrb[0].mxu0
        %v2041 = vadd.f32 %v1928, %v2040
        %v2042 = vpop.f32.mrb[0].mxu0
        %v2043 = vadd.f32 %v1930, %v2042
        %v2044 = vpop.f32.mrb[0].mxu0
        %v2045 = vadd.f32 %v1932, %v2044
        %v2046 = vpop.f32.mrb[0].mxu0
        %v2047 = vadd.f32 %v1934, %v2046
        %2048 = vmatprep.mubr.bf16.mxu0 0
        %2049 = vmatmul.mubr.bf16.gmra.mrb[0].mxu0 %v318
        %v2050 = vpop.f32.mrb[0].mxu0
        %v2051 = vadd.f32 %v1938, %v2050
        %v2052 = vpop.f32.mrb[0].mxu0
        %v2053 = vadd.f32 %v1940, %v2052
        %v2054 = vpop.f32.mrb[0].mxu0
        %v2055 = vadd.f32 %v1942, %v2054
        %v2056 = vpop.f32.mrb[0].mxu0
        %v2057 = vadd.f32 %v1944, %v2056
        %2058 = vmatprep.mubr.bf16.mxu0 0
        %2059 = vmatmul.mubr.bf16.gmra.mrb[0].mxu0 %v321
        %v2060 = vpop.f32.mrb[0].mxu0
        %v2061 = vadd.f32 %v1948, %v2060
        %v2062 = vpop.f32.mrb[0].mxu0
        %v2063 = vadd.f32 %v1950, %v2062
        %v2064 = vpop.f32.mrb[0].mxu0
        %v2065 = vadd.f32 %v1952, %v2064
        %v2066 = vpop.f32.mrb[0].mxu0
        %v2067 = vadd.f32 %v1954, %v2066
        %2068 = vmatprep.mubr.bf16.mxu0 0
        %2069 = vmatmul.mubr.bf16.gmra.mrb[0].mxu0 %v324
        %v2070 = vpop.f32.mrb[0].mxu0
        %v2071 = vadd.f32 %v1958, %v2070
        %v2072 = vpop.f32.mrb[0].mxu0
        %v2073 = vadd.f32 %v1960, %v2072
        %v2074 = vpop.f32.mrb[0].mxu0
        %v2075 = vadd.f32 %v1962, %v2074
        %v2076 = vpop.f32.mrb[0].mxu0
        %v2077 = vadd.f32 %v1964, %v2076
        %2078 = vmatprep.mubr.bf16.mxu0 0
        %2079 = vmatmul.mubr.bf16.gmra.mrb[0].mxu0 %v327
        %v2080 = vpop.f32.mrb[0].mxu0
        %v2081 = vadd.f32 %v1968, %v2080
        %v2082 = vpop.f32.mrb[0].mxu0
        %v2083 = vadd.f32 %v1970, %v2082
        %v2084 = vpop.f32.mrb[0].mxu0
        %v2085 = vadd.f32 %v1972, %v2084
        %v2086 = vpop.f32.mrb[0].mxu0
        %v2087 = vadd.f32 %v1974, %v2086
        %2088 = vmatprep.mubr.bf16.mxu0 0
        %2089 = vmatmul.mubr.bf16.gmra.mrb[0].mxu0 %v330
        %v2090 = vpop.f32.mrb[0].mxu0
        %v2091 = vadd.f32 %v1978, %v2090
        %v2092 = vpop.f32.mrb[0].mxu0
        %v2093 = vadd.f32 %v1980, %v2092
        %v2094 = vpop.f32.mrb[0].mxu0
        %v2095 = vadd.f32 %v1982, %v2094
        %v2096 = vpop.f32.mrb[0].mxu0
        %v2097 = vadd.f32 %v1984, %v2096
        %2098 = vdwg.mxu0
        %2099 = vmatprep.subr.bf16.mxu0 0
        %2100 = vmatpush1.bf16.msra.mxu0 %v771
        %2101 = vmatprep.subr.bf16.mxu0 0
        %2102 = vmatpush1.bf16.msra.mxu0 %v780
        %2103 = vmatprep.subr.bf16.mxu0 0
        %2104 = vmatpush1.bf16.msra.mxu0 %v789
        %2105 = vmatprep.subr.bf16.mxu0 0
        %2106 = vmatpush1.bf16.msra.mxu0 %v798
        %2107 = vmatprep.subr.bf16.mxu0 0
        %2108 = vmatpush1.bf16.msra.mxu0 %v807
        %2109 = vmatprep.subr.bf16.mxu0 0
        %2110 = vmatpush1.bf16.msra.mxu0 %v816
        %2111 = vmatprep.subr.bf16.mxu0 0
        %2112 = vmatpush1.bf16.msra.mxu0 %v825
        %2113 = vmatprep.subr.bf16.mxu0 0
        %2114 = vmatpush1.bf16.msra.mxu0 %v834
        %2115 = vmatprep.subr.bf16.mxu0 0
        %2116 = vmatpush1.bf16.msra.mxu0 %v843
        %2117 = vmatprep.subr.bf16.mxu0 0
        %2118 = vmatpush1.bf16.msra.mxu0 %v852
        %2119 = vmatprep.subr.bf16.mxu0 0
        %2120 = vmatpush1.bf16.msra.mxu0 %v861
        %2121 = vmatprep.subr.bf16.mxu0 0
        %2122 = vmatpush1.bf16.msra.mxu0 %v870
        %2123 = vmatprep.subr.bf16.mxu0 0
        %2124 = vmatpush1.bf16.msra.mxu0 %v879
        %2125 = vmatprep.subr.bf16.mxu0 0
        %2126 = vmatpush1.bf16.msra.mxu0 %v888
        %2127 = vmatprep.subr.bf16.mxu0 0
        %2128 = vmatpush1.bf16.msra.mxu0 %v897
        %2129 = vmatprep.subr.bf16.mxu0 0
        %2130 = vmatpush1.bf16.msra.mxu0 %v906
        %2131 = vmatprep.mubr.bf16.mxu0 %v308
        %2132 = vmatmul.mubr.bf16.gmra.mrb[0].mxu0 %v307
        %v2133 = vpop.f32.mrb[0].mxu0
        %v2134 = vadd.f32 0.0, %v2133
        %v2135 = vpop.f32.mrb[0].mxu0
        %v2136 = vpop.f32.mrb[0].mxu0
        %v2137 = vadd.f32 0.0, %v2136
        %v2138 = vpop.f32.mrb[0].mxu0
        %2139 = vmatprep.mubr.bf16.mxu0 %v311
        %2140 = vmatmul.mubr.bf16.gmra.mrb[0].mxu0 %v310
        %v2141 = vpop.f32.mrb[0].mxu0
        %v2142 = vadd.f32 0.0, %v2141
        %v2143 = vpop.f32.mrb[0].mxu0
        %v2144 = vpop.f32.mrb[0].mxu0
        %v2145 = vadd.f32 0.0, %v2144
        %v2146 = vpop.f32.mrb[0].mxu0
        %2147 = vmatprep.mubr.bf16.mxu0 %v314
        %2148 = vmatmul.mubr.bf16.gmra.mrb[0].mxu0 %v313
        %v2149 = vpop.f32.mrb[0].mxu0
        %v2150 = vadd.f32 0.0, %v2149
        %v2151 = vpop.f32.mrb[0].mxu0
        %v2152 = vpop.f32.mrb[0].mxu0
        %v2153 = vadd.f32 0.0, %v2152
        %v2154 = vpop.f32.mrb[0].mxu0
        %2155 = vmatprep.mubr.bf16.mxu0 %v317
        %2156 = vmatmul.mubr.bf16.gmra.mrb[0].mxu0 %v316
        %v2157 = vpop.f32.mrb[0].mxu0
        %v2158 = vadd.f32 0.0, %v2157
        %v2159 = vpop.f32.mrb[0].mxu0
        %v2160 = vpop.f32.mrb[0].mxu0
        %v2161 = vadd.f32 0.0, %v2160
        %v2162 = vpop.f32.mrb[0].mxu0
        %2163 = vmatprep.mubr.bf16.mxu0 %v320
        %2164 = vmatmul.mubr.bf16.gmra.mrb[0].mxu0 %v319
        %v2165 = vpop.f32.mrb[0].mxu0
        %v2166 = vadd.f32 0.0, %v2165
        %v2167 = vpop.f32.mrb[0].mxu0
        %v2168 = vpop.f32.mrb[0].mxu0
        %v2169 = vadd.f32 0.0, %v2168
        %v2170 = vpop.f32.mrb[0].mxu0
        %2171 = vmatprep.mubr.bf16.mxu0 %v323
        %2172 = vmatmul.mubr.bf16.gmra.mrb[0].mxu0 %v322
        %v2173 = vpop.f32.mrb[0].mxu0
        %v2174 = vadd.f32 0.0, %v2173
        %v2175 = vpop.f32.mrb[0].mxu0
        %v2176 = vpop.f32.mrb[0].mxu0
        %v2177 = vadd.f32 0.0, %v2176
        %v2178 = vpop.f32.mrb[0].mxu0
        %2179 = vmatprep.mubr.bf16.mxu0 %v326
        %2180 = vmatmul.mubr.bf16.gmra.mrb[0].mxu0 %v325
        %v2181 = vpop.f32.mrb[0].mxu0
        %v2182 = vadd.f32 0.0, %v2181
        %v2183 = vpop.f32.mrb[0].mxu0
        %v2184 = vpop.f32.mrb[0].mxu0
        %v2185 = vadd.f32 0.0, %v2184
        %v2186 = vpop.f32.mrb[0].mxu0
        %2187 = vmatprep.mubr.bf16.mxu0 %v329
        %2188 = vmatmul.mubr.bf16.gmra.mrb[0].mxu0 %v328
        %v2189 = vpop.f32.mrb[0].mxu0
        %v2190 = vadd.f32 0.0, %v2189
        %v2191 = vpop.f32.mrb[0].mxu0
        %v2192 = vpop.f32.mrb[0].mxu0
        %v2193 = vadd.f32 0.0, %v2192
        %v2194 = vpop.f32.mrb[0].mxu0
        %2195 = vdwg.mxu0
        %2196 = vmatprep.subr.bf16.mxu0 0
        %2197 = vmatpush1.bf16.msra.mxu0 %v915
        %2198 = vmatprep.subr.bf16.mxu0 0
        %2199 = vmatpush1.bf16.msra.mxu0 %v924
        %2200 = vmatprep.subr.bf16.mxu0 0
        %2201 = vmatpush1.bf16.msra.mxu0 %v933
        %2202 = vmatprep.subr.bf16.mxu0 0
        %2203 = vmatpush1.bf16.msra.mxu0 %v942
        %2204 = vmatprep.subr.bf16.mxu0 0
        %2205 = vmatpush1.bf16.msra.mxu0 %v951
        %2206 = vmatprep.subr.bf16.mxu0 0
        %2207 = vmatpush1.bf16.msra.mxu0 %v960
        %2208 = vmatprep.subr.bf16.mxu0 0
        %2209 = vmatpush1.bf16.msra.mxu0 %v969
        %2210 = vmatprep.subr.bf16.mxu0 0
        %2211 = vmatpush1.bf16.msra.mxu0 %v978
        %2212 = vmatprep.subr.bf16.mxu0 0
        %2213 = vmatpush1.bf16.msra.mxu0 0
        %2214 = vmatprep.subr.bf16.mxu0 0
        %2215 = vmatpush1.bf16.msra.mxu0 0
        %2216 = vmatprep.subr.bf16.mxu0 0
        %2217 = vmatpush1.bf16.msra.mxu0 0
        %2218 = vmatprep.subr.bf16.mxu0 0
        %2219 = vmatpush1.bf16.msra.mxu0 0
        %2220 = vmatprep.subr.bf16.mxu0 0
        %2221 = vmatpush1.bf16.msra.mxu0 0
        %2222 = vmatprep.subr.bf16.mxu0 0
        %2223 = vmatpush1.bf16.msra.mxu0 0
        %2224 = vmatprep.subr.bf16.mxu0 0
        %2225 = vmatpush1.bf16.msra.mxu0 0
        %2226 = vmatprep.subr.bf16.mxu0 0
        %2227 = vmatpush1.bf16.msra.mxu0 0
        %2228 = vmatprep.mubr.bf16.mxu0 0
        %2229 = vmatmul.mubr.bf16.gmra.mrb[0].mxu0 %v309
        %v2230 = vpop.f32.mrb[0].mxu0
        %v2231 = vadd.f32 %v2134, %v2230
        %v2232 = vpop.f32.mrb[0].mxu0
        %v2233 = vpop.f32.mrb[0].mxu0
        %v2234 = vadd.f32 %v2137, %v2233
        %v2235 = vpop.f32.mrb[0].mxu0
        %2236 = vmatprep.mubr.bf16.mxu0 0
        %2237 = vmatmul.mubr.bf16.gmra.mrb[0].mxu0 %v312
        %v2238 = vpop.f32.mrb[0].mxu0
        %v2239 = vadd.f32 %v2142, %v2238
        %v2240 = vpop.f32.mrb[0].mxu0
        %v2241 = vpop.f32.mrb[0].mxu0
        %v2242 = vadd.f32 %v2145, %v2241
        %v2243 = vpop.f32.mrb[0].mxu0
        %2244 = vmatprep.mubr.bf16.mxu0 0
        %2245 = vmatmul.mubr.bf16.gmra.mrb[0].mxu0 %v315
        %v2246 = vpop.f32.mrb[0].mxu0
        %v2247 = vadd.f32 %v2150, %v2246
        %v2248 = vpop.f32.mrb[0].mxu0
        %v2249 = vpop.f32.mrb[0].mxu0
        %v2250 = vadd.f32 %v2153, %v2249
        %v2251 = vpop.f32.mrb[0].mxu0
        %2252 = vmatprep.mubr.bf16.mxu0 0
        %2253 = vmatmul.mubr.bf16.gmra.mrb[0].mxu0 %v318
        %v2254 = vpop.f32.mrb[0].mxu0
        %v2255 = vadd.f32 %v2158, %v2254
        %v2256 = vpop.f32.mrb[0].mxu0
        %v2257 = vpop.f32.mrb[0].mxu0
        %v2258 = vadd.f32 %v2161, %v2257
        %v2259 = vpop.f32.mrb[0].mxu0
        %2260 = vmatprep.mubr.bf16.mxu0 0
        %2261 = vmatmul.mubr.bf16.gmra.mrb[0].mxu0 %v321
        %v2262 = vpop.f32.mrb[0].mxu0
        %v2263 = vadd.f32 %v2166, %v2262
        %v2264 = vpop.f32.mrb[0].mxu0
        %v2265 = vpop.f32.mrb[0].mxu0
        %v2266 = vadd.f32 %v2169, %v2265
        %v2267 = vpop.f32.mrb[0].mxu0
        %2268 = vmatprep.mubr.bf16.mxu0 0
        %2269 = vmatmul.mubr.bf16.gmra.mrb[0].mxu0 %v324
        %v2270 = vpop.f32.mrb[0].mxu0
        %v2271 = vadd.f32 %v2174, %v2270
        %v2272 = vpop.f32.mrb[0].mxu0
        %v2273 = vpop.f32.mrb[0].mxu0
        %v2274 = vadd.f32 %v2177, %v2273
        %v2275 = vpop.f32.mrb[0].mxu0
        %2276 = vmatprep.mubr.bf16.mxu0 0
        %2277 = vmatmul.mubr.bf16.gmra.mrb[0].mxu0 %v327
        %v2278 = vpop.f32.mrb[0].mxu0
        %v2279 = vadd.f32 %v2182, %v2278
        %v2280 = vpop.f32.mrb[0].mxu0
        %v2281 = vpop.f32.mrb[0].mxu0
        %v2282 = vadd.f32 %v2185, %v2281
        %v2283 = vpop.f32.mrb[0].mxu0
        %2284 = vmatprep.mubr.bf16.mxu0 0
        %2285 = vmatmul.mubr.bf16.gmra.mrb[0].mxu0 %v330
        %v2286 = vpop.f32.mrb[0].mxu0
        %v2287 = vadd.f32 %v2190, %v2286
        %v2288 = vpop.f32.mrb[0].mxu0
        %v2289 = vpop.f32.mrb[0].mxu0
        %v2290 = vadd.f32 %v2193, %v2289
        %v2291 = vpop.f32.mrb[0].mxu0
        %2292 = vdwg.mxu0
        %v2293 = vmul.f32 %v1343, 0.05103104
        %v2294 = vmul.f32 %v1345, 0.05103104
        %v2295 = vmul.f32 %v1569, 0.05103104
        %v2296 = vmul.f32 %v1347, 0.05103104
        %v2297 = vmul.f32 %v1349, 0.05103104
        %v2298 = vmul.f32 %v1573, 0.05103104
        %v2299 = vmul.f32 %v1353, 0.05103104
        %v2300 = vmul.f32 %v1355, 0.05103104
        %v2301 = vmul.f32 %v1579, 0.05103104
        %v2302 = vmul.f32 %v1357, 0.05103104
        %v2303 = vmul.f32 %v1359, 0.05103104
        %v2304 = vmul.f32 %v1583, 0.05103104
        %v2305 = vmul.f32 %v1363, 0.05103104
        %v2306 = vmul.f32 %v1365, 0.05103104
        %v2307 = vmul.f32 %v1589, 0.05103104
        %v2308 = vmul.f32 %v1367, 0.05103104
        %v2309 = vmul.f32 %v1369, 0.05103104
        %v2310 = vmul.f32 %v1593, 0.05103104
        %v2311 = vmul.f32 %v1373, 0.05103104
        %v2312 = vmul.f32 %v1375, 0.05103104
        %v2313 = vmul.f32 %v1599, 0.05103104
        %v2314 = vmul.f32 %v1377, 0.05103104
        %v2315 = vmul.f32 %v1379, 0.05103104
        %v2316 = vmul.f32 %v1603, 0.05103104
        %v2317 = vmul.f32 %v1383, 0.05103104
        %v2318 = vmul.f32 %v1385, 0.05103104
        %v2319 = vmul.f32 %v1609, 0.05103104
        %v2320 = vmul.f32 %v1387, 0.05103104
        %v2321 = vmul.f32 %v1389, 0.05103104
        %v2322 = vmul.f32 %v1613, 0.05103104
        %v2323 = vmul.f32 %v1393, 0.05103104
        %v2324 = vmul.f32 %v1395, 0.05103104
        %v2325 = vmul.f32 %v1619, 0.05103104
        %v2326 = vmul.f32 %v1397, 0.05103104
        %v2327 = vmul.f32 %v1399, 0.05103104
        %v2328 = vmul.f32 %v1623, 0.05103104
        %v2329 = vmul.f32 %v1403, 0.05103104
        %v2330 = vmul.f32 %v1405, 0.05103104
        %v2331 = vmul.f32 %v1629, 0.05103104
        %v2332 = vmul.f32 %v1407, 0.05103104
        %v2333 = vmul.f32 %v1409, 0.05103104
        %v2334 = vmul.f32 %v1633, 0.05103104
        %v2335 = vmul.f32 %v1413, 0.05103104
        %v2336 = vmul.f32 %v1415, 0.05103104
        %v2337 = vmul.f32 %v1639, 0.05103104
        %v2338 = vmul.f32 %v1417, 0.05103104
        %v2339 = vmul.f32 %v1419, 0.05103104
        %v2340 = vmul.f32 %v1643, 0.05103104
        %v2341 = vpack.c.bf16 %v2296, %v2293
        %v2342 = vpack.c.bf16 %v2297, %v2294
        %v2343 = vpack.c.bf16 %v2298, %v2295
        %v2344 = vpack.c.bf16 %v2302, %v2299
        %v2345 = vpack.c.bf16 %v2303, %v2300
        %v2346 = vpack.c.bf16 %v2304, %v2301
        %v2347 = vpack.c.bf16 %v2308, %v2305
        %v2348 = vpack.c.bf16 %v2309, %v2306
        %v2349 = vpack.c.bf16 %v2310, %v2307
        %v2350 = vpack.c.bf16 %v2314, %v2311
        %v2351 = vpack.c.bf16 %v2315, %v2312
        %v2352 = vpack.c.bf16 %v2316, %v2313
        %v2353 = vpack.c.bf16 %v2320, %v2317
        %v2354 = vpack.c.bf16 %v2321, %v2318
        %v2355 = vpack.c.bf16 %v2322, %v2319
        %v2356 = vpack.c.bf16 %v2326, %v2323
        %v2357 = vpack.c.bf16 %v2327, %v2324
        %v2358 = vpack.c.bf16 %v2328, %v2325
        %v2359 = vpack.c.bf16 %v2332, %v2329
        %v2360 = vpack.c.bf16 %v2333, %v2330
        %v2361 = vpack.c.bf16 %v2334, %v2331
        %v2362 = vpack.c.bf16 %v2338, %v2335
        %v2363 = vpack.c.bf16 %v2339, %v2336
        %v2364 = vpack.c.bf16 %v2340, %v2337
        %v2365 = vpack.c.bf16 %v1575, %v1571
        %v2366 = vpack.c.bf16 %v1799, %v1795
        %v2367 = vpack.c.bf16 %v1801, %v1797
        %v2368 = vpack.c.bf16 %v1585, %v1581
        %v2369 = vpack.c.bf16 %v1809, %v1805
        %v2370 = vpack.c.bf16 %v1811, %v1807
        %v2371 = vpack.c.bf16 %v1595, %v1591
        %v2372 = vpack.c.bf16 %v1819, %v1815
        %v2373 = vpack.c.bf16 %v1821, %v1817
        %v2374 = vpack.c.bf16 %v1605, %v1601
        %v2375 = vpack.c.bf16 %v1829, %v1825
        %v2376 = vpack.c.bf16 %v1831, %v1827
        %v2377 = vpack.c.bf16 %v1615, %v1611
        %v2378 = vpack.c.bf16 %v1839, %v1835
        %v2379 = vpack.c.bf16 %v1841, %v1837
        %v2380 = vpack.c.bf16 %v1625, %v1621
        %v2381 = vpack.c.bf16 %v1849, %v1845
        %v2382 = vpack.c.bf16 %v1851, %v1847
        %v2383 = vpack.c.bf16 %v1635, %v1631
        %v2384 = vpack.c.bf16 %v1859, %v1855
        %v2385 = vpack.c.bf16 %v1861, %v1857
        %v2386 = vpack.c.bf16 %v1645, %v1641
        %v2387 = vpack.c.bf16 %v1869, %v1865
        %v2388 = vpack.c.bf16 %v1871, %v1867
        %v2389 = vpack.c.bf16 %v2025, %v2021
        %v2390 = vpack.c.bf16 %v2027, %v2023
        %v2391 = vpack.c.bf16 %v2234, %v2231
        %v2392 = vpack.c.bf16 %v2035, %v2031
        %v2393 = vpack.c.bf16 %v2037, %v2033
        %v2394 = vpack.c.bf16 %v2242, %v2239
        %v2395 = vpack.c.bf16 %v2045, %v2041
        %v2396 = vpack.c.bf16 %v2047, %v2043
        %v2397 = vpack.c.bf16 %v2250, %v2247
        %v2398 = vpack.c.bf16 %v2055, %v2051
        %v2399 = vpack.c.bf16 %v2057, %v2053
        %v2400 = vpack.c.bf16 %v2258, %v2255
        %v2401 = vpack.c.bf16 %v2065, %v2061
        %v2402 = vpack.c.bf16 %v2067, %v2063
        %v2403 = vpack.c.bf16 %v2266, %v2263
        %v2404 = vpack.c.bf16 %v2075, %v2071
        %v2405 = vpack.c.bf16 %v2077, %v2073
        %v2406 = vpack.c.bf16 %v2274, %v2271
        %v2407 = vpack.c.bf16 %v2085, %v2081
        %v2408 = vpack.c.bf16 %v2087, %v2083
        %v2409 = vpack.c.bf16 %v2282, %v2279
        %v2410 = vpack.c.bf16 %v2095, %v2091
        %v2411 = vpack.c.bf16 %v2097, %v2093
        %v2412 = vpack.c.bf16 %v2290, %v2287
        %v2413 = vlaneseq
        %v2414 = vshrl.u32 %v2413, 7
        %v2415 = vadd.s32 %v2414, 8
        %v2416 = vadd.s32 %v2414, 16
        %v2417 = vadd.s32 %v2414, 24
        %v2418 = vadd.s32 %v2414, 32
        %v2419 = vadd.s32 %v2414, 40
        %v2420 = vadd.s32 %v2414, 48
        %v2421 = vadd.s32 %v2414, 56
        %v2422 = vadd.s32 %v2414, 64
        %v2423 = vadd.s32 %v2414, 72
        %v2424 = vadd.s32 %v2414, 80
        %v2425 = vadd.s32 %v2414, 88
        %v2426 = vadd.s32 %v2414, 96
        %v2427 = vadd.s32 %v2414, 104
        %v2428 = vadd.s32 %v2414, 112
        %v2429 = vadd.s32 %v2414, 120
        %v2430 = vlaneseq
        %v2431 = vand.u32 %v2430, 127
        %vm2432 = vcmp.le.s32.totalorder %v2431, %v2414
        %vm2433 = vcmp.le.s32.totalorder %v2431, %v2415
        %vm2434 = vcmp.le.s32.totalorder %v2431, %v2416
        %vm2435 = vcmp.le.s32.totalorder %v2431, %v2417
        %vm2436 = vcmp.le.s32.totalorder %v2431, %v2418
        %vm2437 = vcmp.le.s32.totalorder %v2431, %v2419
        %vm2438 = vcmp.le.s32.totalorder %v2431, %v2420
        %vm2439 = vcmp.le.s32.totalorder %v2431, %v2421
        %vm2440 = vcmp.le.s32.totalorder %v2431, %v2422
        %vm2441 = vcmp.le.s32.totalorder %v2431, %v2423
        %vm2442 = vcmp.le.s32.totalorder %v2431, %v2424
        %vm2443 = vcmp.le.s32.totalorder %v2431, %v2425
        %vm2444 = vcmp.le.s32.totalorder %v2431, %v2426
        %vm2445 = vcmp.le.s32.totalorder %v2431, %v2427
        %vm2446 = vcmp.le.s32.totalorder %v2431, %v2428
        %vm2447 = vcmp.le.s32.totalorder %v2431, %v2429
        %vm2448 = vcmask 523264
        %v2450 = vsel %vm2448, %v2341, 0
        %v2453 = vsel %vm2448, %v2344, 0
        %v2456 = vsel %vm2448, %v2347, 0
        %v2459 = vsel %vm2448, %v2350, 0
        %v2462 = vsel %vm2448, %v2353, 0
        %v2465 = vsel %vm2448, %v2356, 0
        %v2468 = vsel %vm2448, %v2359, 0
        %v2471 = vsel %vm2448, %v2362, 0
        %v2474 = vsel %vm2448, %v2365, 0
        %v2477 = vsel %vm2448, %v2368, 0
        %v2480 = vsel %vm2448, %v2371, 0
        %v2483 = vsel %vm2448, %v2374, 0
        %v2486 = vsel %vm2448, %v2377, 0
        %v2489 = vsel %vm2448, %v2380, 0
        %v2492 = vsel %vm2448, %v2383, 0
        %v2495 = vsel %vm2448, %v2386, 0
        %2497 = vmatprep.subr.bf16.mxu0 0
        %2498 = vmatpush1.bf16.xpose.msra.mxu0 %v2474
        %2499 = vmatprep.subr.bf16.mxu0 0
        %2500 = vmatpush1.bf16.xpose.msra.mxu0 %v2477
        %2501 = vmatprep.subr.bf16.mxu0 0
        %2502 = vmatpush1.bf16.xpose.msra.mxu0 %v2480
        %2503 = vmatprep.subr.bf16.mxu0 0
        %2504 = vmatpush1.bf16.xpose.msra.mxu0 %v2483
        %2505 = vmatprep.subr.bf16.mxu0 0
        %2506 = vmatpush1.bf16.xpose.msra.mxu0 %v2486
        %2507 = vmatprep.subr.bf16.mxu0 0
        %2508 = vmatpush1.bf16.xpose.msra.mxu0 %v2489
        %2509 = vmatprep.subr.bf16.mxu0 0
        %2510 = vmatpush1.bf16.xpose.msra.mxu0 %v2492
        %2511 = vmatprep.subr.bf16.mxu0 0
        %2512 = vmatpush1.bf16.xpose.msra.mxu0 %v2495
        %2513 = vmatprep.subr.bf16.mxu0 0
        %2514 = vmatpush1.bf16.xpose.msra.mxu0 0
        %2515 = vmatprep.subr.bf16.mxu0 0
        %2516 = vmatpush1.bf16.xpose.msra.mxu0 0
        %2517 = vmatprep.subr.bf16.mxu0 0
        %2518 = vmatpush1.bf16.xpose.msra.mxu0 0
        %2519 = vmatprep.subr.bf16.mxu0 0
        %2520 = vmatpush1.bf16.xpose.msra.mxu0 0
        %2521 = vmatprep.subr.bf16.mxu0 0
        %2522 = vmatpush1.bf16.xpose.msra.mxu0 0
        %2523 = vmatprep.subr.bf16.mxu0 0
        %2524 = vmatpush1.bf16.xpose.msra.mxu0 0
        %2525 = vmatprep.subr.bf16.mxu0 0
        %2526 = vmatpush1.bf16.xpose.msra.mxu0 0
        %2527 = vmatprep.subr.bf16.mxu0 0
        %2528 = vmatpush1.bf16.xpose.msra.mxu0 0
        %2529 = vmatprep.mubr.bf16.mxu0 0
        %2530 = vmatmul.mubr.bf16.gmra.mrb[0].mxu0 %v2450
        %v2531 = vpop.f32.mrb[0].mxu0
        %v2532 = vadd.f32 0.0, %v2531
        %v2533 = vpop.f32.mrb[0].mxu0
        %v2534 = vpop.f32.mrb[0].mxu0
        %v2535 = vadd.f32 0.0, %v2534
        %v2536 = vpop.f32.mrb[0].mxu0
        %2537 = vmatprep.mubr.bf16.mxu0 0
        %2538 = vmatmul.mubr.bf16.gmra.mrb[0].mxu0 %v2453
        %v2539 = vpop.f32.mrb[0].mxu0
        %v2540 = vadd.f32 0.0, %v2539
        %v2541 = vpop.f32.mrb[0].mxu0
        %v2542 = vpop.f32.mrb[0].mxu0
        %v2543 = vadd.f32 0.0, %v2542
        %v2544 = vpop.f32.mrb[0].mxu0
        %2545 = vmatprep.mubr.bf16.mxu0 0
        %2546 = vmatmul.mubr.bf16.gmra.mrb[0].mxu0 %v2456
        %v2547 = vpop.f32.mrb[0].mxu0
        %v2548 = vadd.f32 0.0, %v2547
        %v2549 = vpop.f32.mrb[0].mxu0
        %v2550 = vpop.f32.mrb[0].mxu0
        %v2551 = vadd.f32 0.0, %v2550
        %v2552 = vpop.f32.mrb[0].mxu0
        %2553 = vmatprep.mubr.bf16.mxu0 0
        %2554 = vmatmul.mubr.bf16.gmra.mrb[0].mxu0 %v2459
        %v2555 = vpop.f32.mrb[0].mxu0
        %v2556 = vadd.f32 0.0, %v2555
        %v2557 = vpop.f32.mrb[0].mxu0
        %v2558 = vpop.f32.mrb[0].mxu0
        %v2559 = vadd.f32 0.0, %v2558
        %v2560 = vpop.f32.mrb[0].mxu0
        %2561 = vmatprep.mubr.bf16.mxu0 0
        %2562 = vmatmul.mubr.bf16.gmra.mrb[0].mxu0 %v2462
        %v2563 = vpop.f32.mrb[0].mxu0
        %v2564 = vadd.f32 0.0, %v2563
        %v2565 = vpop.f32.mrb[0].mxu0
        %v2566 = vpop.f32.mrb[0].mxu0
        %v2567 = vadd.f32 0.0, %v2566
        %v2568 = vpop.f32.mrb[0].mxu0
        %2569 = vmatprep.mubr.bf16.mxu0 0
        %2570 = vmatmul.mubr.bf16.gmra.mrb[0].mxu0 %v2465
        %v2571 = vpop.f32.mrb[0].mxu0
        %v2572 = vadd.f32 0.0, %v2571
        %v2573 = vpop.f32.mrb[0].mxu0
        %v2574 = vpop.f32.mrb[0].mxu0
        %v2575 = vadd.f32 0.0, %v2574
        %v2576 = vpop.f32.mrb[0].mxu0
        %2577 = vmatprep.mubr.bf16.mxu0 0
        %2578 = vmatmul.mubr.bf16.gmra.mrb[0].mxu0 %v2468
        %v2579 = vpop.f32.mrb[0].mxu0
        %v2580 = vadd.f32 0.0, %v2579
        %v2581 = vpop.f32.mrb[0].mxu0
        %v2582 = vpop.f32.mrb[0].mxu0
        %v2583 = vadd.f32 0.0, %v2582
        %v2584 = vpop.f32.mrb[0].mxu0
        %2585 = vmatprep.mubr.bf16.mxu0 0
        %2586 = vmatmul.mubr.bf16.gmra.mrb[0].mxu0 %v2471
        %v2587 = vpop.f32.mrb[0].mxu0
        %v2588 = vadd.f32 0.0, %v2587
        %v2589 = vpop.f32.mrb[0].mxu0
        %v2590 = vpop.f32.mrb[0].mxu0
        %v2591 = vadd.f32 0.0, %v2590
        %v2592 = vpop.f32.mrb[0].mxu0
        %2593 = vdwg.mxu0
        %v2594 = vsel %vm2432, %v2532, -inf
        %v2595 = vsel %vm2433, %v2535, -inf
        %v2596 = vsel %vm2434, %v2540, -inf
        %v2597 = vsel %vm2435, %v2543, -inf
        %v2598 = vsel %vm2436, %v2548, -inf
        %v2599 = vsel %vm2437, %v2551, -inf
        %v2600 = vsel %vm2438, %v2556, -inf
        %v2601 = vsel %vm2439, %v2559, -inf
        %v2602 = vsel %vm2440, %v2564, -inf
        %v2603 = vsel %vm2441, %v2567, -inf
        %v2604 = vsel %vm2442, %v2572, -inf
        %v2605 = vsel %vm2443, %v2575, -inf
        %v2606 = vsel %vm2444, %v2580, -inf
        %v2607 = vsel %vm2445, %v2583, -inf
        %v2608 = vsel %vm2446, %v2588, -inf
        %v2609 = vsel %vm2447, %v2591, -inf
        %2610 = vmax.xlane.f32.xlu0 %v2594
        %v2611 = vpop.xlane.xlu0 %2610
        %2612 = vmax.xlane.f32.xlu0 %v2595
        %v2613 = vpop.xlane.xlu0 %2612
        %2614 = vmax.xlane.f32.xlu0 %v2596
        %v2615 = vpop.xlane.xlu0 %2614
        %2616 = vmax.xlane.f32.xlu0 %v2597
        %v2617 = vpop.xlane.xlu0 %2616
        %2618 = vmax.xlane.f32.xlu0 %v2598
        %v2619 = vpop.xlane.xlu0 %2618
        %2620 = vmax.xlane.f32.xlu0 %v2599
        %v2621 = vpop.xlane.xlu0 %2620
        %2622 = vmax.xlane.f32.xlu0 %v2600
        %v2623 = vpop.xlane.xlu0 %2622
        %2624 = vmax.xlane.f32.xlu0 %v2601
        %v2625 = vpop.xlane.xlu0 %2624
        %2626 = vmax.xlane.f32.xlu0 %v2602
        %v2627 = vpop.xlane.xlu0 %2626
        %2628 = vmax.xlane.f32.xlu0 %v2603
        %v2629 = vpop.xlane.xlu0 %2628
        %2630 = vmax.xlane.f32.xlu0 %v2604
        %v2631 = vpop.xlane.xlu0 %2630
        %2632 = vmax.xlane.f32.xlu0 %v2605
        %v2633 = vpop.xlane.xlu0 %2632
        %2634 = vmax.xlane.f32.xlu0 %v2606
        %v2635 = vpop.xlane.xlu0 %2634
        %2636 = vmax.xlane.f32.xlu0 %v2607
        %v2637 = vpop.xlane.xlu0 %2636
        %2638 = vmax.xlane.f32.xlu0 %v2608
        %v2639 = vpop.xlane.xlu0 %2638
        %2640 = vmax.xlane.f32.xlu0 %v2609
        %v2641 = vpop.xlane.xlu0 %2640
        %v2642 = vsub.f32 %v2594, %v2611
        %v2643 = vsub.f32 %v2595, %v2613
        %v2644 = vsub.f32 %v2596, %v2615
        %v2645 = vsub.f32 %v2597, %v2617
        %v2646 = vsub.f32 %v2598, %v2619
        %v2647 = vsub.f32 %v2599, %v2621
        %v2648 = vsub.f32 %v2600, %v2623
        %v2649 = vsub.f32 %v2601, %v2625
        %v2650 = vsub.f32 %v2602, %v2627
        %v2651 = vsub.f32 %v2603, %v2629
        %v2652 = vsub.f32 %v2604, %v2631
        %v2653 = vsub.f32 %v2605, %v2633
        %v2654 = vsub.f32 %v2606, %v2635
        %v2655 = vsub.f32 %v2607, %v2637
        %v2656 = vsub.f32 %v2608, %v2639
        %v2657 = vsub.f32 %v2609, %v2641
        %v2658 = vmul.f32 %v2642, 1.442695
        %v2659 = vpow.pop %v2658
        %v2660 = vmul.f32 %v2643, 1.442695
        %v2661 = vpow.pop %v2660
        %v2662 = vmul.f32 %v2644, 1.442695
        %v2663 = vpow.pop %v2662
        %v2664 = vmul.f32 %v2645, 1.442695
        %v2665 = vpow.pop %v2664
        %v2666 = vmul.f32 %v2646, 1.442695
        %v2667 = vpow.pop %v2666
        %v2668 = vmul.f32 %v2647, 1.442695
        %v2669 = vpow.pop %v2668
        %v2670 = vmul.f32 %v2648, 1.442695
        %v2671 = vpow.pop %v2670
        %v2672 = vmul.f32 %v2649, 1.442695
        %v2673 = vpow.pop %v2672
        %v2674 = vmul.f32 %v2650, 1.442695
        %v2675 = vpow.pop %v2674
        %v2676 = vmul.f32 %v2651, 1.442695
        %v2677 = vpow.pop %v2676
        %v2678 = vmul.f32 %v2652, 1.442695
        %v2679 = vpow.pop %v2678
        %v2680 = vmul.f32 %v2653, 1.442695
        %v2681 = vpow.pop %v2680
        %v2682 = vmul.f32 %v2654, 1.442695
        %v2683 = vpow.pop %v2682
        %v2684 = vmul.f32 %v2655, 1.442695
        %v2685 = vpow.pop %v2684
        %v2686 = vmul.f32 %v2656, 1.442695
        %v2687 = vpow.pop %v2686
        %v2688 = vmul.f32 %v2657, 1.442695
        %v2689 = vpow.pop %v2688
        %2690 = vadd.xlane.f32.xlu0 %v2659
        %v2691 = vpop.xlane.xlu0 %2690
        %2692 = vadd.xlane.f32.xlu0 %v2661
        %v2693 = vpop.xlane.xlu0 %2692
        %2694 = vadd.xlane.f32.xlu0 %v2663
        %v2695 = vpop.xlane.xlu0 %2694
        %2696 = vadd.xlane.f32.xlu0 %v2665
        %v2697 = vpop.xlane.xlu0 %2696
        %2698 = vadd.xlane.f32.xlu0 %v2667
        %v2699 = vpop.xlane.xlu0 %2698
        %2700 = vadd.xlane.f32.xlu0 %v2669
        %v2701 = vpop.xlane.xlu0 %2700
        %2702 = vadd.xlane.f32.xlu0 %v2671
        %v2703 = vpop.xlane.xlu0 %2702
        %2704 = vadd.xlane.f32.xlu0 %v2673
        %v2705 = vpop.xlane.xlu0 %2704
        %2706 = vadd.xlane.f32.xlu0 %v2675
        %v2707 = vpop.xlane.xlu0 %2706
        %2708 = vadd.xlane.f32.xlu0 %v2677
        %v2709 = vpop.xlane.xlu0 %2708
        %2710 = vadd.xlane.f32.xlu0 %v2679
        %v2711 = vpop.xlane.xlu0 %2710
        %2712 = vadd.xlane.f32.xlu0 %v2681
        %v2713 = vpop.xlane.xlu0 %2712
        %2714 = vadd.xlane.f32.xlu0 %v2683
        %v2715 = vpop.xlane.xlu0 %2714
        %2716 = vadd.xlane.f32.xlu0 %v2685
        %v2717 = vpop.xlane.xlu0 %2716
        %2718 = vadd.xlane.f32.xlu0 %v2687
        %v2719 = vpop.xlane.xlu0 %2718
        %2720 = vadd.xlane.f32.xlu0 %v2689
        %v2721 = vpop.xlane.xlu0 %2720
        %v2722 = vrcp.pop %v2691
        %v2723 = vrcp.pop %v2693
        %v2724 = vrcp.pop %v2695
        %v2725 = vrcp.pop %v2697
        %v2726 = vrcp.pop %v2699
        %v2727 = vrcp.pop %v2701
        %v2728 = vrcp.pop %v2703
        %v2729 = vrcp.pop %v2705
        %v2730 = vrcp.pop %v2707
        %v2731 = vrcp.pop %v2709
        %v2732 = vrcp.pop %v2711
        %v2733 = vrcp.pop %v2713
        %v2734 = vrcp.pop %v2715
        %v2735 = vrcp.pop %v2717
        %v2736 = vrcp.pop %v2719
        %v2737 = vrcp.pop %v2721
        %v2738 = vmul.f32 %v2659, %v2722
        %v2739 = vmul.f32 %v2661, %v2723
        %v2740 = vmul.f32 %v2663, %v2724
        %v2741 = vmul.f32 %v2665, %v2725
        %v2742 = vmul.f32 %v2667, %v2726
        %v2743 = vmul.f32 %v2669, %v2727
        %v2744 = vmul.f32 %v2671, %v2728
        %v2745 = vmul.f32 %v2673, %v2729
        %v2746 = vmul.f32 %v2675, %v2730
        %v2747 = vmul.f32 %v2677, %v2731
        %v2748 = vmul.f32 %v2679, %v2732
        %v2749 = vmul.f32 %v2681, %v2733
        %v2750 = vmul.f32 %v2683, %v2734
        %v2751 = vmul.f32 %v2685, %v2735
        %v2752 = vmul.f32 %v2687, %v2736
        %v2753 = vmul.f32 %v2689, %v2737
        %v2754 = vpack.c.bf16 %v2739, %v2738
        %v2755 = vpack.c.bf16 %v2741, %v2740
        %v2756 = vpack.c.bf16 %v2743, %v2742
        %v2757 = vpack.c.bf16 %v2745, %v2744
        %v2758 = vpack.c.bf16 %v2747, %v2746
        %v2759 = vpack.c.bf16 %v2749, %v2748
        %v2760 = vpack.c.bf16 %v2751, %v2750
        %v2761 = vpack.c.bf16 %v2753, %v2752
        %2762 = vmatprep.subr.bf16.mxu0 0
        %2763 = vmatpush1.bf16.msra.mxu0 %v2389
        %2764 = vmatprep.subr.bf16.mxu0 0
        %2765 = vmatpush1.bf16.msra.mxu0 %v2392
        %2766 = vmatprep.subr.bf16.mxu0 0
        %2767 = vmatpush1.bf16.msra.mxu0 %v2395
        %2768 = vmatprep.subr.bf16.mxu0 0
        %2769 = vmatpush1.bf16.msra.mxu0 %v2398
        %2770 = vmatprep.subr.bf16.mxu0 0
        %2771 = vmatpush1.bf16.msra.mxu0 %v2401
        %2772 = vmatprep.subr.bf16.mxu0 0
        %2773 = vmatpush1.bf16.msra.mxu0 %v2404
        %2774 = vmatprep.subr.bf16.mxu0 0
        %2775 = vmatpush1.bf16.msra.mxu0 %v2407
        %2776 = vmatprep.subr.bf16.mxu0 0
        %2777 = vmatpush1.bf16.msra.mxu0 %v2410
        %2778 = vmatprep.subr.bf16.mxu0 0
        %2779 = vmatpush1.bf16.msra.mxu0 0
        %2780 = vmatprep.subr.bf16.mxu0 0
        %2781 = vmatpush1.bf16.msra.mxu0 0
        %2782 = vmatprep.subr.bf16.mxu0 0
        %2783 = vmatpush1.bf16.msra.mxu0 0
        %2784 = vmatprep.subr.bf16.mxu0 0
        %2785 = vmatpush1.bf16.msra.mxu0 0
        %2786 = vmatprep.subr.bf16.mxu0 0
        %2787 = vmatpush1.bf16.msra.mxu0 0
        %2788 = vmatprep.subr.bf16.mxu0 0
        %2789 = vmatpush1.bf16.msra.mxu0 0
        %2790 = vmatprep.subr.bf16.mxu0 0
        %2791 = vmatpush1.bf16.msra.mxu0 0
        %2792 = vmatprep.subr.bf16.mxu0 0
        %2793 = vmatpush1.bf16.msra.mxu0 0
        %2794 = vmatprep.mubr.bf16.mxu0 0
        %2795 = vmatmul.mubr.bf16.gmra.mrb[0].mxu0 %v2754
        %v2796 = vpop.f32.mrb[0].mxu0
        %v2797 = vadd.f32 0.0, %v2796
        %v2798 = vpop.f32.mrb[0].mxu0
        %v2799 = vpop.f32.mrb[0].mxu0
        %v2800 = vadd.f32 0.0, %v2799
        %v2801 = vpop.f32.mrb[0].mxu0
        %2802 = vmatprep.mubr.bf16.mxu0 0
        %2803 = vmatmul.mubr.bf16.gmra.mrb[0].mxu0 %v2755
        %v2804 = vpop.f32.mrb[0].mxu0
        %v2805 = vadd.f32 0.0, %v2804
        %v2806 = vpop.f32.mrb[0].mxu0
        %v2807 = vpop.f32.mrb[0].mxu0
        %v2808 = vadd.f32 0.0, %v2807
        %v2809 = vpop.f32.mrb[0].mxu0
        %2810 = vmatprep.mubr.bf16.mxu0 0
        %2811 = vmatmul.mubr.bf16.gmra.mrb[0].mxu0 %v2756
        %v2812 = vpop.f32.mrb[0].mxu0
        %v2813 = vadd.f32 0.0, %v2812
        %v2814 = vpop.f32.mrb[0].mxu0
        %v2815 = vpop.f32.mrb[0].mxu0
        %v2816 = vadd.f32 0.0, %v2815
        %v2817 = vpop.f32.mrb[0].mxu0
        %2818 = vmatprep.mubr.bf16.mxu0 0
        %2819 = vmatmul.mubr.bf16.gmra.mrb[0].mxu0 %v2757
        %v2820 = vpop.f32.mrb[0].mxu0
        %v2821 = vadd.f32 0.0, %v2820
        %v2822 = vpop.f32.mrb[0].mxu0
        %v2823 = vpop.f32.mrb[0].mxu0
        %v2824 = vadd.f32 0.0, %v2823
        %v2825 = vpop.f32.mrb[0].mxu0
        %2826 = vmatprep.mubr.bf16.mxu0 0
        %2827 = vmatmul.mubr.bf16.gmra.mrb[0].mxu0 %v2758
        %v2828 = vpop.f32.mrb[0].mxu0
        %v2829 = vadd.f32 0.0, %v2828
        %v2830 = vpop.f32.mrb[0].mxu0
        %v2831 = vpop.f32.mrb[0].mxu0
        %v2832 = vadd.f32 0.0, %v2831
        %v2833 = vpop.f32.mrb[0].mxu0
        %2834 = vmatprep.mubr.bf16.mxu0 0
        %2835 = vmatmul.mubr.bf16.gmra.mrb[0].mxu0 %v2759
        %v2836 = vpop.f32.mrb[0].mxu0
        %v2837 = vadd.f32 0.0, %v2836
        %v2838 = vpop.f32.mrb[0].mxu0
        %v2839 = vpop.f32.mrb[0].mxu0
        %v2840 = vadd.f32 0.0, %v2839
        %v2841 = vpop.f32.mrb[0].mxu0
        %2842 = vmatprep.mubr.bf16.mxu0 0
        %2843 = vmatmul.mubr.bf16.gmra.mrb[0].mxu0 %v2760
        %v2844 = vpop.f32.mrb[0].mxu0
        %v2845 = vadd.f32 0.0, %v2844
        %v2846 = vpop.f32.mrb[0].mxu0
        %v2847 = vpop.f32.mrb[0].mxu0
        %v2848 = vadd.f32 0.0, %v2847
        %v2849 = vpop.f32.mrb[0].mxu0
        %2850 = vmatprep.mubr.bf16.mxu0 0
        %2851 = vmatmul.mubr.bf16.gmra.mrb[0].mxu0 %v2761
        %v2852 = vpop.f32.mrb[0].mxu0
        %v2853 = vadd.f32 0.0, %v2852
        %v2854 = vpop.f32.mrb[0].mxu0
        %v2855 = vpop.f32.mrb[0].mxu0
        %v2856 = vadd.f32 0.0, %v2855
        %v2857 = vpop.f32.mrb[0].mxu0
        %2858 = vdwg.mxu0
        %2867 = vrot.lane.b32.xlu0 %v2341, 64
        %v2868 = vpop.permute.xlu0 %2867
        %2869 = vrot.lane.b32.xlu0 %v2344, 64
        %v2870 = vpop.permute.xlu0 %2869
        %2871 = vrot.lane.b32.xlu0 %v2347, 64
        %v2872 = vpop.permute.xlu0 %2871
        %2873 = vrot.lane.b32.xlu0 %v2350, 64
        %v2874 = vpop.permute.xlu0 %2873
        %2875 = vrot.lane.b32.xlu0 %v2353, 64
        %v2876 = vpop.permute.xlu0 %2875
        %2877 = vrot.lane.b32.xlu0 %v2356, 64
        %v2878 = vpop.permute.xlu0 %2877
        %2879 = vrot.lane.b32.xlu0 %v2359, 64
        %v2880 = vpop.permute.xlu0 %2879
        %2881 = vrot.lane.b32.xlu0 %v2362, 64
        %v2882 = vpop.permute.xlu0 %2881
        %2891 = vrot.lane.b32.xlu0 %v2365, 64
        %v2892 = vpop.permute.xlu0 %2891
        %2893 = vrot.lane.b32.xlu0 %v2368, 64
        %v2894 = vpop.permute.xlu0 %2893
        %2895 = vrot.lane.b32.xlu0 %v2371, 64
        %v2896 = vpop.permute.xlu0 %2895
        %2897 = vrot.lane.b32.xlu0 %v2374, 64
        %v2898 = vpop.permute.xlu0 %2897
        %2899 = vrot.lane.b32.xlu0 %v2377, 64
        %v2900 = vpop.permute.xlu0 %2899
        %2901 = vrot.lane.b32.xlu0 %v2380, 64
        %v2902 = vpop.permute.xlu0 %2901
        %2903 = vrot.lane.b32.xlu0 %v2383, 64
        %v2904 = vpop.permute.xlu0 %2903
        %2905 = vrot.lane.b32.xlu0 %v2386, 64
        %v2906 = vpop.permute.xlu0 %2905
        %v2908 = vsel %vm2448, %v2868, 0
        %v2911 = vsel %vm2448, %v2870, 0
        %v2914 = vsel %vm2448, %v2872, 0
        %v2917 = vsel %vm2448, %v2874, 0
        %v2920 = vsel %vm2448, %v2876, 0
        %v2923 = vsel %vm2448, %v2878, 0
        %v2926 = vsel %vm2448, %v2880, 0
        %v2929 = vsel %vm2448, %v2882, 0
        %v2932 = vsel %vm2448, %v2892, 0
        %v2935 = vsel %vm2448, %v2894, 0
        %v2938 = vsel %vm2448, %v2896, 0
        %v2941 = vsel %vm2448, %v2898, 0
        %v2944 = vsel %vm2448, %v2900, 0
        %v2947 = vsel %vm2448, %v2902, 0
        %v2950 = vsel %vm2448, %v2904, 0
        %v2953 = vsel %vm2448, %v2906, 0
        %2955 = vmatprep.subr.bf16.mxu0 0
        %2956 = vmatpush1.bf16.xpose.msra.mxu0 %v2932
        %2957 = vmatprep.subr.bf16.mxu0 0
        %2958 = vmatpush1.bf16.xpose.msra.mxu0 %v2935
        %2959 = vmatprep.subr.bf16.mxu0 0
        %2960 = vmatpush1.bf16.xpose.msra.mxu0 %v2938
        %2961 = vmatprep.subr.bf16.mxu0 0
        %2962 = vmatpush1.bf16.xpose.msra.mxu0 %v2941
        %2963 = vmatprep.subr.bf16.mxu0 0
        %2964 = vmatpush1.bf16.xpose.msra.mxu0 %v2944
        %2965 = vmatprep.subr.bf16.mxu0 0
        %2966 = vmatpush1.bf16.xpose.msra.mxu0 %v2947
        %2967 = vmatprep.subr.bf16.mxu0 0
        %2968 = vmatpush1.bf16.xpose.msra.mxu0 %v2950
        %2969 = vmatprep.subr.bf16.mxu0 0
        %2970 = vmatpush1.bf16.xpose.msra.mxu0 %v2953
        %2971 = vmatprep.subr.bf16.mxu0 0
        %2972 = vmatpush1.bf16.xpose.msra.mxu0 0
        %2973 = vmatprep.subr.bf16.mxu0 0
        %2974 = vmatpush1.bf16.xpose.msra.mxu0 0
        %2975 = vmatprep.subr.bf16.mxu0 0
        %2976 = vmatpush1.bf16.xpose.msra.mxu0 0
        %2977 = vmatprep.subr.bf16.mxu0 0
        %2978 = vmatpush1.bf16.xpose.msra.mxu0 0
        %2979 = vmatprep.subr.bf16.mxu0 0
        %2980 = vmatpush1.bf16.xpose.msra.mxu0 0
        %2981 = vmatprep.subr.bf16.mxu0 0
        %2982 = vmatpush1.bf16.xpose.msra.mxu0 0
        %2983 = vmatprep.subr.bf16.mxu0 0
        %2984 = vmatpush1.bf16.xpose.msra.mxu0 0
        %2985 = vmatprep.subr.bf16.mxu0 0
        %2986 = vmatpush1.bf16.xpose.msra.mxu0 0
        %2987 = vmatprep.mubr.bf16.mxu0 0
        %2988 = vmatmul.mubr.bf16.gmra.mrb[0].mxu0 %v2908
        %v2989 = vpop.f32.mrb[0].mxu0
        %v2990 = vadd.f32 0.0, %v2989
        %v2991 = vpop.f32.mrb[0].mxu0
        %v2992 = vpop.f32.mrb[0].mxu0
        %v2993 = vadd.f32 0.0, %v2992
        %v2994 = vpop.f32.mrb[0].mxu0
        %2995 = vmatprep.mubr.bf16.mxu0 0
        %2996 = vmatmul.mubr.bf16.gmra.mrb[0].mxu0 %v2911
        %v2997 = vpop.f32.mrb[0].mxu0
        %v2998 = vadd.f32 0.0, %v2997
        %v2999 = vpop.f32.mrb[0].mxu0
        %v3000 = vpop.f32.mrb[0].mxu0
        %v3001 = vadd.f32 0.0, %v3000
        %v3002 = vpop.f32.mrb[0].mxu0
        %3003 = vmatprep.mubr.bf16.mxu0 0
        %3004 = vmatmul.mubr.bf16.gmra.mrb[0].mxu0 %v2914
        %v3005 = vpop.f32.mrb[0].mxu0
        %v3006 = vadd.f32 0.0, %v3005
        %v3007 = vpop.f32.mrb[0].mxu0
        %v3008 = vpop.f32.mrb[0].mxu0
        %v3009 = vadd.f32 0.0, %v3008
        %v3010 = vpop.f32.mrb[0].mxu0
        %3011 = vmatprep.mubr.bf16.mxu0 0
        %3012 = vmatmul.mubr.bf16.gmra.mrb[0].mxu0 %v2917
        %v3013 = vpop.f32.mrb[0].mxu0
        %v3014 = vadd.f32 0.0, %v3013
        %v3015 = vpop.f32.mrb[0].mxu0
        %v3016 = vpop.f32.mrb[0].mxu0
        %v3017 = vadd.f32 0.0, %v3016
        %v3018 = vpop.f32.mrb[0].mxu0
        %3019 = vmatprep.mubr.bf16.mxu0 0
        %3020 = vmatmul.mubr.bf16.gmra.mrb[0].mxu0 %v2920
        %v3021 = vpop.f32.mrb[0].mxu0
        %v3022 = vadd.f32 0.0, %v3021
        %v3023 = vpop.f32.mrb[0].mxu0
        %v3024 = vpop.f32.mrb[0].mxu0
        %v3025 = vadd.f32 0.0, %v3024
        %v3026 = vpop.f32.mrb[0].mxu0
        %3027 = vmatprep.mubr.bf16.mxu0 0
        %3028 = vmatmul.mubr.bf16.gmra.mrb[0].mxu0 %v2923
        %v3029 = vpop.f32.mrb[0].mxu0
        %v3030 = vadd.f32 0.0, %v3029
        %v3031 = vpop.f32.mrb[0].mxu0
        %v3032 = vpop.f32.mrb[0].mxu0
        %v3033 = vadd.f32 0.0, %v3032
        %v3034 = vpop.f32.mrb[0].mxu0
        %3035 = vmatprep.mubr.bf16.mxu0 0
        %3036 = vmatmul.mubr.bf16.gmra.mrb[0].mxu0 %v2926
        %v3037 = vpop.f32.mrb[0].mxu0
        %v3038 = vadd.f32 0.0, %v3037
        %v3039 = vpop.f32.mrb[0].mxu0
        %v3040 = vpop.f32.mrb[0].mxu0
        %v3041 = vadd.f32 0.0, %v3040
        %v3042 = vpop.f32.mrb[0].mxu0
        %3043 = vmatprep.mubr.bf16.mxu0 0
        %3044 = vmatmul.mubr.bf16.gmra.mrb[0].mxu0 %v2929
        %v3045 = vpop.f32.mrb[0].mxu0
        %v3046 = vadd.f32 0.0, %v3045
        %v3047 = vpop.f32.mrb[0].mxu0
        %v3048 = vpop.f32.mrb[0].mxu0
        %v3049 = vadd.f32 0.0, %v3048
        %v3050 = vpop.f32.mrb[0].mxu0
        %3051 = vdwg.mxu0
        %v3052 = vsel %vm2432, %v2990, -inf
        %v3053 = vsel %vm2433, %v2993, -inf
        %v3054 = vsel %vm2434, %v2998, -inf
        %v3055 = vsel %vm2435, %v3001, -inf
        %v3056 = vsel %vm2436, %v3006, -inf
        %v3057 = vsel %vm2437, %v3009, -inf
        %v3058 = vsel %vm2438, %v3014, -inf
        %v3059 = vsel %vm2439, %v3017, -inf
        %v3060 = vsel %vm2440, %v3022, -inf
        %v3061 = vsel %vm2441, %v3025, -inf
        %v3062 = vsel %vm2442, %v3030, -inf
        %v3063 = vsel %vm2443, %v3033, -inf
        %v3064 = vsel %vm2444, %v3038, -inf
        %v3065 = vsel %vm2445, %v3041, -inf
        %v3066 = vsel %vm2446, %v3046, -inf
        %v3067 = vsel %vm2447, %v3049, -inf
        %3068 = vmax.xlane.f32.xlu0 %v3052
        %v3069 = vpop.xlane.xlu0 %3068
        %3070 = vmax.xlane.f32.xlu0 %v3053
        %v3071 = vpop.xlane.xlu0 %3070
        %3072 = vmax.xlane.f32.xlu0 %v3054
        %v3073 = vpop.xlane.xlu0 %3072
        %3074 = vmax.xlane.f32.xlu0 %v3055
        %v3075 = vpop.xlane.xlu0 %3074
        %3076 = vmax.xlane.f32.xlu0 %v3056
        %v3077 = vpop.xlane.xlu0 %3076
        %3078 = vmax.xlane.f32.xlu0 %v3057
        %v3079 = vpop.xlane.xlu0 %3078
        %3080 = vmax.xlane.f32.xlu0 %v3058
        %v3081 = vpop.xlane.xlu0 %3080
        %3082 = vmax.xlane.f32.xlu0 %v3059
        %v3083 = vpop.xlane.xlu0 %3082
        %3084 = vmax.xlane.f32.xlu0 %v3060
        %v3085 = vpop.xlane.xlu0 %3084
        %3086 = vmax.xlane.f32.xlu0 %v3061
        %v3087 = vpop.xlane.xlu0 %3086
        %3088 = vmax.xlane.f32.xlu0 %v3062
        %v3089 = vpop.xlane.xlu0 %3088
        %3090 = vmax.xlane.f32.xlu0 %v3063
        %v3091 = vpop.xlane.xlu0 %3090
        %3092 = vmax.xlane.f32.xlu0 %v3064
        %v3093 = vpop.xlane.xlu0 %3092
        %3094 = vmax.xlane.f32.xlu0 %v3065
        %v3095 = vpop.xlane.xlu0 %3094
        %3096 = vmax.xlane.f32.xlu0 %v3066
        %v3097 = vpop.xlane.xlu0 %3096
        %3098 = vmax.xlane.f32.xlu0 %v3067
        %v3099 = vpop.xlane.xlu0 %3098
        %v3100 = vsub.f32 %v3052, %v3069
        %v3101 = vsub.f32 %v3053, %v3071
        %v3102 = vsub.f32 %v3054, %v3073
        %v3103 = vsub.f32 %v3055, %v3075
        %v3104 = vsub.f32 %v3056, %v3077
        %v3105 = vsub.f32 %v3057, %v3079
        %v3106 = vsub.f32 %v3058, %v3081
        %v3107 = vsub.f32 %v3059, %v3083
        %v3108 = vsub.f32 %v3060, %v3085
        %v3109 = vsub.f32 %v3061, %v3087
        %v3110 = vsub.f32 %v3062, %v3089
        %v3111 = vsub.f32 %v3063, %v3091
        %v3112 = vsub.f32 %v3064, %v3093
        %v3113 = vsub.f32 %v3065, %v3095
        %v3114 = vsub.f32 %v3066, %v3097
        %v3115 = vsub.f32 %v3067, %v3099
        %v3116 = vmul.f32 %v3100, 1.442695
        %v3117 = vpow.pop %v3116
        %v3118 = vmul.f32 %v3101, 1.442695
        %v3119 = vpow.pop %v3118
        %v3120 = vmul.f32 %v3102, 1.442695
        %v3121 = vpow.pop %v3120
        %v3122 = vmul.f32 %v3103, 1.442695
        %v3123 = vpow.pop %v3122
        %v3124 = vmul.f32 %v3104, 1.442695
        %v3125 = vpow.pop %v3124
        %v3126 = vmul.f32 %v3105, 1.442695
        %v3127 = vpow.pop %v3126
        %v3128 = vmul.f32 %v3106, 1.442695
        %v3129 = vpow.pop %v3128
        %v3130 = vmul.f32 %v3107, 1.442695
        %v3131 = vpow.pop %v3130
        %v3132 = vmul.f32 %v3108, 1.442695
        %v3133 = vpow.pop %v3132
        %v3134 = vmul.f32 %v3109, 1.442695
        %v3135 = vpow.pop %v3134
        %v3136 = vmul.f32 %v3110, 1.442695
        %v3137 = vpow.pop %v3136
        %v3138 = vmul.f32 %v3111, 1.442695
        %v3139 = vpow.pop %v3138
        %v3140 = vmul.f32 %v3112, 1.442695
        %v3141 = vpow.pop %v3140
        %v3142 = vmul.f32 %v3113, 1.442695
        %v3143 = vpow.pop %v3142
        %v3144 = vmul.f32 %v3114, 1.442695
        %v3145 = vpow.pop %v3144
        %v3146 = vmul.f32 %v3115, 1.442695
        %v3147 = vpow.pop %v3146
        %3148 = vadd.xlane.f32.xlu0 %v3117
        %v3149 = vpop.xlane.xlu0 %3148
        %3150 = vadd.xlane.f32.xlu0 %v3119
        %v3151 = vpop.xlane.xlu0 %3150
        %3152 = vadd.xlane.f32.xlu0 %v3121
        %v3153 = vpop.xlane.xlu0 %3152
        %3154 = vadd.xlane.f32.xlu0 %v3123
        %v3155 = vpop.xlane.xlu0 %3154
        %3156 = vadd.xlane.f32.xlu0 %v3125
        %v3157 = vpop.xlane.xlu0 %3156
        %3158 = vadd.xlane.f32.xlu0 %v3127
        %v3159 = vpop.xlane.xlu0 %3158
        %3160 = vadd.xlane.f32.xlu0 %v3129
        %v3161 = vpop.xlane.xlu0 %3160
        %3162 = vadd.xlane.f32.xlu0 %v3131
        %v3163 = vpop.xlane.xlu0 %3162
        %3164 = vadd.xlane.f32.xlu0 %v3133
        %v3165 = vpop.xlane.xlu0 %3164
        %3166 = vadd.xlane.f32.xlu0 %v3135
        %v3167 = vpop.xlane.xlu0 %3166
        %3168 = vadd.xlane.f32.xlu0 %v3137
        %v3169 = vpop.xlane.xlu0 %3168
        %3170 = vadd.xlane.f32.xlu0 %v3139
        %v3171 = vpop.xlane.xlu0 %3170
        %3172 = vadd.xlane.f32.xlu0 %v3141
        %v3173 = vpop.xlane.xlu0 %3172
        %3174 = vadd.xlane.f32.xlu0 %v3143
        %v3175 = vpop.xlane.xlu0 %3174
        %3176 = vadd.xlane.f32.xlu0 %v3145
        %v3177 = vpop.xlane.xlu0 %3176
        %3178 = vadd.xlane.f32.xlu0 %v3147
        %v3179 = vpop.xlane.xlu0 %3178
        %v3180 = vrcp.pop %v3149
        %v3181 = vrcp.pop %v3151
        %v3182 = vrcp.pop %v3153
        %v3183 = vrcp.pop %v3155
        %v3184 = vrcp.pop %v3157
        %v3185 = vrcp.pop %v3159
        %v3186 = vrcp.pop %v3161
        %v3187 = vrcp.pop %v3163
        %v3188 = vrcp.pop %v3165
        %v3189 = vrcp.pop %v3167
        %v3190 = vrcp.pop %v3169
        %v3191 = vrcp.pop %v3171
        %v3192 = vrcp.pop %v3173
        %v3193 = vrcp.pop %v3175
        %v3194 = vrcp.pop %v3177
        %v3195 = vrcp.pop %v3179
        %v3196 = vmul.f32 %v3117, %v3180
        %v3197 = vmul.f32 %v3119, %v3181
        %v3198 = vmul.f32 %v3121, %v3182
        %v3199 = vmul.f32 %v3123, %v3183
        %v3200 = vmul.f32 %v3125, %v3184
        %v3201 = vmul.f32 %v3127, %v3185
        %v3202 = vmul.f32 %v3129, %v3186
        %v3203 = vmul.f32 %v3131, %v3187
        %v3204 = vmul.f32 %v3133, %v3188
        %v3205 = vmul.f32 %v3135, %v3189
        %v3206 = vmul.f32 %v3137, %v3190
        %v3207 = vmul.f32 %v3139, %v3191
        %v3208 = vmul.f32 %v3141, %v3192
        %v3209 = vmul.f32 %v3143, %v3193
        %v3210 = vmul.f32 %v3145, %v3194
        %v3211 = vmul.f32 %v3147, %v3195
        %v3212 = vpack.c.bf16 %v3197, %v3196
        %v3213 = vpack.c.bf16 %v3199, %v3198
        %v3214 = vpack.c.bf16 %v3201, %v3200
        %v3215 = vpack.c.bf16 %v3203, %v3202
        %v3216 = vpack.c.bf16 %v3205, %v3204
        %v3217 = vpack.c.bf16 %v3207, %v3206
        %v3218 = vpack.c.bf16 %v3209, %v3208
        %v3219 = vpack.c.bf16 %v3211, %v3210
        %3228 = vrot.lane.b32.xlu0 %v2389, 64
        %v3229 = vpop.permute.xlu0 %3228
        %3230 = vrot.lane.b32.xlu0 %v2392, 64
        %v3231 = vpop.permute.xlu0 %3230
        %3232 = vrot.lane.b32.xlu0 %v2395, 64
        %v3233 = vpop.permute.xlu0 %3232
        %3234 = vrot.lane.b32.xlu0 %v2398, 64
        %v3235 = vpop.permute.xlu0 %3234
        %3236 = vrot.lane.b32.xlu0 %v2401, 64
        %v3237 = vpop.permute.xlu0 %3236
        %3238 = vrot.lane.b32.xlu0 %v2404, 64
        %v3239 = vpop.permute.xlu0 %3238
        %3240 = vrot.lane.b32.xlu0 %v2407, 64
        %v3241 = vpop.permute.xlu0 %3240
        %3242 = vrot.lane.b32.xlu0 %v2410, 64
        %v3243 = vpop.permute.xlu0 %3242
        %3252 = vmatprep.subr.bf16.mxu0 0
        %3253 = vmatpush1.bf16.msra.mxu0 %v3229
        %3254 = vmatprep.subr.bf16.mxu0 0
        %3255 = vmatpush1.bf16.msra.mxu0 %v3231
        %3256 = vmatprep.subr.bf16.mxu0 0
        %3257 = vmatpush1.bf16.msra.mxu0 %v3233
        %3258 = vmatprep.subr.bf16.mxu0 0
        %3259 = vmatpush1.bf16.msra.mxu0 %v3235
        %3260 = vmatprep.subr.bf16.mxu0 0
        %3261 = vmatpush1.bf16.msra.mxu0 %v3237
        %3262 = vmatprep.subr.bf16.mxu0 0
        %3263 = vmatpush1.bf16.msra.mxu0 %v3239
        %3264 = vmatprep.subr.bf16.mxu0 0
        %3265 = vmatpush1.bf16.msra.mxu0 %v3241
        %3266 = vmatprep.subr.bf16.mxu0 0
        %3267 = vmatpush1.bf16.msra.mxu0 %v3243
        %3268 = vmatprep.subr.bf16.mxu0 0
        %3269 = vmatpush1.bf16.msra.mxu0 0
        %3270 = vmatprep.subr.bf16.mxu0 0
        %3271 = vmatpush1.bf16.msra.mxu0 0
        %3272 = vmatprep.subr.bf16.mxu0 0
        %3273 = vmatpush1.bf16.msra.mxu0 0
        %3274 = vmatprep.subr.bf16.mxu0 0
        %3275 = vmatpush1.bf16.msra.mxu0 0
        %3276 = vmatprep.subr.bf16.mxu0 0
        %3277 = vmatpush1.bf16.msra.mxu0 0
        %3278 = vmatprep.subr.bf16.mxu0 0
        %3279 = vmatpush1.bf16.msra.mxu0 0
        %3280 = vmatprep.subr.bf16.mxu0 0
        %3281 = vmatpush1.bf16.msra.mxu0 0
        %3282 = vmatprep.subr.bf16.mxu0 0
        %3283 = vmatpush1.bf16.msra.mxu0 0
        %3284 = vmatprep.mubr.bf16.mxu0 0
        %3285 = vmatmul.mubr.bf16.gmra.mrb[0].mxu0 %v3212
        %v3286 = vpop.f32.mrb[0].mxu0
        %v3287 = vadd.f32 0.0, %v3286
        %v3288 = vpop.f32.mrb[0].mxu0
        %v3289 = vpop.f32.mrb[0].mxu0
        %v3290 = vadd.f32 0.0, %v3289
        %v3291 = vpop.f32.mrb[0].mxu0
        %3292 = vmatprep.mubr.bf16.mxu0 0
        %3293 = vmatmul.mubr.bf16.gmra.mrb[0].mxu0 %v3213
        %v3294 = vpop.f32.mrb[0].mxu0
        %v3295 = vadd.f32 0.0, %v3294
        %v3296 = vpop.f32.mrb[0].mxu0
        %v3297 = vpop.f32.mrb[0].mxu0
        %v3298 = vadd.f32 0.0, %v3297
        %v3299 = vpop.f32.mrb[0].mxu0
        %3300 = vmatprep.mubr.bf16.mxu0 0
        %3301 = vmatmul.mubr.bf16.gmra.mrb[0].mxu0 %v3214
        %v3302 = vpop.f32.mrb[0].mxu0
        %v3303 = vadd.f32 0.0, %v3302
        %v3304 = vpop.f32.mrb[0].mxu0
        %v3305 = vpop.f32.mrb[0].mxu0
        %v3306 = vadd.f32 0.0, %v3305
        %v3307 = vpop.f32.mrb[0].mxu0
        %3308 = vmatprep.mubr.bf16.mxu0 0
        %3309 = vmatmul.mubr.bf16.gmra.mrb[0].mxu0 %v3215
        %v3310 = vpop.f32.mrb[0].mxu0
        %v3311 = vadd.f32 0.0, %v3310
        %v3312 = vpop.f32.mrb[0].mxu0
        %v3313 = vpop.f32.mrb[0].mxu0
        %v3314 = vadd.f32 0.0, %v3313
        %v3315 = vpop.f32.mrb[0].mxu0
        %3316 = vmatprep.mubr.bf16.mxu0 0
        %3317 = vmatmul.mubr.bf16.gmra.mrb[0].mxu0 %v3216
        %v3318 = vpop.f32.mrb[0].mxu0
        %v3319 = vadd.f32 0.0, %v3318
        %v3320 = vpop.f32.mrb[0].mxu0
        %v3321 = vpop.f32.mrb[0].mxu0
        %v3322 = vadd.f32 0.0, %v3321
        %v3323 = vpop.f32.mrb[0].mxu0
        %3324 = vmatprep.mubr.bf16.mxu0 0
        %3325 = vmatmul.mubr.bf16.gmra.mrb[0].mxu0 %v3217
        %v3326 = vpop.f32.mrb[0].mxu0
        %v3327 = vadd.f32 0.0, %v3326
        %v3328 = vpop.f32.mrb[0].mxu0
        %v3329 = vpop.f32.mrb[0].mxu0
        %v3330 = vadd.f32 0.0, %v3329
        %v3331 = vpop.f32.mrb[0].mxu0
        %3332 = vmatprep.mubr.bf16.mxu0 0
        %3333 = vmatmul.mubr.bf16.gmra.mrb[0].mxu0 %v3218
        %v3334 = vpop.f32.mrb[0].mxu0
        %v3335 = vadd.f32 0.0, %v3334
        %v3336 = vpop.f32.mrb[0].mxu0
        %v3337 = vpop.f32.mrb[0].mxu0
        %v3338 = vadd.f32 0.0, %v3337
        %v3339 = vpop.f32.mrb[0].mxu0
        %3340 = vmatprep.mubr.bf16.mxu0 0
        %3341 = vmatmul.mubr.bf16.gmra.mrb[0].mxu0 %v3219
        %v3342 = vpop.f32.mrb[0].mxu0
        %v3343 = vadd.f32 0.0, %v3342
        %v3344 = vpop.f32.mrb[0].mxu0
        %v3345 = vpop.f32.mrb[0].mxu0
        %v3346 = vadd.f32 0.0, %v3345
        %v3347 = vpop.f32.mrb[0].mxu0
        %3348 = vdwg.mxu0
        %v3350 = vsel %vm2448, %v2342, 0
        %v3353 = vsel %vm2448, %v2345, 0
        %v3356 = vsel %vm2448, %v2348, 0
        %v3359 = vsel %vm2448, %v2351, 0
        %v3362 = vsel %vm2448, %v2354, 0
        %v3365 = vsel %vm2448, %v2357, 0
        %v3368 = vsel %vm2448, %v2360, 0
        %v3371 = vsel %vm2448, %v2363, 0
        %v3374 = vsel %vm2448, %v2366, 0
        %v3377 = vsel %vm2448, %v2369, 0
        %v3380 = vsel %vm2448, %v2372, 0
        %v3383 = vsel %vm2448, %v2375, 0
        %v3386 = vsel %vm2448, %v2378, 0
        %v3389 = vsel %vm2448, %v2381, 0
        %v3392 = vsel %vm2448, %v2384, 0
        %v3395 = vsel %vm2448, %v2387, 0
        %3397 = vmatprep.subr.bf16.mxu0 0
        %3398 = vmatpush1.bf16.xpose.msra.mxu0 %v3374
        %3399 = vmatprep.subr.bf16.mxu0 0
        %3400 = vmatpush1.bf16.xpose.msra.mxu0 %v3377
        %3401 = vmatprep.subr.bf16.mxu0 0
        %3402 = vmatpush1.bf16.xpose.msra.mxu0 %v3380
        %3403 = vmatprep.subr.bf16.mxu0 0
        %3404 = vmatpush1.bf16.xpose.msra.mxu0 %v3383
        %3405 = vmatprep.subr.bf16.mxu0 0
        %3406 = vmatpush1.bf16.xpose.msra.mxu0 %v3386
        %3407 = vmatprep.subr.bf16.mxu0 0
        %3408 = vmatpush1.bf16.xpose.msra.mxu0 %v3389
        %3409 = vmatprep.subr.bf16.mxu0 0
        %3410 = vmatpush1.bf16.xpose.msra.mxu0 %v3392
        %3411 = vmatprep.subr.bf16.mxu0 0
        %3412 = vmatpush1.bf16.xpose.msra.mxu0 %v3395
        %3413 = vmatprep.subr.bf16.mxu0 0
        %3414 = vmatpush1.bf16.xpose.msra.mxu0 0
        %3415 = vmatprep.subr.bf16.mxu0 0
        %3416 = vmatpush1.bf16.xpose.msra.mxu0 0
        %3417 = vmatprep.subr.bf16.mxu0 0
        %3418 = vmatpush1.bf16.xpose.msra.mxu0 0
        %3419 = vmatprep.subr.bf16.mxu0 0
        %3420 = vmatpush1.bf16.xpose.msra.mxu0 0
        %3421 = vmatprep.subr.bf16.mxu0 0
        %3422 = vmatpush1.bf16.xpose.msra.mxu0 0
        %3423 = vmatprep.subr.bf16.mxu0 0
        %3424 = vmatpush1.bf16.xpose.msra.mxu0 0
        %3425 = vmatprep.subr.bf16.mxu0 0
        %3426 = vmatpush1.bf16.xpose.msra.mxu0 0
        %3427 = vmatprep.subr.bf16.mxu0 0
        %3428 = vmatpush1.bf16.xpose.msra.mxu0 0
        %3429 = vmatprep.mubr.bf16.mxu0 0
        %3430 = vmatmul.mubr.bf16.gmra.mrb[0].mxu0 %v3350
        %v3431 = vpop.f32.mrb[0].mxu0
        %v3432 = vadd.f32 0.0, %v3431
        %v3433 = vpop.f32.mrb[0].mxu0
        %v3434 = vpop.f32.mrb[0].mxu0
        %v3435 = vadd.f32 0.0, %v3434
        %v3436 = vpop.f32.mrb[0].mxu0
        %3437 = vmatprep.mubr.bf16.mxu0 0
        %3438 = vmatmul.mubr.bf16.gmra.mrb[0].mxu0 %v3353
        %v3439 = vpop.f32.mrb[0].mxu0
        %v3440 = vadd.f32 0.0, %v3439
        %v3441 = vpop.f32.mrb[0].mxu0
        %v3442 = vpop.f32.mrb[0].mxu0
        %v3443 = vadd.f32 0.0, %v3442
        %v3444 = vpop.f32.mrb[0].mxu0
        %3445 = vmatprep.mubr.bf16.mxu0 0
        %3446 = vmatmul.mubr.bf16.gmra.mrb[0].mxu0 %v3356
        %v3447 = vpop.f32.mrb[0].mxu0
        %v3448 = vadd.f32 0.0, %v3447
        %v3449 = vpop.f32.mrb[0].mxu0
        %v3450 = vpop.f32.mrb[0].mxu0
        %v3451 = vadd.f32 0.0, %v3450
        %v3452 = vpop.f32.mrb[0].mxu0
        %3453 = vmatprep.mubr.bf16.mxu0 0
        %3454 = vmatmul.mubr.bf16.gmra.mrb[0].mxu0 %v3359
        %v3455 = vpop.f32.mrb[0].mxu0
        %v3456 = vadd.f32 0.0, %v3455
        %v3457 = vpop.f32.mrb[0].mxu0
        %v3458 = vpop.f32.mrb[0].mxu0
        %v3459 = vadd.f32 0.0, %v3458
        %v3460 = vpop.f32.mrb[0].mxu0
        %3461 = vmatprep.mubr.bf16.mxu0 0
        %3462 = vmatmul.mubr.bf16.gmra.mrb[0].mxu0 %v3362
        %v3463 = vpop.f32.mrb[0].mxu0
        %v3464 = vadd.f32 0.0, %v3463
        %v3465 = vpop.f32.mrb[0].mxu0
        %v3466 = vpop.f32.mrb[0].mxu0
        %v3467 = vadd.f32 0.0, %v3466
        %v3468 = vpop.f32.mrb[0].mxu0
        %3469 = vmatprep.mubr.bf16.mxu0 0
        %3470 = vmatmul.mubr.bf16.gmra.mrb[0].mxu0 %v3365
        %v3471 = vpop.f32.mrb[0].mxu0
        %v3472 = vadd.f32 0.0, %v3471
        %v3473 = vpop.f32.mrb[0].mxu0
        %v3474 = vpop.f32.mrb[0].mxu0
        %v3475 = vadd.f32 0.0, %v3474
        %v3476 = vpop.f32.mrb[0].mxu0
        %3477 = vmatprep.mubr.bf16.mxu0 0
        %3478 = vmatmul.mubr.bf16.gmra.mrb[0].mxu0 %v3368
        %v3479 = vpop.f32.mrb[0].mxu0
        %v3480 = vadd.f32 0.0, %v3479
        %v3481 = vpop.f32.mrb[0].mxu0
        %v3482 = vpop.f32.mrb[0].mxu0
        %v3483 = vadd.f32 0.0, %v3482
        %v3484 = vpop.f32.mrb[0].mxu0
        %3485 = vmatprep.mubr.bf16.mxu0 0
        %3486 = vmatmul.mubr.bf16.gmra.mrb[0].mxu0 %v3371
        %v3487 = vpop.f32.mrb[0].mxu0
        %v3488 = vadd.f32 0.0, %v3487
        %v3489 = vpop.f32.mrb[0].mxu0
        %v3490 = vpop.f32.mrb[0].mxu0
        %v3491 = vadd.f32 0.0, %v3490
        %v3492 = vpop.f32.mrb[0].mxu0
        %3493 = vdwg.mxu0
        %v3494 = vsel %vm2432, %v3432, -inf
        %v3495 = vsel %vm2433, %v3435, -inf
        %v3496 = vsel %vm2434, %v3440, -inf
        %v3497 = vsel %vm2435, %v3443, -inf
        %v3498 = vsel %vm2436, %v3448, -inf
        %v3499 = vsel %vm2437, %v3451, -inf
        %v3500 = vsel %vm2438, %v3456, -inf
        %v3501 = vsel %vm2439, %v3459, -inf
        %v3502 = vsel %vm2440, %v3464, -inf
        %v3503 = vsel %vm2441, %v3467, -inf
        %v3504 = vsel %vm2442, %v3472, -inf
        %v3505 = vsel %vm2443, %v3475, -inf
        %v3506 = vsel %vm2444, %v3480, -inf
        %v3507 = vsel %vm2445, %v3483, -inf
        %v3508 = vsel %vm2446, %v3488, -inf
        %v3509 = vsel %vm2447, %v3491, -inf
        %3510 = vmax.xlane.f32.xlu0 %v3494
        %v3511 = vpop.xlane.xlu0 %3510
        %3512 = vmax.xlane.f32.xlu0 %v3495
        %v3513 = vpop.xlane.xlu0 %3512
        %3514 = vmax.xlane.f32.xlu0 %v3496
        %v3515 = vpop.xlane.xlu0 %3514
        %3516 = vmax.xlane.f32.xlu0 %v3497
        %v3517 = vpop.xlane.xlu0 %3516
        %3518 = vmax.xlane.f32.xlu0 %v3498
        %v3519 = vpop.xlane.xlu0 %3518
        %3520 = vmax.xlane.f32.xlu0 %v3499
        %v3521 = vpop.xlane.xlu0 %3520
        %3522 = vmax.xlane.f32.xlu0 %v3500
        %v3523 = vpop.xlane.xlu0 %3522
        %3524 = vmax.xlane.f32.xlu0 %v3501
        %v3525 = vpop.xlane.xlu0 %3524
        %3526 = vmax.xlane.f32.xlu0 %v3502
        %v3527 = vpop.xlane.xlu0 %3526
        %3528 = vmax.xlane.f32.xlu0 %v3503
        %v3529 = vpop.xlane.xlu0 %3528
        %3530 = vmax.xlane.f32.xlu0 %v3504
        %v3531 = vpop.xlane.xlu0 %3530
        %3532 = vmax.xlane.f32.xlu0 %v3505
        %v3533 = vpop.xlane.xlu0 %3532
        %3534 = vmax.xlane.f32.xlu0 %v3506
        %v3535 = vpop.xlane.xlu0 %3534
        %3536 = vmax.xlane.f32.xlu0 %v3507
        %v3537 = vpop.xlane.xlu0 %3536
        %3538 = vmax.xlane.f32.xlu0 %v3508
        %v3539 = vpop.xlane.xlu0 %3538
        %3540 = vmax.xlane.f32.xlu0 %v3509
        %v3541 = vpop.xlane.xlu0 %3540
        %v3542 = vsub.f32 %v3494, %v3511
        %v3543 = vsub.f32 %v3495, %v3513
        %v3544 = vsub.f32 %v3496, %v3515
        %v3545 = vsub.f32 %v3497, %v3517
        %v3546 = vsub.f32 %v3498, %v3519
        %v3547 = vsub.f32 %v3499, %v3521
        %v3548 = vsub.f32 %v3500, %v3523
        %v3549 = vsub.f32 %v3501, %v3525
        %v3550 = vsub.f32 %v3502, %v3527
        %v3551 = vsub.f32 %v3503, %v3529
        %v3552 = vsub.f32 %v3504, %v3531
        %v3553 = vsub.f32 %v3505, %v3533
        %v3554 = vsub.f32 %v3506, %v3535
        %v3555 = vsub.f32 %v3507, %v3537
        %v3556 = vsub.f32 %v3508, %v3539
        %v3557 = vsub.f32 %v3509, %v3541
        %v3558 = vmul.f32 %v3542, 1.442695
        %v3559 = vpow.pop %v3558
        %v3560 = vmul.f32 %v3543, 1.442695
        %v3561 = vpow.pop %v3560
        %v3562 = vmul.f32 %v3544, 1.442695
        %v3563 = vpow.pop %v3562
        %v3564 = vmul.f32 %v3545, 1.442695
        %v3565 = vpow.pop %v3564
        %v3566 = vmul.f32 %v3546, 1.442695
        %v3567 = vpow.pop %v3566
        %v3568 = vmul.f32 %v3547, 1.442695
        %v3569 = vpow.pop %v3568
        %v3570 = vmul.f32 %v3548, 1.442695
        %v3571 = vpow.pop %v3570
        %v3572 = vmul.f32 %v3549, 1.442695
        %v3573 = vpow.pop %v3572
        %v3574 = vmul.f32 %v3550, 1.442695
        %v3575 = vpow.pop %v3574
        %v3576 = vmul.f32 %v3551, 1.442695
        %v3577 = vpow.pop %v3576
        %v3578 = vmul.f32 %v3552, 1.442695
        %v3579 = vpow.pop %v3578
        %v3580 = vmul.f32 %v3553, 1.442695
        %v3581 = vpow.pop %v3580
        %v3582 = vmul.f32 %v3554, 1.442695
        %v3583 = vpow.pop %v3582
        %v3584 = vmul.f32 %v3555, 1.442695
        %v3585 = vpow.pop %v3584
        %v3586 = vmul.f32 %v3556, 1.442695
        %v3587 = vpow.pop %v3586
        %v3588 = vmul.f32 %v3557, 1.442695
        %v3589 = vpow.pop %v3588
        %3590 = vadd.xlane.f32.xlu0 %v3559
        %v3591 = vpop.xlane.xlu0 %3590
        %3592 = vadd.xlane.f32.xlu0 %v3561
        %v3593 = vpop.xlane.xlu0 %3592
        %3594 = vadd.xlane.f32.xlu0 %v3563
        %v3595 = vpop.xlane.xlu0 %3594
        %3596 = vadd.xlane.f32.xlu0 %v3565
        %v3597 = vpop.xlane.xlu0 %3596
        %3598 = vadd.xlane.f32.xlu0 %v3567
        %v3599 = vpop.xlane.xlu0 %3598
        %3600 = vadd.xlane.f32.xlu0 %v3569
        %v3601 = vpop.xlane.xlu0 %3600
        %3602 = vadd.xlane.f32.xlu0 %v3571
        %v3603 = vpop.xlane.xlu0 %3602
        %3604 = vadd.xlane.f32.xlu0 %v3573
        %v3605 = vpop.xlane.xlu0 %3604
        %3606 = vadd.xlane.f32.xlu0 %v3575
        %v3607 = vpop.xlane.xlu0 %3606
        %3608 = vadd.xlane.f32.xlu0 %v3577
        %v3609 = vpop.xlane.xlu0 %3608
        %3610 = vadd.xlane.f32.xlu0 %v3579
        %v3611 = vpop.xlane.xlu0 %3610
        %3612 = vadd.xlane.f32.xlu0 %v3581
        %v3613 = vpop.xlane.xlu0 %3612
        %3614 = vadd.xlane.f32.xlu0 %v3583
        %v3615 = vpop.xlane.xlu0 %3614
        %3616 = vadd.xlane.f32.xlu0 %v3585
        %v3617 = vpop.xlane.xlu0 %3616
        %3618 = vadd.xlane.f32.xlu0 %v3587
        %v3619 = vpop.xlane.xlu0 %3618
        %3620 = vadd.xlane.f32.xlu0 %v3589
        %v3621 = vpop.xlane.xlu0 %3620
        %v3622 = vrcp.pop %v3591
        %v3623 = vrcp.pop %v3593
        %v3624 = vrcp.pop %v3595
        %v3625 = vrcp.pop %v3597
        %v3626 = vrcp.pop %v3599
        %v3627 = vrcp.pop %v3601
        %v3628 = vrcp.pop %v3603
        %v3629 = vrcp.pop %v3605
        %v3630 = vrcp.pop %v3607
        %v3631 = vrcp.pop %v3609
        %v3632 = vrcp.pop %v3611
        %v3633 = vrcp.pop %v3613
        %v3634 = vrcp.pop %v3615
        %v3635 = vrcp.pop %v3617
        %v3636 = vrcp.pop %v3619
        %v3637 = vrcp.pop %v3621
        %v3638 = vmul.f32 %v3559, %v3622
        %v3639 = vmul.f32 %v3561, %v3623
        %v3640 = vmul.f32 %v3563, %v3624
        %v3641 = vmul.f32 %v3565, %v3625
        %v3642 = vmul.f32 %v3567, %v3626
        %v3643 = vmul.f32 %v3569, %v3627
        %v3644 = vmul.f32 %v3571, %v3628
        %v3645 = vmul.f32 %v3573, %v3629
        %v3646 = vmul.f32 %v3575, %v3630
        %v3647 = vmul.f32 %v3577, %v3631
        %v3648 = vmul.f32 %v3579, %v3632
        %v3649 = vmul.f32 %v3581, %v3633
        %v3650 = vmul.f32 %v3583, %v3634
        %v3651 = vmul.f32 %v3585, %v3635
        %v3652 = vmul.f32 %v3587, %v3636
        %v3653 = vmul.f32 %v3589, %v3637
        %v3654 = vpack.c.bf16 %v3639, %v3638
        %v3655 = vpack.c.bf16 %v3641, %v3640
        %v3656 = vpack.c.bf16 %v3643, %v3642
        %v3657 = vpack.c.bf16 %v3645, %v3644
        %v3658 = vpack.c.bf16 %v3647, %v3646
        %v3659 = vpack.c.bf16 %v3649, %v3648
        %v3660 = vpack.c.bf16 %v3651, %v3650
        %v3661 = vpack.c.bf16 %v3653, %v3652
        %3662 = vmatprep.subr.bf16.mxu0 0
        %3663 = vmatpush1.bf16.msra.mxu0 %v2390
        %3664 = vmatprep.subr.bf16.mxu0 0
        %3665 = vmatpush1.bf16.msra.mxu0 %v2393
        %3666 = vmatprep.subr.bf16.mxu0 0
        %3667 = vmatpush1.bf16.msra.mxu0 %v2396
        %3668 = vmatprep.subr.bf16.mxu0 0
        %3669 = vmatpush1.bf16.msra.mxu0 %v2399
        %3670 = vmatprep.subr.bf16.mxu0 0
        %3671 = vmatpush1.bf16.msra.mxu0 %v2402
        %3672 = vmatprep.subr.bf16.mxu0 0
        %3673 = vmatpush1.bf16.msra.mxu0 %v2405
        %3674 = vmatprep.subr.bf16.mxu0 0
        %3675 = vmatpush1.bf16.msra.mxu0 %v2408
        %3676 = vmatprep.subr.bf16.mxu0 0
        %3677 = vmatpush1.bf16.msra.mxu0 %v2411
        %3678 = vmatprep.subr.bf16.mxu0 0
        %3679 = vmatpush1.bf16.msra.mxu0 0
        %3680 = vmatprep.subr.bf16.mxu0 0
        %3681 = vmatpush1.bf16.msra.mxu0 0
        %3682 = vmatprep.subr.bf16.mxu0 0
        %3683 = vmatpush1.bf16.msra.mxu0 0
        %3684 = vmatprep.subr.bf16.mxu0 0
        %3685 = vmatpush1.bf16.msra.mxu0 0
        %3686 = vmatprep.subr.bf16.mxu0 0
        %3687 = vmatpush1.bf16.msra.mxu0 0
        %3688 = vmatprep.subr.bf16.mxu0 0
        %3689 = vmatpush1.bf16.msra.mxu0 0
        %3690 = vmatprep.subr.bf16.mxu0 0
        %3691 = vmatpush1.bf16.msra.mxu0 0
        %3692 = vmatprep.subr.bf16.mxu0 0
        %3693 = vmatpush1.bf16.msra.mxu0 0
        %3694 = vmatprep.mubr.bf16.mxu0 0
        %3695 = vmatmul.mubr.bf16.gmra.mrb[0].mxu0 %v3654
        %v3696 = vpop.f32.mrb[0].mxu0
        %v3697 = vadd.f32 0.0, %v3696
        %v3698 = vpop.f32.mrb[0].mxu0
        %v3699 = vpop.f32.mrb[0].mxu0
        %v3700 = vadd.f32 0.0, %v3699
        %v3701 = vpop.f32.mrb[0].mxu0
        %3702 = vmatprep.mubr.bf16.mxu0 0
        %3703 = vmatmul.mubr.bf16.gmra.mrb[0].mxu0 %v3655
        %v3704 = vpop.f32.mrb[0].mxu0
        %v3705 = vadd.f32 0.0, %v3704
        %v3706 = vpop.f32.mrb[0].mxu0
        %v3707 = vpop.f32.mrb[0].mxu0
        %v3708 = vadd.f32 0.0, %v3707
        %v3709 = vpop.f32.mrb[0].mxu0
        %3710 = vmatprep.mubr.bf16.mxu0 0
        %3711 = vmatmul.mubr.bf16.gmra.mrb[0].mxu0 %v3656
        %v3712 = vpop.f32.mrb[0].mxu0
        %v3713 = vadd.f32 0.0, %v3712
        %v3714 = vpop.f32.mrb[0].mxu0
        %v3715 = vpop.f32.mrb[0].mxu0
        %v3716 = vadd.f32 0.0, %v3715
        %v3717 = vpop.f32.mrb[0].mxu0
        %3718 = vmatprep.mubr.bf16.mxu0 0
        %3719 = vmatmul.mubr.bf16.gmra.mrb[0].mxu0 %v3657
        %v3720 = vpop.f32.mrb[0].mxu0
        %v3721 = vadd.f32 0.0, %v3720
        %v3722 = vpop.f32.mrb[0].mxu0
        %v3723 = vpop.f32.mrb[0].mxu0
        %v3724 = vadd.f32 0.0, %v3723
        %v3725 = vpop.f32.mrb[0].mxu0
        %3726 = vmatprep.mubr.bf16.mxu0 0
        %3727 = vmatmul.mubr.bf16.gmra.mrb[0].mxu0 %v3658
        %v3728 = vpop.f32.mrb[0].mxu0
        %v3729 = vadd.f32 0.0, %v3728
        %v3730 = vpop.f32.mrb[0].mxu0
        %v3731 = vpop.f32.mrb[0].mxu0
        %v3732 = vadd.f32 0.0, %v3731
        %v3733 = vpop.f32.mrb[0].mxu0
        %3734 = vmatprep.mubr.bf16.mxu0 0
        %3735 = vmatmul.mubr.bf16.gmra.mrb[0].mxu0 %v3659
        %v3736 = vpop.f32.mrb[0].mxu0
        %v3737 = vadd.f32 0.0, %v3736
        %v3738 = vpop.f32.mrb[0].mxu0
        %v3739 = vpop.f32.mrb[0].mxu0
        %v3740 = vadd.f32 0.0, %v3739
        %v3741 = vpop.f32.mrb[0].mxu0
        %3742 = vmatprep.mubr.bf16.mxu0 0
        %3743 = vmatmul.mubr.bf16.gmra.mrb[0].mxu0 %v3660
        %v3744 = vpop.f32.mrb[0].mxu0
        %v3745 = vadd.f32 0.0, %v3744
        %v3746 = vpop.f32.mrb[0].mxu0
        %v3747 = vpop.f32.mrb[0].mxu0
        %v3748 = vadd.f32 0.0, %v3747
        %v3749 = vpop.f32.mrb[0].mxu0
        %3750 = vmatprep.mubr.bf16.mxu0 0
        %3751 = vmatmul.mubr.bf16.gmra.mrb[0].mxu0 %v3661
        %v3752 = vpop.f32.mrb[0].mxu0
        %v3753 = vadd.f32 0.0, %v3752
        %v3754 = vpop.f32.mrb[0].mxu0
        %v3755 = vpop.f32.mrb[0].mxu0
        %v3756 = vadd.f32 0.0, %v3755
        %v3757 = vpop.f32.mrb[0].mxu0
        %3758 = vdwg.mxu0
        %3767 = vrot.lane.b32.xlu0 %v2342, 64
        %v3768 = vpop.permute.xlu0 %3767
        %3769 = vrot.lane.b32.xlu0 %v2345, 64
        %v3770 = vpop.permute.xlu0 %3769
        %3771 = vrot.lane.b32.xlu0 %v2348, 64
        %v3772 = vpop.permute.xlu0 %3771
        %3773 = vrot.lane.b32.xlu0 %v2351, 64
        %v3774 = vpop.permute.xlu0 %3773
        %3775 = vrot.lane.b32.xlu0 %v2354, 64
        %v3776 = vpop.permute.xlu0 %3775
        %3777 = vrot.lane.b32.xlu0 %v2357, 64
        %v3778 = vpop.permute.xlu0 %3777
        %3779 = vrot.lane.b32.xlu0 %v2360, 64
        %v3780 = vpop.permute.xlu0 %3779
        %3781 = vrot.lane.b32.xlu0 %v2363, 64
        %v3782 = vpop.permute.xlu0 %3781
        %3791 = vrot.lane.b32.xlu0 %v2366, 64
        %v3792 = vpop.permute.xlu0 %3791
        %3793 = vrot.lane.b32.xlu0 %v2369, 64
        %v3794 = vpop.permute.xlu0 %3793
        %3795 = vrot.lane.b32.xlu0 %v2372, 64
        %v3796 = vpop.permute.xlu0 %3795
        %3797 = vrot.lane.b32.xlu0 %v2375, 64
        %v3798 = vpop.permute.xlu0 %3797
        %3799 = vrot.lane.b32.xlu0 %v2378, 64
        %v3800 = vpop.permute.xlu0 %3799
        %3801 = vrot.lane.b32.xlu0 %v2381, 64
        %v3802 = vpop.permute.xlu0 %3801
        %3803 = vrot.lane.b32.xlu0 %v2384, 64
        %v3804 = vpop.permute.xlu0 %3803
        %3805 = vrot.lane.b32.xlu0 %v2387, 64
        %v3806 = vpop.permute.xlu0 %3805
        %v3808 = vsel %vm2448, %v3768, 0
        %v3811 = vsel %vm2448, %v3770, 0
        %v3814 = vsel %vm2448, %v3772, 0
        %v3817 = vsel %vm2448, %v3774, 0
        %v3820 = vsel %vm2448, %v3776, 0
        %v3823 = vsel %vm2448, %v3778, 0
        %v3826 = vsel %vm2448, %v3780, 0
        %v3829 = vsel %vm2448, %v3782, 0
        %v3832 = vsel %vm2448, %v3792, 0
        %v3835 = vsel %vm2448, %v3794, 0
        %v3838 = vsel %vm2448, %v3796, 0
        %v3841 = vsel %vm2448, %v3798, 0
        %v3844 = vsel %vm2448, %v3800, 0
        %v3847 = vsel %vm2448, %v3802, 0
        %v3850 = vsel %vm2448, %v3804, 0
        %v3853 = vsel %vm2448, %v3806, 0
        %3855 = vmatprep.subr.bf16.mxu0 0
        %3856 = vmatpush1.bf16.xpose.msra.mxu0 %v3832
        %3857 = vmatprep.subr.bf16.mxu0 0
        %3858 = vmatpush1.bf16.xpose.msra.mxu0 %v3835
        %3859 = vmatprep.subr.bf16.mxu0 0
        %3860 = vmatpush1.bf16.xpose.msra.mxu0 %v3838
        %3861 = vmatprep.subr.bf16.mxu0 0
        %3862 = vmatpush1.bf16.xpose.msra.mxu0 %v3841
        %3863 = vmatprep.subr.bf16.mxu0 0
        %3864 = vmatpush1.bf16.xpose.msra.mxu0 %v3844
        %3865 = vmatprep.subr.bf16.mxu0 0
        %3866 = vmatpush1.bf16.xpose.msra.mxu0 %v3847
        %3867 = vmatprep.subr.bf16.mxu0 0
        %3868 = vmatpush1.bf16.xpose.msra.mxu0 %v3850
        %3869 = vmatprep.subr.bf16.mxu0 0
        %3870 = vmatpush1.bf16.xpose.msra.mxu0 %v3853
        %3871 = vmatprep.subr.bf16.mxu0 0
        %3872 = vmatpush1.bf16.xpose.msra.mxu0 0
        %3873 = vmatprep.subr.bf16.mxu0 0
        %3874 = vmatpush1.bf16.xpose.msra.mxu0 0
        %3875 = vmatprep.subr.bf16.mxu0 0
        %3876 = vmatpush1.bf16.xpose.msra.mxu0 0
        %3877 = vmatprep.subr.bf16.mxu0 0
        %3878 = vmatpush1.bf16.xpose.msra.mxu0 0
        %3879 = vmatprep.subr.bf16.mxu0 0
        %3880 = vmatpush1.bf16.xpose.msra.mxu0 0
        %3881 = vmatprep.subr.bf16.mxu0 0
        %3882 = vmatpush1.bf16.xpose.msra.mxu0 0
        %3883 = vmatprep.subr.bf16.mxu0 0
        %3884 = vmatpush1.bf16.xpose.msra.mxu0 0
        %3885 = vmatprep.subr.bf16.mxu0 0
        %3886 = vmatpush1.bf16.xpose.msra.mxu0 0
        %3887 = vmatprep.mubr.bf16.mxu0 0
        %3888 = vmatmul.mubr.bf16.gmra.mrb[0].mxu0 %v3808
        %v3889 = vpop.f32.mrb[0].mxu0
        %v3890 = vadd.f32 0.0, %v3889
        %v3891 = vpop.f32.mrb[0].mxu0
        %v3892 = vpop.f32.mrb[0].mxu0
        %v3893 = vadd.f32 0.0, %v3892
        %v3894 = vpop.f32.mrb[0].mxu0
        %3895 = vmatprep.mubr.bf16.mxu0 0
        %3896 = vmatmul.mubr.bf16.gmra.mrb[0].mxu0 %v3811
        %v3897 = vpop.f32.mrb[0].mxu0
        %v3898 = vadd.f32 0.0, %v3897
        %v3899 = vpop.f32.mrb[0].mxu0
        %v3900 = vpop.f32.mrb[0].mxu0
        %v3901 = vadd.f32 0.0, %v3900
        %v3902 = vpop.f32.mrb[0].mxu0
        %3903 = vmatprep.mubr.bf16.mxu0 0
        %3904 = vmatmul.mubr.bf16.gmra.mrb[0].mxu0 %v3814
        %v3905 = vpop.f32.mrb[0].mxu0
        %v3906 = vadd.f32 0.0, %v3905
        %v3907 = vpop.f32.mrb[0].mxu0
        %v3908 = vpop.f32.mrb[0].mxu0
        %v3909 = vadd.f32 0.0, %v3908
        %v3910 = vpop.f32.mrb[0].mxu0
        %3911 = vmatprep.mubr.bf16.mxu0 0
        %3912 = vmatmul.mubr.bf16.gmra.mrb[0].mxu0 %v3817
        %v3913 = vpop.f32.mrb[0].mxu0
        %v3914 = vadd.f32 0.0, %v3913
        %v3915 = vpop.f32.mrb[0].mxu0
        %v3916 = vpop.f32.mrb[0].mxu0
        %v3917 = vadd.f32 0.0, %v3916
        %v3918 = vpop.f32.mrb[0].mxu0
        %3919 = vmatprep.mubr.bf16.mxu0 0
        %3920 = vmatmul.mubr.bf16.gmra.mrb[0].mxu0 %v3820
        %v3921 = vpop.f32.mrb[0].mxu0
        %v3922 = vadd.f32 0.0, %v3921
        %v3923 = vpop.f32.mrb[0].mxu0
        %v3924 = vpop.f32.mrb[0].mxu0
        %v3925 = vadd.f32 0.0, %v3924
        %v3926 = vpop.f32.mrb[0].mxu0
        %3927 = vmatprep.mubr.bf16.mxu0 0
        %3928 = vmatmul.mubr.bf16.gmra.mrb[0].mxu0 %v3823
        %v3929 = vpop.f32.mrb[0].mxu0
        %v3930 = vadd.f32 0.0, %v3929
        %v3931 = vpop.f32.mrb[0].mxu0
        %v3932 = vpop.f32.mrb[0].mxu0
        %v3933 = vadd.f32 0.0, %v3932
        %v3934 = vpop.f32.mrb[0].mxu0
        %3935 = vmatprep.mubr.bf16.mxu0 0
        %3936 = vmatmul.mubr.bf16.gmra.mrb[0].mxu0 %v3826
        %v3937 = vpop.f32.mrb[0].mxu0
        %v3938 = vadd.f32 0.0, %v3937
        %v3939 = vpop.f32.mrb[0].mxu0
        %v3940 = vpop.f32.mrb[0].mxu0
        %v3941 = vadd.f32 0.0, %v3940
        %v3942 = vpop.f32.mrb[0].mxu0
        %3943 = vmatprep.mubr.bf16.mxu0 0
        %3944 = vmatmul.mubr.bf16.gmra.mrb[0].mxu0 %v3829
        %v3945 = vpop.f32.mrb[0].mxu0
        %v3946 = vadd.f32 0.0, %v3945
        %v3947 = vpop.f32.mrb[0].mxu0
        %v3948 = vpop.f32.mrb[0].mxu0
        %v3949 = vadd.f32 0.0, %v3948
        %v3950 = vpop.f32.mrb[0].mxu0
        %3951 = vdwg.mxu0
        %v3952 = vsel %vm2432, %v3890, -inf
        %v3953 = vsel %vm2433, %v3893, -inf
        %v3954 = vsel %vm2434, %v3898, -inf
        %v3955 = vsel %vm2435, %v3901, -inf
        %v3956 = vsel %vm2436, %v3906, -inf
        %v3957 = vsel %vm2437, %v3909, -inf
        %v3958 = vsel %vm2438, %v3914, -inf
        %v3959 = vsel %vm2439, %v3917, -inf
        %v3960 = vsel %vm2440, %v3922, -inf
        %v3961 = vsel %vm2441, %v3925, -inf
        %v3962 = vsel %vm2442, %v3930, -inf
        %v3963 = vsel %vm2443, %v3933, -inf
        %v3964 = vsel %vm2444, %v3938, -inf
        %v3965 = vsel %vm2445, %v3941, -inf
        %v3966 = vsel %vm2446, %v3946, -inf
        %v3967 = vsel %vm2447, %v3949, -inf
        %3968 = vmax.xlane.f32.xlu0 %v3952
        %v3969 = vpop.xlane.xlu0 %3968
        %3970 = vmax.xlane.f32.xlu0 %v3953
        %v3971 = vpop.xlane.xlu0 %3970
        %3972 = vmax.xlane.f32.xlu0 %v3954
        %v3973 = vpop.xlane.xlu0 %3972
        %3974 = vmax.xlane.f32.xlu0 %v3955
        %v3975 = vpop.xlane.xlu0 %3974
        %3976 = vmax.xlane.f32.xlu0 %v3956
        %v3977 = vpop.xlane.xlu0 %3976
        %3978 = vmax.xlane.f32.xlu0 %v3957
        %v3979 = vpop.xlane.xlu0 %3978
        %3980 = vmax.xlane.f32.xlu0 %v3958
        %v3981 = vpop.xlane.xlu0 %3980
        %3982 = vmax.xlane.f32.xlu0 %v3959
        %v3983 = vpop.xlane.xlu0 %3982
        %3984 = vmax.xlane.f32.xlu0 %v3960
        %v3985 = vpop.xlane.xlu0 %3984
        %3986 = vmax.xlane.f32.xlu0 %v3961
        %v3987 = vpop.xlane.xlu0 %3986
        %3988 = vmax.xlane.f32.xlu0 %v3962
        %v3989 = vpop.xlane.xlu0 %3988
        %3990 = vmax.xlane.f32.xlu0 %v3963
        %v3991 = vpop.xlane.xlu0 %3990
        %3992 = vmax.xlane.f32.xlu0 %v3964
        %v3993 = vpop.xlane.xlu0 %3992
        %3994 = vmax.xlane.f32.xlu0 %v3965
        %v3995 = vpop.xlane.xlu0 %3994
        %3996 = vmax.xlane.f32.xlu0 %v3966
        %v3997 = vpop.xlane.xlu0 %3996
        %3998 = vmax.xlane.f32.xlu0 %v3967
        %v3999 = vpop.xlane.xlu0 %3998
        %v4000 = vsub.f32 %v3952, %v3969
        %v4001 = vsub.f32 %v3953, %v3971
        %v4002 = vsub.f32 %v3954, %v3973
        %v4003 = vsub.f32 %v3955, %v3975
        %v4004 = vsub.f32 %v3956, %v3977
        %v4005 = vsub.f32 %v3957, %v3979
        %v4006 = vsub.f32 %v3958, %v3981
        %v4007 = vsub.f32 %v3959, %v3983
        %v4008 = vsub.f32 %v3960, %v3985
        %v4009 = vsub.f32 %v3961, %v3987
        %v4010 = vsub.f32 %v3962, %v3989
        %v4011 = vsub.f32 %v3963, %v3991
        %v4012 = vsub.f32 %v3964, %v3993
        %v4013 = vsub.f32 %v3965, %v3995
        %v4014 = vsub.f32 %v3966, %v3997
        %v4015 = vsub.f32 %v3967, %v3999
        %v4016 = vmul.f32 %v4000, 1.442695
        %v4017 = vpow.pop %v4016
        %v4018 = vmul.f32 %v4001, 1.442695
        %v4019 = vpow.pop %v4018
        %v4020 = vmul.f32 %v4002, 1.442695
        %v4021 = vpow.pop %v4020
        %v4022 = vmul.f32 %v4003, 1.442695
        %v4023 = vpow.pop %v4022
        %v4024 = vmul.f32 %v4004, 1.442695
        %v4025 = vpow.pop %v4024
        %v4026 = vmul.f32 %v4005, 1.442695
        %v4027 = vpow.pop %v4026
        %v4028 = vmul.f32 %v4006, 1.442695
        %v4029 = vpow.pop %v4028
        %v4030 = vmul.f32 %v4007, 1.442695
        %v4031 = vpow.pop %v4030
        %v4032 = vmul.f32 %v4008, 1.442695
        %v4033 = vpow.pop %v4032
        %v4034 = vmul.f32 %v4009, 1.442695
        %v4035 = vpow.pop %v4034
        %v4036 = vmul.f32 %v4010, 1.442695
        %v4037 = vpow.pop %v4036
        %v4038 = vmul.f32 %v4011, 1.442695
        %v4039 = vpow.pop %v4038
        %v4040 = vmul.f32 %v4012, 1.442695
        %v4041 = vpow.pop %v4040
        %v4042 = vmul.f32 %v4013, 1.442695
        %v4043 = vpow.pop %v4042
        %v4044 = vmul.f32 %v4014, 1.442695
        %v4045 = vpow.pop %v4044
        %v4046 = vmul.f32 %v4015, 1.442695
        %v4047 = vpow.pop %v4046
        %4048 = vadd.xlane.f32.xlu0 %v4017
        %v4049 = vpop.xlane.xlu0 %4048
        %4050 = vadd.xlane.f32.xlu0 %v4019
        %v4051 = vpop.xlane.xlu0 %4050
        %4052 = vadd.xlane.f32.xlu0 %v4021
        %v4053 = vpop.xlane.xlu0 %4052
        %4054 = vadd.xlane.f32.xlu0 %v4023
        %v4055 = vpop.xlane.xlu0 %4054
        %4056 = vadd.xlane.f32.xlu0 %v4025
        %v4057 = vpop.xlane.xlu0 %4056
        %4058 = vadd.xlane.f32.xlu0 %v4027
        %v4059 = vpop.xlane.xlu0 %4058
        %4060 = vadd.xlane.f32.xlu0 %v4029
        %v4061 = vpop.xlane.xlu0 %4060
        %4062 = vadd.xlane.f32.xlu0 %v4031
        %v4063 = vpop.xlane.xlu0 %4062
        %4064 = vadd.xlane.f32.xlu0 %v4033
        %v4065 = vpop.xlane.xlu0 %4064
        %4066 = vadd.xlane.f32.xlu0 %v4035
        %v4067 = vpop.xlane.xlu0 %4066
        %4068 = vadd.xlane.f32.xlu0 %v4037
        %v4069 = vpop.xlane.xlu0 %4068
        %4070 = vadd.xlane.f32.xlu0 %v4039
        %v4071 = vpop.xlane.xlu0 %4070
        %4072 = vadd.xlane.f32.xlu0 %v4041
        %v4073 = vpop.xlane.xlu0 %4072
        %4074 = vadd.xlane.f32.xlu0 %v4043
        %v4075 = vpop.xlane.xlu0 %4074
        %4076 = vadd.xlane.f32.xlu0 %v4045
        %v4077 = vpop.xlane.xlu0 %4076
        %4078 = vadd.xlane.f32.xlu0 %v4047
        %v4079 = vpop.xlane.xlu0 %4078
        %v4080 = vrcp.pop %v4049
        %v4081 = vrcp.pop %v4051
        %v4082 = vrcp.pop %v4053
        %v4083 = vrcp.pop %v4055
        %v4084 = vrcp.pop %v4057
        %v4085 = vrcp.pop %v4059
        %v4086 = vrcp.pop %v4061
        %v4087 = vrcp.pop %v4063
        %v4088 = vrcp.pop %v4065
        %v4089 = vrcp.pop %v4067
        %v4090 = vrcp.pop %v4069
        %v4091 = vrcp.pop %v4071
        %v4092 = vrcp.pop %v4073
        %v4093 = vrcp.pop %v4075
        %v4094 = vrcp.pop %v4077
        %v4095 = vrcp.pop %v4079
        %v4096 = vmul.f32 %v4017, %v4080
        %v4097 = vmul.f32 %v4019, %v4081
        %v4098 = vmul.f32 %v4021, %v4082
        %v4099 = vmul.f32 %v4023, %v4083
        %v4100 = vmul.f32 %v4025, %v4084
        %v4101 = vmul.f32 %v4027, %v4085
        %v4102 = vmul.f32 %v4029, %v4086
        %v4103 = vmul.f32 %v4031, %v4087
        %v4104 = vmul.f32 %v4033, %v4088
        %v4105 = vmul.f32 %v4035, %v4089
        %v4106 = vmul.f32 %v4037, %v4090
        %v4107 = vmul.f32 %v4039, %v4091
        %v4108 = vmul.f32 %v4041, %v4092
        %v4109 = vmul.f32 %v4043, %v4093
        %v4110 = vmul.f32 %v4045, %v4094
        %v4111 = vmul.f32 %v4047, %v4095
        %v4112 = vpack.c.bf16 %v4097, %v4096
        %v4113 = vpack.c.bf16 %v4099, %v4098
        %v4114 = vpack.c.bf16 %v4101, %v4100
        %v4115 = vpack.c.bf16 %v4103, %v4102
        %v4116 = vpack.c.bf16 %v4105, %v4104
        %v4117 = vpack.c.bf16 %v4107, %v4106
        %v4118 = vpack.c.bf16 %v4109, %v4108
        %v4119 = vpack.c.bf16 %v4111, %v4110
        %4128 = vrot.lane.b32.xlu0 %v2390, 64
        %v4129 = vpop.permute.xlu0 %4128
        %4130 = vrot.lane.b32.xlu0 %v2393, 64
        %v4131 = vpop.permute.xlu0 %4130
        %4132 = vrot.lane.b32.xlu0 %v2396, 64
        %v4133 = vpop.permute.xlu0 %4132
        %4134 = vrot.lane.b32.xlu0 %v2399, 64
        %v4135 = vpop.permute.xlu0 %4134
        %4136 = vrot.lane.b32.xlu0 %v2402, 64
        %v4137 = vpop.permute.xlu0 %4136
        %4138 = vrot.lane.b32.xlu0 %v2405, 64
        %v4139 = vpop.permute.xlu0 %4138
        %4140 = vrot.lane.b32.xlu0 %v2408, 64
        %v4141 = vpop.permute.xlu0 %4140
        %4142 = vrot.lane.b32.xlu0 %v2411, 64
        %v4143 = vpop.permute.xlu0 %4142
        %4152 = vmatprep.subr.bf16.mxu0 0
        %4153 = vmatpush1.bf16.msra.mxu0 %v4129
        %4154 = vmatprep.subr.bf16.mxu0 0
        %4155 = vmatpush1.bf16.msra.mxu0 %v4131
        %4156 = vmatprep.subr.bf16.mxu0 0
        %4157 = vmatpush1.bf16.msra.mxu0 %v4133
        %4158 = vmatprep.subr.bf16.mxu0 0
        %4159 = vmatpush1.bf16.msra.mxu0 %v4135
        %4160 = vmatprep.subr.bf16.mxu0 0
        %4161 = vmatpush1.bf16.msra.mxu0 %v4137
        %4162 = vmatprep.subr.bf16.mxu0 0
        %4163 = vmatpush1.bf16.msra.mxu0 %v4139
        %4164 = vmatprep.subr.bf16.mxu0 0
        %4165 = vmatpush1.bf16.msra.mxu0 %v4141
        %4166 = vmatprep.subr.bf16.mxu0 0
        %4167 = vmatpush1.bf16.msra.mxu0 %v4143
        %4168 = vmatprep.subr.bf16.mxu0 0
        %4169 = vmatpush1.bf16.msra.mxu0 0
        %4170 = vmatprep.subr.bf16.mxu0 0
        %4171 = vmatpush1.bf16.msra.mxu0 0
        %4172 = vmatprep.subr.bf16.mxu0 0
        %4173 = vmatpush1.bf16.msra.mxu0 0
        %4174 = vmatprep.subr.bf16.mxu0 0
        %4175 = vmatpush1.bf16.msra.mxu0 0
        %4176 = vmatprep.subr.bf16.mxu0 0
        %4177 = vmatpush1.bf16.msra.mxu0 0
        %4178 = vmatprep.subr.bf16.mxu0 0
        %4179 = vmatpush1.bf16.msra.mxu0 0
        %4180 = vmatprep.subr.bf16.mxu0 0
        %4181 = vmatpush1.bf16.msra.mxu0 0
        %4182 = vmatprep.subr.bf16.mxu0 0
        %4183 = vmatpush1.bf16.msra.mxu0 0
        %4184 = vmatprep.mubr.bf16.mxu0 0
        %4185 = vmatmul.mubr.bf16.gmra.mrb[0].mxu0 %v4112
        %v4186 = vpop.f32.mrb[0].mxu0
        %v4187 = vadd.f32 0.0, %v4186
        %v4188 = vpop.f32.mrb[0].mxu0
        %v4189 = vpop.f32.mrb[0].mxu0
        %v4190 = vadd.f32 0.0, %v4189
        %v4191 = vpop.f32.mrb[0].mxu0
        %4192 = vmatprep.mubr.bf16.mxu0 0
        %4193 = vmatmul.mubr.bf16.gmra.mrb[0].mxu0 %v4113
        %v4194 = vpop.f32.mrb[0].mxu0
        %v4195 = vadd.f32 0.0, %v4194
        %v4196 = vpop.f32.mrb[0].mxu0
        %v4197 = vpop.f32.mrb[0].mxu0
        %v4198 = vadd.f32 0.0, %v4197
        %v4199 = vpop.f32.mrb[0].mxu0
        %4200 = vmatprep.mubr.bf16.mxu0 0
        %4201 = vmatmul.mubr.bf16.gmra.mrb[0].mxu0 %v4114
        %v4202 = vpop.f32.mrb[0].mxu0
        %v4203 = vadd.f32 0.0, %v4202
        %v4204 = vpop.f32.mrb[0].mxu0
        %v4205 = vpop.f32.mrb[0].mxu0
        %v4206 = vadd.f32 0.0, %v4205
        %v4207 = vpop.f32.mrb[0].mxu0
        %4208 = vmatprep.mubr.bf16.mxu0 0
        %4209 = vmatmul.mubr.bf16.gmra.mrb[0].mxu0 %v4115
        %v4210 = vpop.f32.mrb[0].mxu0
        %v4211 = vadd.f32 0.0, %v4210
        %v4212 = vpop.f32.mrb[0].mxu0
        %v4213 = vpop.f32.mrb[0].mxu0
        %v4214 = vadd.f32 0.0, %v4213
        %v4215 = vpop.f32.mrb[0].mxu0
        %4216 = vmatprep.mubr.bf16.mxu0 0
        %4217 = vmatmul.mubr.bf16.gmra.mrb[0].mxu0 %v4116
        %v4218 = vpop.f32.mrb[0].mxu0
        %v4219 = vadd.f32 0.0, %v4218
        %v4220 = vpop.f32.mrb[0].mxu0
        %v4221 = vpop.f32.mrb[0].mxu0
        %v4222 = vadd.f32 0.0, %v4221
        %v4223 = vpop.f32.mrb[0].mxu0
        %4224 = vmatprep.mubr.bf16.mxu0 0
        %4225 = vmatmul.mubr.bf16.gmra.mrb[0].mxu0 %v4117
        %v4226 = vpop.f32.mrb[0].mxu0
        %v4227 = vadd.f32 0.0, %v4226
        %v4228 = vpop.f32.mrb[0].mxu0
        %v4229 = vpop.f32.mrb[0].mxu0
        %v4230 = vadd.f32 0.0, %v4229
        %v4231 = vpop.f32.mrb[0].mxu0
        %4232 = vmatprep.mubr.bf16.mxu0 0
        %4233 = vmatmul.mubr.bf16.gmra.mrb[0].mxu0 %v4118
        %v4234 = vpop.f32.mrb[0].mxu0
        %v4235 = vadd.f32 0.0, %v4234
        %v4236 = vpop.f32.mrb[0].mxu0
        %v4237 = vpop.f32.mrb[0].mxu0
        %v4238 = vadd.f32 0.0, %v4237
        %v4239 = vpop.f32.mrb[0].mxu0
        %4240 = vmatprep.mubr.bf16.mxu0 0
        %4241 = vmatmul.mubr.bf16.gmra.mrb[0].mxu0 %v4119
        %v4242 = vpop.f32.mrb[0].mxu0
        %v4243 = vadd.f32 0.0, %v4242
        %v4244 = vpop.f32.mrb[0].mxu0
        %v4245 = vpop.f32.mrb[0].mxu0
        %v4246 = vadd.f32 0.0, %v4245
        %v4247 = vpop.f32.mrb[0].mxu0
        %4248 = vdwg.mxu0
        %v4250 = vsel %vm2448, %v2343, 0
        %v4253 = vsel %vm2448, %v2346, 0
        %v4256 = vsel %vm2448, %v2349, 0
        %v4259 = vsel %vm2448, %v2352, 0
        %v4262 = vsel %vm2448, %v2355, 0
        %v4265 = vsel %vm2448, %v2358, 0
        %v4268 = vsel %vm2448, %v2361, 0
        %v4271 = vsel %vm2448, %v2364, 0
        %v4274 = vsel %vm2448, %v2367, 0
        %v4277 = vsel %vm2448, %v2370, 0
        %v4280 = vsel %vm2448, %v2373, 0
        %v4283 = vsel %vm2448, %v2376, 0
        %v4286 = vsel %vm2448, %v2379, 0
        %v4289 = vsel %vm2448, %v2382, 0
        %v4292 = vsel %vm2448, %v2385, 0
        %v4295 = vsel %vm2448, %v2388, 0
        %4297 = vmatprep.subr.bf16.mxu0 0
        %4298 = vmatpush1.bf16.xpose.msra.mxu0 %v4274
        %4299 = vmatprep.subr.bf16.mxu0 0
        %4300 = vmatpush1.bf16.xpose.msra.mxu0 %v4277
        %4301 = vmatprep.subr.bf16.mxu0 0
        %4302 = vmatpush1.bf16.xpose.msra.mxu0 %v4280
        %4303 = vmatprep.subr.bf16.mxu0 0
        %4304 = vmatpush1.bf16.xpose.msra.mxu0 %v4283
        %4305 = vmatprep.subr.bf16.mxu0 0
        %4306 = vmatpush1.bf16.xpose.msra.mxu0 %v4286
        %4307 = vmatprep.subr.bf16.mxu0 0
        %4308 = vmatpush1.bf16.xpose.msra.mxu0 %v4289
        %4309 = vmatprep.subr.bf16.mxu0 0
        %4310 = vmatpush1.bf16.xpose.msra.mxu0 %v4292
        %4311 = vmatprep.subr.bf16.mxu0 0
        %4312 = vmatpush1.bf16.xpose.msra.mxu0 %v4295
        %4313 = vmatprep.subr.bf16.mxu0 0
        %4314 = vmatpush1.bf16.xpose.msra.mxu0 0
        %4315 = vmatprep.subr.bf16.mxu0 0
        %4316 = vmatpush1.bf16.xpose.msra.mxu0 0
        %4317 = vmatprep.subr.bf16.mxu0 0
        %4318 = vmatpush1.bf16.xpose.msra.mxu0 0
        %4319 = vmatprep.subr.bf16.mxu0 0
        %4320 = vmatpush1.bf16.xpose.msra.mxu0 0
        %4321 = vmatprep.subr.bf16.mxu0 0
        %4322 = vmatpush1.bf16.xpose.msra.mxu0 0
        %4323 = vmatprep.subr.bf16.mxu0 0
        %4324 = vmatpush1.bf16.xpose.msra.mxu0 0
        %4325 = vmatprep.subr.bf16.mxu0 0
        %4326 = vmatpush1.bf16.xpose.msra.mxu0 0
        %4327 = vmatprep.subr.bf16.mxu0 0
        %4328 = vmatpush1.bf16.xpose.msra.mxu0 0
        %4329 = vmatprep.mubr.bf16.mxu0 0
        %4330 = vmatmul.mubr.bf16.gmra.mrb[0].mxu0 %v4250
        %v4331 = vpop.f32.mrb[0].mxu0
        %v4332 = vadd.f32 0.0, %v4331
        %v4333 = vpop.f32.mrb[0].mxu0
        %v4334 = vpop.f32.mrb[0].mxu0
        %v4335 = vadd.f32 0.0, %v4334
        %v4336 = vpop.f32.mrb[0].mxu0
        %4337 = vmatprep.mubr.bf16.mxu0 0
        %4338 = vmatmul.mubr.bf16.gmra.mrb[0].mxu0 %v4253
        %v4339 = vpop.f32.mrb[0].mxu0
        %v4340 = vadd.f32 0.0, %v4339
        %v4341 = vpop.f32.mrb[0].mxu0
        %v4342 = vpop.f32.mrb[0].mxu0
        %v4343 = vadd.f32 0.0, %v4342
        %v4344 = vpop.f32.mrb[0].mxu0
        %4345 = vmatprep.mubr.bf16.mxu0 0
        %4346 = vmatmul.mubr.bf16.gmra.mrb[0].mxu0 %v4256
        %v4347 = vpop.f32.mrb[0].mxu0
        %v4348 = vadd.f32 0.0, %v4347
        %v4349 = vpop.f32.mrb[0].mxu0
        %v4350 = vpop.f32.mrb[0].mxu0
        %v4351 = vadd.f32 0.0, %v4350
        %v4352 = vpop.f32.mrb[0].mxu0
        %4353 = vmatprep.mubr.bf16.mxu0 0
        %4354 = vmatmul.mubr.bf16.gmra.mrb[0].mxu0 %v4259
        %v4355 = vpop.f32.mrb[0].mxu0
        %v4356 = vadd.f32 0.0, %v4355
        %v4357 = vpop.f32.mrb[0].mxu0
        %v4358 = vpop.f32.mrb[0].mxu0
        %v4359 = vadd.f32 0.0, %v4358
        %v4360 = vpop.f32.mrb[0].mxu0
        %4361 = vmatprep.mubr.bf16.mxu0 0
        %4362 = vmatmul.mubr.bf16.gmra.mrb[0].mxu0 %v4262
        %v4363 = vpop.f32.mrb[0].mxu0
        %v4364 = vadd.f32 0.0, %v4363
        %v4365 = vpop.f32.mrb[0].mxu0
        %v4366 = vpop.f32.mrb[0].mxu0
        %v4367 = vadd.f32 0.0, %v4366
        %v4368 = vpop.f32.mrb[0].mxu0
        %4369 = vmatprep.mubr.bf16.mxu0 0
        %4370 = vmatmul.mubr.bf16.gmra.mrb[0].mxu0 %v4265
        %v4371 = vpop.f32.mrb[0].mxu0
        %v4372 = vadd.f32 0.0, %v4371
        %v4373 = vpop.f32.mrb[0].mxu0
        %v4374 = vpop.f32.mrb[0].mxu0
        %v4375 = vadd.f32 0.0, %v4374
        %v4376 = vpop.f32.mrb[0].mxu0
        %4377 = vmatprep.mubr.bf16.mxu0 0
        %4378 = vmatmul.mubr.bf16.gmra.mrb[0].mxu0 %v4268
        %v4379 = vpop.f32.mrb[0].mxu0
        %v4380 = vadd.f32 0.0, %v4379
        %v4381 = vpop.f32.mrb[0].mxu0
        %v4382 = vpop.f32.mrb[0].mxu0
        %v4383 = vadd.f32 0.0, %v4382
        %v4384 = vpop.f32.mrb[0].mxu0
        %4385 = vmatprep.mubr.bf16.mxu0 0
        %4386 = vmatmul.mubr.bf16.gmra.mrb[0].mxu0 %v4271
        %v4387 = vpop.f32.mrb[0].mxu0
        %v4388 = vadd.f32 0.0, %v4387
        %v4389 = vpop.f32.mrb[0].mxu0
        %v4390 = vpop.f32.mrb[0].mxu0
        %v4391 = vadd.f32 0.0, %v4390
        %v4392 = vpop.f32.mrb[0].mxu0
        %4393 = vdwg.mxu0
        %v4394 = vsel %vm2432, %v4332, -inf
        %v4395 = vsel %vm2433, %v4335, -inf
        %v4396 = vsel %vm2434, %v4340, -inf
        %v4397 = vsel %vm2435, %v4343, -inf
        %v4398 = vsel %vm2436, %v4348, -inf
        %v4399 = vsel %vm2437, %v4351, -inf
        %v4400 = vsel %vm2438, %v4356, -inf
        %v4401 = vsel %vm2439, %v4359, -inf
        %v4402 = vsel %vm2440, %v4364, -inf
        %v4403 = vsel %vm2441, %v4367, -inf
        %v4404 = vsel %vm2442, %v4372, -inf
        %v4405 = vsel %vm2443, %v4375, -inf
        %v4406 = vsel %vm2444, %v4380, -inf
        %v4407 = vsel %vm2445, %v4383, -inf
        %v4408 = vsel %vm2446, %v4388, -inf
        %v4409 = vsel %vm2447, %v4391, -inf
        %4410 = vmax.xlane.f32.xlu0 %v4394
        %v4411 = vpop.xlane.xlu0 %4410
        %4412 = vmax.xlane.f32.xlu0 %v4395
        %v4413 = vpop.xlane.xlu0 %4412
        %4414 = vmax.xlane.f32.xlu0 %v4396
        %v4415 = vpop.xlane.xlu0 %4414
        %4416 = vmax.xlane.f32.xlu0 %v4397
        %v4417 = vpop.xlane.xlu0 %4416
        %4418 = vmax.xlane.f32.xlu0 %v4398
        %v4419 = vpop.xlane.xlu0 %4418
        %4420 = vmax.xlane.f32.xlu0 %v4399
        %v4421 = vpop.xlane.xlu0 %4420
        %4422 = vmax.xlane.f32.xlu0 %v4400
        %v4423 = vpop.xlane.xlu0 %4422
        %4424 = vmax.xlane.f32.xlu0 %v4401
        %v4425 = vpop.xlane.xlu0 %4424
        %4426 = vmax.xlane.f32.xlu0 %v4402
        %v4427 = vpop.xlane.xlu0 %4426
        %4428 = vmax.xlane.f32.xlu0 %v4403
        %v4429 = vpop.xlane.xlu0 %4428
        %4430 = vmax.xlane.f32.xlu0 %v4404
        %v4431 = vpop.xlane.xlu0 %4430
        %4432 = vmax.xlane.f32.xlu0 %v4405
        %v4433 = vpop.xlane.xlu0 %4432
        %4434 = vmax.xlane.f32.xlu0 %v4406
        %v4435 = vpop.xlane.xlu0 %4434
        %4436 = vmax.xlane.f32.xlu0 %v4407
        %v4437 = vpop.xlane.xlu0 %4436
        %4438 = vmax.xlane.f32.xlu0 %v4408
        %v4439 = vpop.xlane.xlu0 %4438
        %4440 = vmax.xlane.f32.xlu0 %v4409
        %v4441 = vpop.xlane.xlu0 %4440
        %v4442 = vsub.f32 %v4394, %v4411
        %v4443 = vsub.f32 %v4395, %v4413
        %v4444 = vsub.f32 %v4396, %v4415
        %v4445 = vsub.f32 %v4397, %v4417
        %v4446 = vsub.f32 %v4398, %v4419
        %v4447 = vsub.f32 %v4399, %v4421
        %v4448 = vsub.f32 %v4400, %v4423
        %v4449 = vsub.f32 %v4401, %v4425
        %v4450 = vsub.f32 %v4402, %v4427
        %v4451 = vsub.f32 %v4403, %v4429
        %v4452 = vsub.f32 %v4404, %v4431
        %v4453 = vsub.f32 %v4405, %v4433
        %v4454 = vsub.f32 %v4406, %v4435
        %v4455 = vsub.f32 %v4407, %v4437
        %v4456 = vsub.f32 %v4408, %v4439
        %v4457 = vsub.f32 %v4409, %v4441
        %v4458 = vmul.f32 %v4442, 1.442695
        %v4459 = vpow.pop %v4458
        %v4460 = vmul.f32 %v4443, 1.442695
        %v4461 = vpow.pop %v4460
        %v4462 = vmul.f32 %v4444, 1.442695
        %v4463 = vpow.pop %v4462
        %v4464 = vmul.f32 %v4445, 1.442695
        %v4465 = vpow.pop %v4464
        %v4466 = vmul.f32 %v4446, 1.442695
        %v4467 = vpow.pop %v4466
        %v4468 = vmul.f32 %v4447, 1.442695
        %v4469 = vpow.pop %v4468
        %v4470 = vmul.f32 %v4448, 1.442695
        %v4471 = vpow.pop %v4470
        %v4472 = vmul.f32 %v4449, 1.442695
        %v4473 = vpow.pop %v4472
        %v4474 = vmul.f32 %v4450, 1.442695
        %v4475 = vpow.pop %v4474
        %v4476 = vmul.f32 %v4451, 1.442695
        %v4477 = vpow.pop %v4476
        %v4478 = vmul.f32 %v4452, 1.442695
        %v4479 = vpow.pop %v4478
        %v4480 = vmul.f32 %v4453, 1.442695
        %v4481 = vpow.pop %v4480
        %v4482 = vmul.f32 %v4454, 1.442695
        %v4483 = vpow.pop %v4482
        %v4484 = vmul.f32 %v4455, 1.442695
        %v4485 = vpow.pop %v4484
        %v4486 = vmul.f32 %v4456, 1.442695
        %v4487 = vpow.pop %v4486
        %v4488 = vmul.f32 %v4457, 1.442695
        %v4489 = vpow.pop %v4488
        %4490 = vadd.xlane.f32.xlu0 %v4459
        %v4491 = vpop.xlane.xlu0 %4490
        %4492 = vadd.xlane.f32.xlu0 %v4461
        %v4493 = vpop.xlane.xlu0 %4492
        %4494 = vadd.xlane.f32.xlu0 %v4463
        %v4495 = vpop.xlane.xlu0 %4494
        %4496 = vadd.xlane.f32.xlu0 %v4465
        %v4497 = vpop.xlane.xlu0 %4496
        %4498 = vadd.xlane.f32.xlu0 %v4467
        %v4499 = vpop.xlane.xlu0 %4498
        %4500 = vadd.xlane.f32.xlu0 %v4469
        %v4501 = vpop.xlane.xlu0 %4500
        %4502 = vadd.xlane.f32.xlu0 %v4471
        %v4503 = vpop.xlane.xlu0 %4502
        %4504 = vadd.xlane.f32.xlu0 %v4473
        %v4505 = vpop.xlane.xlu0 %4504
        %4506 = vadd.xlane.f32.xlu0 %v4475
        %v4507 = vpop.xlane.xlu0 %4506
        %4508 = vadd.xlane.f32.xlu0 %v4477
        %v4509 = vpop.xlane.xlu0 %4508
        %4510 = vadd.xlane.f32.xlu0 %v4479
        %v4511 = vpop.xlane.xlu0 %4510
        %4512 = vadd.xlane.f32.xlu0 %v4481
        %v4513 = vpop.xlane.xlu0 %4512
        %4514 = vadd.xlane.f32.xlu0 %v4483
        %v4515 = vpop.xlane.xlu0 %4514
        %4516 = vadd.xlane.f32.xlu0 %v4485
        %v4517 = vpop.xlane.xlu0 %4516
        %4518 = vadd.xlane.f32.xlu0 %v4487
        %v4519 = vpop.xlane.xlu0 %4518
        %4520 = vadd.xlane.f32.xlu0 %v4489
        %v4521 = vpop.xlane.xlu0 %4520
        %v4522 = vrcp.pop %v4491
        %v4523 = vrcp.pop %v4493
        %v4524 = vrcp.pop %v4495
        %v4525 = vrcp.pop %v4497
        %v4526 = vrcp.pop %v4499
        %v4527 = vrcp.pop %v4501
        %v4528 = vrcp.pop %v4503
        %v4529 = vrcp.pop %v4505
        %v4530 = vrcp.pop %v4507
        %v4531 = vrcp.pop %v4509
        %v4532 = vrcp.pop %v4511
        %v4533 = vrcp.pop %v4513
        %v4534 = vrcp.pop %v4515
        %v4535 = vrcp.pop %v4517
        %v4536 = vrcp.pop %v4519
        %v4537 = vrcp.pop %v4521
        %v4538 = vmul.f32 %v4459, %v4522
        %v4539 = vmul.f32 %v4461, %v4523
        %v4540 = vmul.f32 %v4463, %v4524
        %v4541 = vmul.f32 %v4465, %v4525
        %v4542 = vmul.f32 %v4467, %v4526
        %v4543 = vmul.f32 %v4469, %v4527
        %v4544 = vmul.f32 %v4471, %v4528
        %v4545 = vmul.f32 %v4473, %v4529
        %v4546 = vmul.f32 %v4475, %v4530
        %v4547 = vmul.f32 %v4477, %v4531
        %v4548 = vmul.f32 %v4479, %v4532
        %v4549 = vmul.f32 %v4481, %v4533
        %v4550 = vmul.f32 %v4483, %v4534
        %v4551 = vmul.f32 %v4485, %v4535
        %v4552 = vmul.f32 %v4487, %v4536
        %v4553 = vmul.f32 %v4489, %v4537
        %v4554 = vpack.c.bf16 %v4539, %v4538
        %v4555 = vpack.c.bf16 %v4541, %v4540
        %v4556 = vpack.c.bf16 %v4543, %v4542
        %v4557 = vpack.c.bf16 %v4545, %v4544
        %v4558 = vpack.c.bf16 %v4547, %v4546
        %v4559 = vpack.c.bf16 %v4549, %v4548
        %v4560 = vpack.c.bf16 %v4551, %v4550
        %v4561 = vpack.c.bf16 %v4553, %v4552
        %4562 = vmatprep.subr.bf16.mxu0 0
        %4563 = vmatpush1.bf16.msra.mxu0 %v2391
        %4564 = vmatprep.subr.bf16.mxu0 0
        %4565 = vmatpush1.bf16.msra.mxu0 %v2394
        %4566 = vmatprep.subr.bf16.mxu0 0
        %4567 = vmatpush1.bf16.msra.mxu0 %v2397
        %4568 = vmatprep.subr.bf16.mxu0 0
        %4569 = vmatpush1.bf16.msra.mxu0 %v2400
        %4570 = vmatprep.subr.bf16.mxu0 0
        %4571 = vmatpush1.bf16.msra.mxu0 %v2403
        %4572 = vmatprep.subr.bf16.mxu0 0
        %4573 = vmatpush1.bf16.msra.mxu0 %v2406
        %4574 = vmatprep.subr.bf16.mxu0 0
        %4575 = vmatpush1.bf16.msra.mxu0 %v2409
        %4576 = vmatprep.subr.bf16.mxu0 0
        %4577 = vmatpush1.bf16.msra.mxu0 %v2412
        %4578 = vmatprep.subr.bf16.mxu0 0
        %4579 = vmatpush1.bf16.msra.mxu0 0
        %4580 = vmatprep.subr.bf16.mxu0 0
        %4581 = vmatpush1.bf16.msra.mxu0 0
        %4582 = vmatprep.subr.bf16.mxu0 0
        %4583 = vmatpush1.bf16.msra.mxu0 0
        %4584 = vmatprep.subr.bf16.mxu0 0
        %4585 = vmatpush1.bf16.msra.mxu0 0
        %4586 = vmatprep.subr.bf16.mxu0 0
        %4587 = vmatpush1.bf16.msra.mxu0 0
        %4588 = vmatprep.subr.bf16.mxu0 0
        %4589 = vmatpush1.bf16.msra.mxu0 0
        %4590 = vmatprep.subr.bf16.mxu0 0
        %4591 = vmatpush1.bf16.msra.mxu0 0
        %4592 = vmatprep.subr.bf16.mxu0 0
        %4593 = vmatpush1.bf16.msra.mxu0 0
        %4594 = vmatprep.mubr.bf16.mxu0 0
        %4595 = vmatmul.mubr.bf16.gmra.mrb[0].mxu0 %v4554
        %v4596 = vpop.f32.mrb[0].mxu0
        %v4597 = vadd.f32 0.0, %v4596
        %v4598 = vpop.f32.mrb[0].mxu0
        %v4599 = vpop.f32.mrb[0].mxu0
        %v4600 = vadd.f32 0.0, %v4599
        %v4601 = vpop.f32.mrb[0].mxu0
        %4602 = vmatprep.mubr.bf16.mxu0 0
        %4603 = vmatmul.mubr.bf16.gmra.mrb[0].mxu0 %v4555
        %v4604 = vpop.f32.mrb[0].mxu0
        %v4605 = vadd.f32 0.0, %v4604
        %v4606 = vpop.f32.mrb[0].mxu0
        %v4607 = vpop.f32.mrb[0].mxu0
        %v4608 = vadd.f32 0.0, %v4607
        %v4609 = vpop.f32.mrb[0].mxu0
        %4610 = vmatprep.mubr.bf16.mxu0 0
        %4611 = vmatmul.mubr.bf16.gmra.mrb[0].mxu0 %v4556
        %v4612 = vpop.f32.mrb[0].mxu0
        %v4613 = vadd.f32 0.0, %v4612
        %v4614 = vpop.f32.mrb[0].mxu0
        %v4615 = vpop.f32.mrb[0].mxu0
        %v4616 = vadd.f32 0.0, %v4615
        %v4617 = vpop.f32.mrb[0].mxu0
        %4618 = vmatprep.mubr.bf16.mxu0 0
        %4619 = vmatmul.mubr.bf16.gmra.mrb[0].mxu0 %v4557
        %v4620 = vpop.f32.mrb[0].mxu0
        %v4621 = vadd.f32 0.0, %v4620
        %v4622 = vpop.f32.mrb[0].mxu0
        %v4623 = vpop.f32.mrb[0].mxu0
        %v4624 = vadd.f32 0.0, %v4623
        %v4625 = vpop.f32.mrb[0].mxu0
        %4626 = vmatprep.mubr.bf16.mxu0 0
        %4627 = vmatmul.mubr.bf16.gmra.mrb[0].mxu0 %v4558
        %v4628 = vpop.f32.mrb[0].mxu0
        %v4629 = vadd.f32 0.0, %v4628
        %v4630 = vpop.f32.mrb[0].mxu0
        %v4631 = vpop.f32.mrb[0].mxu0
        %v4632 = vadd.f32 0.0, %v4631
        %v4633 = vpop.f32.mrb[0].mxu0
        %4634 = vmatprep.mubr.bf16.mxu0 0
        %4635 = vmatmul.mubr.bf16.gmra.mrb[0].mxu0 %v4559
        %v4636 = vpop.f32.mrb[0].mxu0
        %v4637 = vadd.f32 0.0, %v4636
        %v4638 = vpop.f32.mrb[0].mxu0
        %v4639 = vpop.f32.mrb[0].mxu0
        %v4640 = vadd.f32 0.0, %v4639
        %v4641 = vpop.f32.mrb[0].mxu0
        %4642 = vmatprep.mubr.bf16.mxu0 0
        %4643 = vmatmul.mubr.bf16.gmra.mrb[0].mxu0 %v4560
        %v4644 = vpop.f32.mrb[0].mxu0
        %v4645 = vadd.f32 0.0, %v4644
        %v4646 = vpop.f32.mrb[0].mxu0
        %v4647 = vpop.f32.mrb[0].mxu0
        %v4648 = vadd.f32 0.0, %v4647
        %v4649 = vpop.f32.mrb[0].mxu0
        %4650 = vmatprep.mubr.bf16.mxu0 0
        %4651 = vmatmul.mubr.bf16.gmra.mrb[0].mxu0 %v4561
        %v4652 = vpop.f32.mrb[0].mxu0
        %v4653 = vadd.f32 0.0, %v4652
        %v4654 = vpop.f32.mrb[0].mxu0
        %v4655 = vpop.f32.mrb[0].mxu0
        %v4656 = vadd.f32 0.0, %v4655
        %v4657 = vpop.f32.mrb[0].mxu0
        %4658 = vdwg.mxu0
        %4667 = vrot.lane.b32.xlu0 %v2343, 64
        %v4668 = vpop.permute.xlu0 %4667
        %4669 = vrot.lane.b32.xlu0 %v2346, 64
        %v4670 = vpop.permute.xlu0 %4669
        %4671 = vrot.lane.b32.xlu0 %v2349, 64
        %v4672 = vpop.permute.xlu0 %4671
        %4673 = vrot.lane.b32.xlu0 %v2352, 64
        %v4674 = vpop.permute.xlu0 %4673
        %4675 = vrot.lane.b32.xlu0 %v2355, 64
        %v4676 = vpop.permute.xlu0 %4675
        %4677 = vrot.lane.b32.xlu0 %v2358, 64
        %v4678 = vpop.permute.xlu0 %4677
        %4679 = vrot.lane.b32.xlu0 %v2361, 64
        %v4680 = vpop.permute.xlu0 %4679
        %4681 = vrot.lane.b32.xlu0 %v2364, 64
        %v4682 = vpop.permute.xlu0 %4681
        %4691 = vrot.lane.b32.xlu0 %v2367, 64
        %v4692 = vpop.permute.xlu0 %4691
        %4693 = vrot.lane.b32.xlu0 %v2370, 64
        %v4694 = vpop.permute.xlu0 %4693
        %4695 = vrot.lane.b32.xlu0 %v2373, 64
        %v4696 = vpop.permute.xlu0 %4695
        %4697 = vrot.lane.b32.xlu0 %v2376, 64
        %v4698 = vpop.permute.xlu0 %4697
        %4699 = vrot.lane.b32.xlu0 %v2379, 64
        %v4700 = vpop.permute.xlu0 %4699
        %4701 = vrot.lane.b32.xlu0 %v2382, 64
        %v4702 = vpop.permute.xlu0 %4701
        %4703 = vrot.lane.b32.xlu0 %v2385, 64
        %v4704 = vpop.permute.xlu0 %4703
        %4705 = vrot.lane.b32.xlu0 %v2388, 64
        %v4706 = vpop.permute.xlu0 %4705
        %v4708 = vsel %vm2448, %v4668, 0
        %v4711 = vsel %vm2448, %v4670, 0
        %v4714 = vsel %vm2448, %v4672, 0
        %v4717 = vsel %vm2448, %v4674, 0
        %v4720 = vsel %vm2448, %v4676, 0
        %v4723 = vsel %vm2448, %v4678, 0
        %v4726 = vsel %vm2448, %v4680, 0
        %v4729 = vsel %vm2448, %v4682, 0
        %v4732 = vsel %vm2448, %v4692, 0
        %v4735 = vsel %vm2448, %v4694, 0
        %v4738 = vsel %vm2448, %v4696, 0
        %v4741 = vsel %vm2448, %v4698, 0
        %v4744 = vsel %vm2448, %v4700, 0
        %v4747 = vsel %vm2448, %v4702, 0
        %v4750 = vsel %vm2448, %v4704, 0
        %v4753 = vsel %vm2448, %v4706, 0
        %4755 = vmatprep.subr.bf16.mxu0 0
        %4756 = vmatpush1.bf16.xpose.msra.mxu0 %v4732
        %4757 = vmatprep.subr.bf16.mxu0 0
        %4758 = vmatpush1.bf16.xpose.msra.mxu0 %v4735
        %4759 = vmatprep.subr.bf16.mxu0 0
        %4760 = vmatpush1.bf16.xpose.msra.mxu0 %v4738
        %4761 = vmatprep.subr.bf16.mxu0 0
        %4762 = vmatpush1.bf16.xpose.msra.mxu0 %v4741
        %4763 = vmatprep.subr.bf16.mxu0 0
        %4764 = vmatpush1.bf16.xpose.msra.mxu0 %v4744
        %4765 = vmatprep.subr.bf16.mxu0 0
        %4766 = vmatpush1.bf16.xpose.msra.mxu0 %v4747
        %4767 = vmatprep.subr.bf16.mxu0 0
        %4768 = vmatpush1.bf16.xpose.msra.mxu0 %v4750
        %4769 = vmatprep.subr.bf16.mxu0 0
        %4770 = vmatpush1.bf16.xpose.msra.mxu0 %v4753
        %4771 = vmatprep.subr.bf16.mxu0 0
        %4772 = vmatpush1.bf16.xpose.msra.mxu0 0
        %4773 = vmatprep.subr.bf16.mxu0 0
        %4774 = vmatpush1.bf16.xpose.msra.mxu0 0
        %4775 = vmatprep.subr.bf16.mxu0 0
        %4776 = vmatpush1.bf16.xpose.msra.mxu0 0
        %4777 = vmatprep.subr.bf16.mxu0 0
        %4778 = vmatpush1.bf16.xpose.msra.mxu0 0
        %4779 = vmatprep.subr.bf16.mxu0 0
        %4780 = vmatpush1.bf16.xpose.msra.mxu0 0
        %4781 = vmatprep.subr.bf16.mxu0 0
        %4782 = vmatpush1.bf16.xpose.msra.mxu0 0
        %4783 = vmatprep.subr.bf16.mxu0 0
        %4784 = vmatpush1.bf16.xpose.msra.mxu0 0
        %4785 = vmatprep.subr.bf16.mxu0 0
        %4786 = vmatpush1.bf16.xpose.msra.mxu0 0
        %4787 = vmatprep.mubr.bf16.mxu0 0
        %4788 = vmatmul.mubr.bf16.gmra.mrb[0].mxu0 %v4708
        %v4789 = vpop.f32.mrb[0].mxu0
        %v4790 = vadd.f32 0.0, %v4789
        %v4791 = vpop.f32.mrb[0].mxu0
        %v4792 = vpop.f32.mrb[0].mxu0
        %v4793 = vadd.f32 0.0, %v4792
        %v4794 = vpop.f32.mrb[0].mxu0
        %4795 = vmatprep.mubr.bf16.mxu0 0
        %4796 = vmatmul.mubr.bf16.gmra.mrb[0].mxu0 %v4711
        %v4797 = vpop.f32.mrb[0].mxu0
        %v4798 = vadd.f32 0.0, %v4797
        %v4799 = vpop.f32.mrb[0].mxu0
        %v4800 = vpop.f32.mrb[0].mxu0
        %v4801 = vadd.f32 0.0, %v4800
        %v4802 = vpop.f32.mrb[0].mxu0
        %4803 = vmatprep.mubr.bf16.mxu0 0
        %4804 = vmatmul.mubr.bf16.gmra.mrb[0].mxu0 %v4714
        %v4805 = vpop.f32.mrb[0].mxu0
        %v4806 = vadd.f32 0.0, %v4805
        %v4807 = vpop.f32.mrb[0].mxu0
        %v4808 = vpop.f32.mrb[0].mxu0
        %v4809 = vadd.f32 0.0, %v4808
        %v4810 = vpop.f32.mrb[0].mxu0
        %4811 = vmatprep.mubr.bf16.mxu0 0
        %4812 = vmatmul.mubr.bf16.gmra.mrb[0].mxu0 %v4717
        %v4813 = vpop.f32.mrb[0].mxu0
        %v4814 = vadd.f32 0.0, %v4813
        %v4815 = vpop.f32.mrb[0].mxu0
        %v4816 = vpop.f32.mrb[0].mxu0
        %v4817 = vadd.f32 0.0, %v4816
        %v4818 = vpop.f32.mrb[0].mxu0
        %4819 = vmatprep.mubr.bf16.mxu0 0
        %4820 = vmatmul.mubr.bf16.gmra.mrb[0].mxu0 %v4720
        %v4821 = vpop.f32.mrb[0].mxu0
        %v4822 = vadd.f32 0.0, %v4821
        %v4823 = vpop.f32.mrb[0].mxu0
        %v4824 = vpop.f32.mrb[0].mxu0
        %v4825 = vadd.f32 0.0, %v4824
        %v4826 = vpop.f32.mrb[0].mxu0
        %4827 = vmatprep.mubr.bf16.mxu0 0
        %4828 = vmatmul.mubr.bf16.gmra.mrb[0].mxu0 %v4723
        %v4829 = vpop.f32.mrb[0].mxu0
        %v4830 = vadd.f32 0.0, %v4829
        %v4831 = vpop.f32.mrb[0].mxu0
        %v4832 = vpop.f32.mrb[0].mxu0
        %v4833 = vadd.f32 0.0, %v4832
        %v4834 = vpop.f32.mrb[0].mxu0
        %4835 = vmatprep.mubr.bf16.mxu0 0
        %4836 = vmatmul.mubr.bf16.gmra.mrb[0].mxu0 %v4726
        %v4837 = vpop.f32.mrb[0].mxu0
        %v4838 = vadd.f32 0.0, %v4837
        %v4839 = vpop.f32.mrb[0].mxu0
        %v4840 = vpop.f32.mrb[0].mxu0
        %v4841 = vadd.f32 0.0, %v4840
        %v4842 = vpop.f32.mrb[0].mxu0
        %4843 = vmatprep.mubr.bf16.mxu0 0
        %4844 = vmatmul.mubr.bf16.gmra.mrb[0].mxu0 %v4729
        %v4845 = vpop.f32.mrb[0].mxu0
        %v4846 = vadd.f32 0.0, %v4845
        %v4847 = vpop.f32.mrb[0].mxu0
        %v4848 = vpop.f32.mrb[0].mxu0
        %v4849 = vadd.f32 0.0, %v4848
        %v4850 = vpop.f32.mrb[0].mxu0
        %4851 = vdwg.mxu0
        %v4852 = vsel %vm2432, %v4790, -inf
        %v4853 = vsel %vm2433, %v4793, -inf
        %v4854 = vsel %vm2434, %v4798, -inf
        %v4855 = vsel %vm2435, %v4801, -inf
        %v4856 = vsel %vm2436, %v4806, -inf
        %v4857 = vsel %vm2437, %v4809, -inf
        %v4858 = vsel %vm2438, %v4814, -inf
        %v4859 = vsel %vm2439, %v4817, -inf
        %v4860 = vsel %vm2440, %v4822, -inf
        %v4861 = vsel %vm2441, %v4825, -inf
        %v4862 = vsel %vm2442, %v4830, -inf
        %v4863 = vsel %vm2443, %v4833, -inf
        %v4864 = vsel %vm2444, %v4838, -inf
        %v4865 = vsel %vm2445, %v4841, -inf
        %v4866 = vsel %vm2446, %v4846, -inf
        %v4867 = vsel %vm2447, %v4849, -inf
        %4868 = vmax.xlane.f32.xlu0 %v4852
        %v4869 = vpop.xlane.xlu0 %4868
        %4870 = vmax.xlane.f32.xlu0 %v4853
        %v4871 = vpop.xlane.xlu0 %4870
        %4872 = vmax.xlane.f32.xlu0 %v4854
        %v4873 = vpop.xlane.xlu0 %4872
        %4874 = vmax.xlane.f32.xlu0 %v4855
        %v4875 = vpop.xlane.xlu0 %4874
        %4876 = vmax.xlane.f32.xlu0 %v4856
        %v4877 = vpop.xlane.xlu0 %4876
        %4878 = vmax.xlane.f32.xlu0 %v4857
        %v4879 = vpop.xlane.xlu0 %4878
        %4880 = vmax.xlane.f32.xlu0 %v4858
        %v4881 = vpop.xlane.xlu0 %4880
        %4882 = vmax.xlane.f32.xlu0 %v4859
        %v4883 = vpop.xlane.xlu0 %4882
        %4884 = vmax.xlane.f32.xlu0 %v4860
        %v4885 = vpop.xlane.xlu0 %4884
        %4886 = vmax.xlane.f32.xlu0 %v4861
        %v4887 = vpop.xlane.xlu0 %4886
        %4888 = vmax.xlane.f32.xlu0 %v4862
        %v4889 = vpop.xlane.xlu0 %4888
        %4890 = vmax.xlane.f32.xlu0 %v4863
        %v4891 = vpop.xlane.xlu0 %4890
        %4892 = vmax.xlane.f32.xlu0 %v4864
        %v4893 = vpop.xlane.xlu0 %4892
        %4894 = vmax.xlane.f32.xlu0 %v4865
        %v4895 = vpop.xlane.xlu0 %4894
        %4896 = vmax.xlane.f32.xlu0 %v4866
        %v4897 = vpop.xlane.xlu0 %4896
        %4898 = vmax.xlane.f32.xlu0 %v4867
        %v4899 = vpop.xlane.xlu0 %4898
        %v4900 = vsub.f32 %v4852, %v4869
        %v4901 = vsub.f32 %v4853, %v4871
        %v4902 = vsub.f32 %v4854, %v4873
        %v4903 = vsub.f32 %v4855, %v4875
        %v4904 = vsub.f32 %v4856, %v4877
        %v4905 = vsub.f32 %v4857, %v4879
        %v4906 = vsub.f32 %v4858, %v4881
        %v4907 = vsub.f32 %v4859, %v4883
        %v4908 = vsub.f32 %v4860, %v4885
        %v4909 = vsub.f32 %v4861, %v4887
        %v4910 = vsub.f32 %v4862, %v4889
        %v4911 = vsub.f32 %v4863, %v4891
        %v4912 = vsub.f32 %v4864, %v4893
        %v4913 = vsub.f32 %v4865, %v4895
        %v4914 = vsub.f32 %v4866, %v4897
        %v4915 = vsub.f32 %v4867, %v4899
        %v4916 = vmul.f32 %v4900, 1.442695
        %v4917 = vpow.pop %v4916
        %v4918 = vmul.f32 %v4901, 1.442695
        %v4919 = vpow.pop %v4918
        %v4920 = vmul.f32 %v4902, 1.442695
        %v4921 = vpow.pop %v4920
        %v4922 = vmul.f32 %v4903, 1.442695
        %v4923 = vpow.pop %v4922
        %v4924 = vmul.f32 %v4904, 1.442695
        %v4925 = vpow.pop %v4924
        %v4926 = vmul.f32 %v4905, 1.442695
        %v4927 = vpow.pop %v4926
        %v4928 = vmul.f32 %v4906, 1.442695
        %v4929 = vpow.pop %v4928
        %v4930 = vmul.f32 %v4907, 1.442695
        %v4931 = vpow.pop %v4930
        %v4932 = vmul.f32 %v4908, 1.442695
        %v4933 = vpow.pop %v4932
        %v4934 = vmul.f32 %v4909, 1.442695
        %v4935 = vpow.pop %v4934
        %v4936 = vmul.f32 %v4910, 1.442695
        %v4937 = vpow.pop %v4936
        %v4938 = vmul.f32 %v4911, 1.442695
        %v4939 = vpow.pop %v4938
        %v4940 = vmul.f32 %v4912, 1.442695
        %v4941 = vpow.pop %v4940
        %v4942 = vmul.f32 %v4913, 1.442695
        %v4943 = vpow.pop %v4942
        %v4944 = vmul.f32 %v4914, 1.442695
        %v4945 = vpow.pop %v4944
        %v4946 = vmul.f32 %v4915, 1.442695
        %v4947 = vpow.pop %v4946
        %4948 = vadd.xlane.f32.xlu0 %v4917
        %v4949 = vpop.xlane.xlu0 %4948
        %4950 = vadd.xlane.f32.xlu0 %v4919
        %v4951 = vpop.xlane.xlu0 %4950
        %4952 = vadd.xlane.f32.xlu0 %v4921
        %v4953 = vpop.xlane.xlu0 %4952
        %4954 = vadd.xlane.f32.xlu0 %v4923
        %v4955 = vpop.xlane.xlu0 %4954
        %4956 = vadd.xlane.f32.xlu0 %v4925
        %v4957 = vpop.xlane.xlu0 %4956
        %4958 = vadd.xlane.f32.xlu0 %v4927
        %v4959 = vpop.xlane.xlu0 %4958
        %4960 = vadd.xlane.f32.xlu0 %v4929
        %v4961 = vpop.xlane.xlu0 %4960
        %4962 = vadd.xlane.f32.xlu0 %v4931
        %v4963 = vpop.xlane.xlu0 %4962
        %4964 = vadd.xlane.f32.xlu0 %v4933
        %v4965 = vpop.xlane.xlu0 %4964
        %4966 = vadd.xlane.f32.xlu0 %v4935
        %v4967 = vpop.xlane.xlu0 %4966
        %4968 = vadd.xlane.f32.xlu0 %v4937
        %v4969 = vpop.xlane.xlu0 %4968
        %4970 = vadd.xlane.f32.xlu0 %v4939
        %v4971 = vpop.xlane.xlu0 %4970
        %4972 = vadd.xlane.f32.xlu0 %v4941
        %v4973 = vpop.xlane.xlu0 %4972
        %4974 = vadd.xlane.f32.xlu0 %v4943
        %v4975 = vpop.xlane.xlu0 %4974
        %4976 = vadd.xlane.f32.xlu0 %v4945
        %v4977 = vpop.xlane.xlu0 %4976
        %4978 = vadd.xlane.f32.xlu0 %v4947
        %v4979 = vpop.xlane.xlu0 %4978
        %v4980 = vrcp.pop %v4949
        %v4981 = vrcp.pop %v4951
        %v4982 = vrcp.pop %v4953
        %v4983 = vrcp.pop %v4955
        %v4984 = vrcp.pop %v4957
        %v4985 = vrcp.pop %v4959
        %v4986 = vrcp.pop %v4961
        %v4987 = vrcp.pop %v4963
        %v4988 = vrcp.pop %v4965
        %v4989 = vrcp.pop %v4967
        %v4990 = vrcp.pop %v4969
        %v4991 = vrcp.pop %v4971
        %v4992 = vrcp.pop %v4973
        %v4993 = vrcp.pop %v4975
        %v4994 = vrcp.pop %v4977
        %v4995 = vrcp.pop %v4979
        %v4996 = vmul.f32 %v4917, %v4980
        %v4997 = vmul.f32 %v4919, %v4981
        %v4998 = vmul.f32 %v4921, %v4982
        %v4999 = vmul.f32 %v4923, %v4983
        %v5000 = vmul.f32 %v4925, %v4984
        %v5001 = vmul.f32 %v4927, %v4985
        %v5002 = vmul.f32 %v4929, %v4986
        %v5003 = vmul.f32 %v4931, %v4987
        %v5004 = vmul.f32 %v4933, %v4988
        %v5005 = vmul.f32 %v4935, %v4989
        %v5006 = vmul.f32 %v4937, %v4990
        %v5007 = vmul.f32 %v4939, %v4991
        %v5008 = vmul.f32 %v4941, %v4992
        %v5009 = vmul.f32 %v4943, %v4993
        %v5010 = vmul.f32 %v4945, %v4994
        %v5011 = vmul.f32 %v4947, %v4995
        %v5012 = vpack.c.bf16 %v4997, %v4996
        %v5013 = vpack.c.bf16 %v4999, %v4998
        %v5014 = vpack.c.bf16 %v5001, %v5000
        %v5015 = vpack.c.bf16 %v5003, %v5002
        %v5016 = vpack.c.bf16 %v5005, %v5004
        %v5017 = vpack.c.bf16 %v5007, %v5006
        %v5018 = vpack.c.bf16 %v5009, %v5008
        %v5019 = vpack.c.bf16 %v5011, %v5010
        %5028 = vrot.lane.b32.xlu0 %v2391, 64
        %v5029 = vpop.permute.xlu0 %5028
        %5030 = vrot.lane.b32.xlu0 %v2394, 64
        %v5031 = vpop.permute.xlu0 %5030
        %5032 = vrot.lane.b32.xlu0 %v2397, 64
        %v5033 = vpop.permute.xlu0 %5032
        %5034 = vrot.lane.b32.xlu0 %v2400, 64
        %v5035 = vpop.permute.xlu0 %5034
        %5036 = vrot.lane.b32.xlu0 %v2403, 64
        %v5037 = vpop.permute.xlu0 %5036
        %5038 = vrot.lane.b32.xlu0 %v2406, 64
        %v5039 = vpop.permute.xlu0 %5038
        %5040 = vrot.lane.b32.xlu0 %v2409, 64
        %v5041 = vpop.permute.xlu0 %5040
        %5042 = vrot.lane.b32.xlu0 %v2412, 64
        %v5043 = vpop.permute.xlu0 %5042
        %5052 = vmatprep.subr.bf16.mxu0 0
        %5053 = vmatpush1.bf16.msra.mxu0 %v5029
        %5054 = vmatprep.subr.bf16.mxu0 0
        %5055 = vmatpush1.bf16.msra.mxu0 %v5031
        %5056 = vmatprep.subr.bf16.mxu0 0
        %5057 = vmatpush1.bf16.msra.mxu0 %v5033
        %5058 = vmatprep.subr.bf16.mxu0 0
        %5059 = vmatpush1.bf16.msra.mxu0 %v5035
        %5060 = vmatprep.subr.bf16.mxu0 0
        %5061 = vmatpush1.bf16.msra.mxu0 %v5037
        %5062 = vmatprep.subr.bf16.mxu0 0
        %5063 = vmatpush1.bf16.msra.mxu0 %v5039
        %5064 = vmatprep.subr.bf16.mxu0 0
        %5065 = vmatpush1.bf16.msra.mxu0 %v5041
        %5066 = vmatprep.subr.bf16.mxu0 0
        %5067 = vmatpush1.bf16.msra.mxu0 %v5043
        %5068 = vmatprep.subr.bf16.mxu0 0
        %5069 = vmatpush1.bf16.msra.mxu0 0
        %5070 = vmatprep.subr.bf16.mxu0 0
        %5071 = vmatpush1.bf16.msra.mxu0 0
        %5072 = vmatprep.subr.bf16.mxu0 0
        %5073 = vmatpush1.bf16.msra.mxu0 0
        %5074 = vmatprep.subr.bf16.mxu0 0
        %5075 = vmatpush1.bf16.msra.mxu0 0
        %5076 = vmatprep.subr.bf16.mxu0 0
        %5077 = vmatpush1.bf16.msra.mxu0 0
        %5078 = vmatprep.subr.bf16.mxu0 0
        %5079 = vmatpush1.bf16.msra.mxu0 0
        %5080 = vmatprep.subr.bf16.mxu0 0
        %5081 = vmatpush1.bf16.msra.mxu0 0
        %5082 = vmatprep.subr.bf16.mxu0 0
        %5083 = vmatpush1.bf16.msra.mxu0 0
        %5084 = vmatprep.mubr.bf16.mxu0 0
        %5085 = vmatmul.mubr.bf16.gmra.mrb[0].mxu0 %v5012
        %v5086 = vpop.f32.mrb[0].mxu0
        %v5087 = vadd.f32 0.0, %v5086
        %v5088 = vpop.f32.mrb[0].mxu0
        %v5089 = vpop.f32.mrb[0].mxu0
        %v5090 = vadd.f32 0.0, %v5089
        %v5091 = vpop.f32.mrb[0].mxu0
        %5092 = vmatprep.mubr.bf16.mxu0 0
        %5093 = vmatmul.mubr.bf16.gmra.mrb[0].mxu0 %v5013
        %v5094 = vpop.f32.mrb[0].mxu0
        %v5095 = vadd.f32 0.0, %v5094
        %v5096 = vpop.f32.mrb[0].mxu0
        %v5097 = vpop.f32.mrb[0].mxu0
        %v5098 = vadd.f32 0.0, %v5097
        %v5099 = vpop.f32.mrb[0].mxu0
        %5100 = vmatprep.mubr.bf16.mxu0 0
        %5101 = vmatmul.mubr.bf16.gmra.mrb[0].mxu0 %v5014
        %v5102 = vpop.f32.mrb[0].mxu0
        %v5103 = vadd.f32 0.0, %v5102
        %v5104 = vpop.f32.mrb[0].mxu0
        %v5105 = vpop.f32.mrb[0].mxu0
        %v5106 = vadd.f32 0.0, %v5105
        %v5107 = vpop.f32.mrb[0].mxu0
        %5108 = vmatprep.mubr.bf16.mxu0 0
        %5109 = vmatmul.mubr.bf16.gmra.mrb[0].mxu0 %v5015
        %v5110 = vpop.f32.mrb[0].mxu0
        %v5111 = vadd.f32 0.0, %v5110
        %v5112 = vpop.f32.mrb[0].mxu0
        %v5113 = vpop.f32.mrb[0].mxu0
        %v5114 = vadd.f32 0.0, %v5113
        %v5115 = vpop.f32.mrb[0].mxu0
        %5116 = vmatprep.mubr.bf16.mxu0 0
        %5117 = vmatmul.mubr.bf16.gmra.mrb[0].mxu0 %v5016
        %v5118 = vpop.f32.mrb[0].mxu0
        %v5119 = vadd.f32 0.0, %v5118
        %v5120 = vpop.f32.mrb[0].mxu0
        %v5121 = vpop.f32.mrb[0].mxu0
        %v5122 = vadd.f32 0.0, %v5121
        %v5123 = vpop.f32.mrb[0].mxu0
        %5124 = vmatprep.mubr.bf16.mxu0 0
        %5125 = vmatmul.mubr.bf16.gmra.mrb[0].mxu0 %v5017
        %v5126 = vpop.f32.mrb[0].mxu0
        %v5127 = vadd.f32 0.0, %v5126
        %v5128 = vpop.f32.mrb[0].mxu0
        %v5129 = vpop.f32.mrb[0].mxu0
        %v5130 = vadd.f32 0.0, %v5129
        %v5131 = vpop.f32.mrb[0].mxu0
        %5132 = vmatprep.mubr.bf16.mxu0 0
        %5133 = vmatmul.mubr.bf16.gmra.mrb[0].mxu0 %v5018
        %v5134 = vpop.f32.mrb[0].mxu0
        %v5135 = vadd.f32 0.0, %v5134
        %v5136 = vpop.f32.mrb[0].mxu0
        %v5137 = vpop.f32.mrb[0].mxu0
        %v5138 = vadd.f32 0.0, %v5137
        %v5139 = vpop.f32.mrb[0].mxu0
        %5140 = vmatprep.mubr.bf16.mxu0 0
        %5141 = vmatmul.mubr.bf16.gmra.mrb[0].mxu0 %v5019
        %v5142 = vpop.f32.mrb[0].mxu0
        %v5143 = vadd.f32 0.0, %v5142
        %v5144 = vpop.f32.mrb[0].mxu0
        %v5145 = vpop.f32.mrb[0].mxu0
        %v5146 = vadd.f32 0.0, %v5145
        %v5147 = vpop.f32.mrb[0].mxu0
        %5148 = vdwg.mxu0
        %5165 = vrot.lane.b32.xlu0 %v3287, 64
        %v5166 = vpop.permute.xlu0 %5165
        %5167 = vrot.lane.b32.xlu0 %v3290, 64
        %v5168 = vpop.permute.xlu0 %5167
        %5169 = vrot.lane.b32.xlu0 %v3295, 64
        %v5170 = vpop.permute.xlu0 %5169
        %5171 = vrot.lane.b32.xlu0 %v3298, 64
        %v5172 = vpop.permute.xlu0 %5171
        %5173 = vrot.lane.b32.xlu0 %v3303, 64
        %v5174 = vpop.permute.xlu0 %5173
        %5175 = vrot.lane.b32.xlu0 %v3306, 64
        %v5176 = vpop.permute.xlu0 %5175
        %5177 = vrot.lane.b32.xlu0 %v3311, 64
        %v5178 = vpop.permute.xlu0 %5177
        %5179 = vrot.lane.b32.xlu0 %v3314, 64
        %v5180 = vpop.permute.xlu0 %5179
        %5181 = vrot.lane.b32.xlu0 %v3319, 64
        %v5182 = vpop.permute.xlu0 %5181
        %5183 = vrot.lane.b32.xlu0 %v3322, 64
        %v5184 = vpop.permute.xlu0 %5183
        %5185 = vrot.lane.b32.xlu0 %v3327, 64
        %v5186 = vpop.permute.xlu0 %5185
        %5187 = vrot.lane.b32.xlu0 %v3330, 64
        %v5188 = vpop.permute.xlu0 %5187
        %5189 = vrot.lane.b32.xlu0 %v3335, 64
        %v5190 = vpop.permute.xlu0 %5189
        %5191 = vrot.lane.b32.xlu0 %v3338, 64
        %v5192 = vpop.permute.xlu0 %5191
        %5193 = vrot.lane.b32.xlu0 %v3343, 64
        %v5194 = vpop.permute.xlu0 %5193
        %5195 = vrot.lane.b32.xlu0 %v3346, 64
        %v5196 = vpop.permute.xlu0 %5195
        %5229 = vrot.lane.b32.xlu0 %v4187, 64
        %v5230 = vpop.permute.xlu0 %5229
        %5231 = vrot.lane.b32.xlu0 %v4190, 64
        %v5232 = vpop.permute.xlu0 %5231
        %5233 = vrot.lane.b32.xlu0 %v4195, 64
        %v5234 = vpop.permute.xlu0 %5233
        %5235 = vrot.lane.b32.xlu0 %v4198, 64
        %v5236 = vpop.permute.xlu0 %5235
        %5237 = vrot.lane.b32.xlu0 %v4203, 64
        %v5238 = vpop.permute.xlu0 %5237
        %5239 = vrot.lane.b32.xlu0 %v4206, 64
        %v5240 = vpop.permute.xlu0 %5239
        %5241 = vrot.lane.b32.xlu0 %v4211, 64
        %v5242 = vpop.permute.xlu0 %5241
        %5243 = vrot.lane.b32.xlu0 %v4214, 64
        %v5244 = vpop.permute.xlu0 %5243
        %5245 = vrot.lane.b32.xlu0 %v4219, 64
        %v5246 = vpop.permute.xlu0 %5245
        %5247 = vrot.lane.b32.xlu0 %v4222, 64
        %v5248 = vpop.permute.xlu0 %5247
        %5249 = vrot.lane.b32.xlu0 %v4227, 64
        %v5250 = vpop.permute.xlu0 %5249
        %5251 = vrot.lane.b32.xlu0 %v4230, 64
        %v5252 = vpop.permute.xlu0 %5251
        %5253 = vrot.lane.b32.xlu0 %v4235, 64
        %v5254 = vpop.permute.xlu0 %5253
        %5255 = vrot.lane.b32.xlu0 %v4238, 64
        %v5256 = vpop.permute.xlu0 %5255
        %5257 = vrot.lane.b32.xlu0 %v4243, 64
        %v5258 = vpop.permute.xlu0 %5257
        %5259 = vrot.lane.b32.xlu0 %v4246, 64
        %v5260 = vpop.permute.xlu0 %5259
        %5293 = vrot.lane.b32.xlu0 %v5087, 64
        %v5294 = vpop.permute.xlu0 %5293
        %5295 = vrot.lane.b32.xlu0 %v5090, 64
        %v5296 = vpop.permute.xlu0 %5295
        %5297 = vrot.lane.b32.xlu0 %v5095, 64
        %v5298 = vpop.permute.xlu0 %5297
        %5299 = vrot.lane.b32.xlu0 %v5098, 64
        %v5300 = vpop.permute.xlu0 %5299
        %5301 = vrot.lane.b32.xlu0 %v5103, 64
        %v5302 = vpop.permute.xlu0 %5301
        %5303 = vrot.lane.b32.xlu0 %v5106, 64
        %v5304 = vpop.permute.xlu0 %5303
        %5305 = vrot.lane.b32.xlu0 %v5111, 64
        %v5306 = vpop.permute.xlu0 %5305
        %5307 = vrot.lane.b32.xlu0 %v5114, 64
        %v5308 = vpop.permute.xlu0 %5307
        %5309 = vrot.lane.b32.xlu0 %v5119, 64
        %v5310 = vpop.permute.xlu0 %5309
        %5311 = vrot.lane.b32.xlu0 %v5122, 64
        %v5312 = vpop.permute.xlu0 %5311
        %5313 = vrot.lane.b32.xlu0 %v5127, 64
        %v5314 = vpop.permute.xlu0 %5313
        %5315 = vrot.lane.b32.xlu0 %v5130, 64
        %v5316 = vpop.permute.xlu0 %5315
        %5317 = vrot.lane.b32.xlu0 %v5135, 64
        %v5318 = vpop.permute.xlu0 %5317
        %5319 = vrot.lane.b32.xlu0 %v5138, 64
        %v5320 = vpop.permute.xlu0 %5319
        %5321 = vrot.lane.b32.xlu0 %v5143, 64
        %v5322 = vpop.permute.xlu0 %5321
        %5323 = vrot.lane.b32.xlu0 %v5146, 64
        %v5324 = vpop.permute.xlu0 %5323
        %v5341 = vsel %vm2448, %v2797, %v5166
        %v5342 = vsel %vm2448, %v2800, %v5168
        %v5343 = vsel %vm2448, %v2805, %v5170
        %v5344 = vsel %vm2448, %v2808, %v5172
        %v5345 = vsel %vm2448, %v2813, %v5174
        %v5346 = vsel %vm2448, %v2816, %v5176
        %v5347 = vsel %vm2448, %v2821, %v5178
        %v5348 = vsel %vm2448, %v2824, %v5180
        %v5349 = vsel %vm2448, %v2829, %v5182
        %v5350 = vsel %vm2448, %v2832, %v5184
        %v5351 = vsel %vm2448, %v2837, %v5186
        %v5352 = vsel %vm2448, %v2840, %v5188
        %v5353 = vsel %vm2448, %v2845, %v5190
        %v5354 = vsel %vm2448, %v2848, %v5192
        %v5355 = vsel %vm2448, %v2853, %v5194
        %v5356 = vsel %vm2448, %v2856, %v5196
        %v5357 = vsel %vm2448, %v3697, %v5230
        %v5358 = vsel %vm2448, %v3700, %v5232
        %v5359 = vsel %vm2448, %v3705, %v5234
        %v5360 = vsel %vm2448, %v3708, %v5236
        %v5361 = vsel %vm2448, %v3713, %v5238
        %v5362 = vsel %vm2448, %v3716, %v5240
        %v5363 = vsel %vm2448, %v3721, %v5242
        %v5364 = vsel %vm2448, %v3724, %v5244
        %v5365 = vsel %vm2448, %v3729, %v5246
        %v5366 = vsel %vm2448, %v3732, %v5248
        %v5367 = vsel %vm2448, %v3737, %v5250
        %v5368 = vsel %vm2448, %v3740, %v5252
        %v5369 = vsel %vm2448, %v3745, %v5254
        %v5370 = vsel %vm2448, %v3748, %v5256
        %v5371 = vsel %vm2448, %v3753, %v5258
        %v5372 = vsel %vm2448, %v3756, %v5260
        %v5373 = vsel %vm2448, %v4597, %v5294
        %v5374 = vsel %vm2448, %v4600, %v5296
        %v5375 = vsel %vm2448, %v4605, %v5298
        %v5376 = vsel %vm2448, %v4608, %v5300
        %v5377 = vsel %vm2448, %v4613, %v5302
        %v5378 = vsel %vm2448, %v4616, %v5304
        %v5379 = vsel %vm2448, %v4621, %v5306
        %v5380 = vsel %vm2448, %v4624, %v5308
        %v5381 = vsel %vm2448, %v4629, %v5310
        %v5382 = vsel %vm2448, %v4632, %v5312
        %v5383 = vsel %vm2448, %v4637, %v5314
        %v5384 = vsel %vm2448, %v4640, %v5316
        %v5385 = vsel %vm2448, %v4645, %v5318
        %v5386 = vsel %vm2448, %v4648, %v5320
        %v5387 = vsel %vm2448, %v4653, %v5322
        %v5388 = vsel %vm2448, %v4656, %v5324
        %v5389 = vpack.c.bf16 %v5342, %v5341
        %v5390 = vpack.c.bf16 %v5358, %v5357
        %v5391 = vpack.c.bf16 %v5374, %v5373
        %v5392 = vpack.c.bf16 %v5344, %v5343
        %v5393 = vpack.c.bf16 %v5360, %v5359
        %v5394 = vpack.c.bf16 %v5376, %v5375
        %v5395 = vpack.c.bf16 %v5346, %v5345
        %v5396 = vpack.c.bf16 %v5362, %v5361
        %v5397 = vpack.c.bf16 %v5378, %v5377
        %v5398 = vpack.c.bf16 %v5348, %v5347
        %v5399 = vpack.c.bf16 %v5364, %v5363
        %v5400 = vpack.c.bf16 %v5380, %v5379
        %v5401 = vpack.c.bf16 %v5350, %v5349
        %v5402 = vpack.c.bf16 %v5366, %v5365
        %v5403 = vpack.c.bf16 %v5382, %v5381
        %v5404 = vpack.c.bf16 %v5352, %v5351
        %v5405 = vpack.c.bf16 %v5368, %v5367
        %v5406 = vpack.c.bf16 %v5384, %v5383
        %v5407 = vpack.c.bf16 %v5354, %v5353
        %v5408 = vpack.c.bf16 %v5370, %v5369
        %v5409 = vpack.c.bf16 %v5386, %v5385
        %v5410 = vpack.c.bf16 %v5356, %v5355
        %v5411 = vpack.c.bf16 %v5372, %v5371
        %v5412 = vpack.c.bf16 %v5388, %v5387
        %v5413 = vld [vmem:[#allocation8] sm:$0x7]
        %v5415 = vlaneseq
        %v5416 = vshrl.u32 %v5415, 7
        %v5417 = vsub.s32 0, %v5416
        %v5418 = vrot.slane %v5413, %v5417
        %v5419 = vlaneseq
        %v5420 = vshrl.u32 %v5419, 7
        %v5421 = vsub.s32 1, %v5420
        %v5422 = vrot.slane %v5413, %v5421
        %v5423 = vlaneseq
        %v5424 = vshrl.u32 %v5423, 7
        %v5425 = vsub.s32 2, %v5424
        %v5426 = vrot.slane %v5413, %v5425
        %5430 = vmatprep.subr.bf16.mxu0 %v1124
        %5431 = vmatpush1.bf16.msra.mxu0 %v1123
        %5432 = vmatprep.subr.bf16.mxu0 %v1127
        %5433 = vmatpush1.bf16.msra.mxu0 %v1126
        %5434 = vmatprep.subr.bf16.mxu0 %v1130
        %5435 = vmatpush1.bf16.msra.mxu0 %v1129
        %5436 = vmatprep.subr.bf16.mxu0 %v1133
        %5437 = vmatpush1.bf16.msra.mxu0 %v1132
        %5438 = vmatprep.subr.bf16.mxu0 %v1136
        %5439 = vmatpush1.bf16.msra.mxu0 %v1135
        %5440 = vmatprep.subr.bf16.mxu0 %v1139
        %5441 = vmatpush1.bf16.msra.mxu0 %v1138
        %5442 = vmatprep.subr.bf16.mxu0 %v1142
        %5443 = vmatpush1.bf16.msra.mxu0 %v1141
        %5444 = vmatprep.subr.bf16.mxu0 %v1145
        %5445 = vmatpush1.bf16.msra.mxu0 %v1144
        %5446 = vmatprep.subr.bf16.mxu0 %v1148
        %5447 = vmatpush1.bf16.msra.mxu0 %v1147
        %5448 = vmatprep.subr.bf16.mxu0 %v1151
        %5449 = vmatpush1.bf16.msra.mxu0 %v1150
        %5450 = vmatprep.subr.bf16.mxu0 %v1154
        %5451 = vmatpush1.bf16.msra.mxu0 %v1153
        %5452 = vmatprep.subr.bf16.mxu0 %v1157
        %5453 = vmatpush1.bf16.msra.mxu0 %v1156
        %5454 = vmatprep.subr.bf16.mxu0 %v1160
        %5455 = vmatpush1.bf16.msra.mxu0 %v1159
        %5456 = vmatprep.subr.bf16.mxu0 %v1163
        %5457 = vmatpush1.bf16.msra.mxu0 %v1162
        %5458 = vmatprep.subr.bf16.mxu0 %v1166
        %5459 = vmatpush1.bf16.msra.mxu0 %v1165
        %5460 = vmatprep.subr.bf16.mxu0 %v1169
        %5461 = vmatpush1.bf16.msra.mxu0 %v1168
        %5462 = vmatprep.mubr.bf16.mxu0 %v5390
        %5463 = vmatmul.mubr.bf16.gmra.mrb[0].mxu0 %v5389
        %v5464 = vpop.f32.mrb[0].mxu0
        %v5465 = vadd.f32 %v5418, %v5464
        %v5466 = vpop.f32.mrb[0].mxu0
        %v5467 = vadd.f32 %v5422, %v5466
        %v5468 = vpop.f32.mrb[0].mxu0
        %v5469 = vadd.f32 %v5418, %v5468
        %v5470 = vpop.f32.mrb[0].mxu0
        %v5471 = vadd.f32 %v5422, %v5470
        %5472 = vmatprep.mubr.bf16.mxu0 %v5393
        %5473 = vmatmul.mubr.bf16.gmra.mrb[0].mxu0 %v5392
        %v5474 = vpop.f32.mrb[0].mxu0
        %v5475 = vadd.f32 %v5418, %v5474
        %v5476 = vpop.f32.mrb[0].mxu0
        %v5477 = vadd.f32 %v5422, %v5476
        %v5478 = vpop.f32.mrb[0].mxu0
        %v5479 = vadd.f32 %v5418, %v5478
        %v5480 = vpop.f32.mrb[0].mxu0
        %v5481 = vadd.f32 %v5422, %v5480
        %5482 = vmatprep.mubr.bf16.mxu0 %v5396
        %5483 = vmatmul.mubr.bf16.gmra.mrb[0].mxu0 %v5395
        %v5484 = vpop.f32.mrb[0].mxu0
        %v5485 = vadd.f32 %v5418, %v5484
        %v5486 = vpop.f32.mrb[0].mxu0
        %v5487 = vadd.f32 %v5422, %v5486
        %v5488 = vpop.f32.mrb[0].mxu0
        %v5489 = vadd.f32 %v5418, %v5488
        %v5490 = vpop.f32.mrb[0].mxu0
        %v5491 = vadd.f32 %v5422, %v5490
        %5492 = vmatprep.mubr.bf16.mxu0 %v5399
        %5493 = vmatmul.mubr.bf16.gmra.mrb[0].mxu0 %v5398
        %v5494 = vpop.f32.mrb[0].mxu0
        %v5495 = vadd.f32 %v5418, %v5494
        %v5496 = vpop.f32.mrb[0].mxu0
        %v5497 = vadd.f32 %v5422, %v5496
        %v5498 = vpop.f32.mrb[0].mxu0
        %v5499 = vadd.f32 %v5418, %v5498
        %v5500 = vpop.f32.mrb[0].mxu0
        %v5501 = vadd.f32 %v5422, %v5500
        %5502 = vmatprep.mubr.bf16.mxu0 %v5402
        %5503 = vmatmul.mubr.bf16.gmra.mrb[0].mxu0 %v5401
        %v5504 = vpop.f32.mrb[0].mxu0
        %v5505 = vadd.f32 %v5418, %v5504
        %v5506 = vpop.f32.mrb[0].mxu0
        %v5507 = vadd.f32 %v5422, %v5506
        %v5508 = vpop.f32.mrb[0].mxu0
        %v5509 = vadd.f32 %v5418, %v5508
        %v5510 = vpop.f32.mrb[0].mxu0
        %v5511 = vadd.f32 %v5422, %v5510
        %5512 = vmatprep.mubr.bf16.mxu0 %v5405
        %5513 = vmatmul.mubr.bf16.gmra.mrb[0].mxu0 %v5404
        %v5514 = vpop.f32.mrb[0].mxu0
        %v5515 = vadd.f32 %v5418, %v5514
        %v5516 = vpop.f32.mrb[0].mxu0
        %v5517 = vadd.f32 %v5422, %v5516
        %v5518 = vpop.f32.mrb[0].mxu0
        %v5519 = vadd.f32 %v5418, %v5518
        %v5520 = vpop.f32.mrb[0].mxu0
        %v5521 = vadd.f32 %v5422, %v5520
        %5522 = vmatprep.mubr.bf16.mxu0 %v5408
        %5523 = vmatmul.mubr.bf16.gmra.mrb[0].mxu0 %v5407
        %v5524 = vpop.f32.mrb[0].mxu0
        %v5525 = vadd.f32 %v5418, %v5524
        %v5526 = vpop.f32.mrb[0].mxu0
        %v5527 = vadd.f32 %v5422, %v5526
        %v5528 = vpop.f32.mrb[0].mxu0
        %v5529 = vadd.f32 %v5418, %v5528
        %v5530 = vpop.f32.mrb[0].mxu0
        %v5531 = vadd.f32 %v5422, %v5530
        %5532 = vmatprep.mubr.bf16.mxu0 %v5411
        %5533 = vmatmul.mubr.bf16.gmra.mrb[0].mxu0 %v5410
        %v5534 = vpop.f32.mrb[0].mxu0
        %v5535 = vadd.f32 %v5418, %v5534
        %v5536 = vpop.f32.mrb[0].mxu0
        %v5537 = vadd.f32 %v5422, %v5536
        %v5538 = vpop.f32.mrb[0].mxu0
        %v5539 = vadd.f32 %v5418, %v5538
        %v5540 = vpop.f32.mrb[0].mxu0
        %v5541 = vadd.f32 %v5422, %v5540
        %5542 = vdwg.mxu0
        %5543 = vmatprep.subr.bf16.mxu0 %v1172
        %5544 = vmatpush1.bf16.msra.mxu0 %v1171
        %5545 = vmatprep.subr.bf16.mxu0 %v1175
        %5546 = vmatpush1.bf16.msra.mxu0 %v1174
        %5547 = vmatprep.subr.bf16.mxu0 %v1178
        %5548 = vmatpush1.bf16.msra.mxu0 %v1177
        %5549 = vmatprep.subr.bf16.mxu0 %v1181
        %5550 = vmatpush1.bf16.msra.mxu0 %v1180
        %5551 = vmatprep.subr.bf16.mxu0 %v1184
        %5552 = vmatpush1.bf16.msra.mxu0 %v1183
        %5553 = vmatprep.subr.bf16.mxu0 %v1187
        %5554 = vmatpush1.bf16.msra.mxu0 %v1186
        %5555 = vmatprep.subr.bf16.mxu0 %v1190
        %5556 = vmatpush1.bf16.msra.mxu0 %v1189
        %5557 = vmatprep.subr.bf16.mxu0 %v1193
        %5558 = vmatpush1.bf16.msra.mxu0 %v1192
        %5559 = vmatprep.subr.bf16.mxu0 0
        %5560 = vmatpush1.bf16.msra.mxu0 0
        %5561 = vmatprep.subr.bf16.mxu0 0
        %5562 = vmatpush1.bf16.msra.mxu0 0
        %5563 = vmatprep.subr.bf16.mxu0 0
        %5564 = vmatpush1.bf16.msra.mxu0 0
        %5565 = vmatprep.subr.bf16.mxu0 0
        %5566 = vmatpush1.bf16.msra.mxu0 0
        %5567 = vmatprep.subr.bf16.mxu0 0
        %5568 = vmatpush1.bf16.msra.mxu0 0
        %5569 = vmatprep.subr.bf16.mxu0 0
        %5570 = vmatpush1.bf16.msra.mxu0 0
        %5571 = vmatprep.subr.bf16.mxu0 0
        %5572 = vmatpush1.bf16.msra.mxu0 0
        %5573 = vmatprep.subr.bf16.mxu0 0
        %5574 = vmatpush1.bf16.msra.mxu0 0
        %5575 = vmatprep.mubr.bf16.mxu0 0
        %5576 = vmatmul.mubr.bf16.gmra.mrb[0].mxu0 %v5391
        %v5577 = vpop.f32.mrb[0].mxu0
        %v5578 = vadd.f32 %v5465, %v5577
        %v5579 = vpop.f32.mrb[0].mxu0
        %v5580 = vadd.f32 %v5467, %v5579
        %v5581 = vpop.f32.mrb[0].mxu0
        %v5582 = vadd.f32 %v5469, %v5581
        %v5583 = vpop.f32.mrb[0].mxu0
        %v5584 = vadd.f32 %v5471, %v5583
        %5585 = vmatprep.mubr.bf16.mxu0 0
        %5586 = vmatmul.mubr.bf16.gmra.mrb[0].mxu0 %v5394
        %v5587 = vpop.f32.mrb[0].mxu0
        %v5588 = vadd.f32 %v5475, %v5587
        %v5589 = vpop.f32.mrb[0].mxu0
        %v5590 = vadd.f32 %v5477, %v5589
        %v5591 = vpop.f32.mrb[0].mxu0
        %v5592 = vadd.f32 %v5479, %v5591
        %v5593 = vpop.f32.mrb[0].mxu0
        %v5594 = vadd.f32 %v5481, %v5593
        %5595 = vmatprep.mubr.bf16.mxu0 0
        %5596 = vmatmul.mubr.bf16.gmra.mrb[0].mxu0 %v5397
        %v5597 = vpop.f32.mrb[0].mxu0
        %v5598 = vadd.f32 %v5485, %v5597
        %v5599 = vpop.f32.mrb[0].mxu0
        %v5600 = vadd.f32 %v5487, %v5599
        %v5601 = vpop.f32.mrb[0].mxu0
        %v5602 = vadd.f32 %v5489, %v5601
        %v5603 = vpop.f32.mrb[0].mxu0
        %v5604 = vadd.f32 %v5491, %v5603
        %5605 = vmatprep.mubr.bf16.mxu0 0
        %5606 = vmatmul.mubr.bf16.gmra.mrb[0].mxu0 %v5400
        %v5607 = vpop.f32.mrb[0].mxu0
        %v5608 = vadd.f32 %v5495, %v5607
        %v5609 = vpop.f32.mrb[0].mxu0
        %v5610 = vadd.f32 %v5497, %v5609
        %v5611 = vpop.f32.mrb[0].mxu0
        %v5612 = vadd.f32 %v5499, %v5611
        %v5613 = vpop.f32.mrb[0].mxu0
        %v5614 = vadd.f32 %v5501, %v5613
        %5615 = vmatprep.mubr.bf16.mxu0 0
        %5616 = vmatmul.mubr.bf16.gmra.mrb[0].mxu0 %v5403
        %v5617 = vpop.f32.mrb[0].mxu0
        %v5618 = vadd.f32 %v5505, %v5617
        %v5619 = vpop.f32.mrb[0].mxu0
        %v5620 = vadd.f32 %v5507, %v5619
        %v5621 = vpop.f32.mrb[0].mxu0
        %v5622 = vadd.f32 %v5509, %v5621
        %v5623 = vpop.f32.mrb[0].mxu0
        %v5624 = vadd.f32 %v5511, %v5623
        %5625 = vmatprep.mubr.bf16.mxu0 0
        %5626 = vmatmul.mubr.bf16.gmra.mrb[0].mxu0 %v5406
        %v5627 = vpop.f32.mrb[0].mxu0
        %v5628 = vadd.f32 %v5515, %v5627
        %v5629 = vpop.f32.mrb[0].mxu0
        %v5630 = vadd.f32 %v5517, %v5629
        %v5631 = vpop.f32.mrb[0].mxu0
        %v5632 = vadd.f32 %v5519, %v5631
        %v5633 = vpop.f32.mrb[0].mxu0
        %v5634 = vadd.f32 %v5521, %v5633
        %5635 = vmatprep.mubr.bf16.mxu0 0
        %5636 = vmatmul.mubr.bf16.gmra.mrb[0].mxu0 %v5409
        %v5637 = vpop.f32.mrb[0].mxu0
        %v5638 = vadd.f32 %v5525, %v5637
        %v5639 = vpop.f32.mrb[0].mxu0
        %v5640 = vadd.f32 %v5527, %v5639
        %v5641 = vpop.f32.mrb[0].mxu0
        %v5642 = vadd.f32 %v5529, %v5641
        %v5643 = vpop.f32.mrb[0].mxu0
        %v5644 = vadd.f32 %v5531, %v5643
        %5645 = vmatprep.mubr.bf16.mxu0 0
        %5646 = vmatmul.mubr.bf16.gmra.mrb[0].mxu0 %v5412
        %v5647 = vpop.f32.mrb[0].mxu0
        %v5648 = vadd.f32 %v5535, %v5647
        %v5649 = vpop.f32.mrb[0].mxu0
        %v5650 = vadd.f32 %v5537, %v5649
        %v5651 = vpop.f32.mrb[0].mxu0
        %v5652 = vadd.f32 %v5539, %v5651
        %v5653 = vpop.f32.mrb[0].mxu0
        %v5654 = vadd.f32 %v5541, %v5653
        %5655 = vdwg.mxu0
        %5656 = vmatprep.subr.bf16.mxu0 0
        %5657 = vmatpush1.bf16.msra.mxu0 %v1125
        %5658 = vmatprep.subr.bf16.mxu0 0
        %5659 = vmatpush1.bf16.msra.mxu0 %v1128
        %5660 = vmatprep.subr.bf16.mxu0 0
        %5661 = vmatpush1.bf16.msra.mxu0 %v1131
        %5662 = vmatprep.subr.bf16.mxu0 0
        %5663 = vmatpush1.bf16.msra.mxu0 %v1134
        %5664 = vmatprep.subr.bf16.mxu0 0
        %5665 = vmatpush1.bf16.msra.mxu0 %v1137
        %5666 = vmatprep.subr.bf16.mxu0 0
        %5667 = vmatpush1.bf16.msra.mxu0 %v1140
        %5668 = vmatprep.subr.bf16.mxu0 0
        %5669 = vmatpush1.bf16.msra.mxu0 %v1143
        %5670 = vmatprep.subr.bf16.mxu0 0
        %5671 = vmatpush1.bf16.msra.mxu0 %v1146
        %5672 = vmatprep.subr.bf16.mxu0 0
        %5673 = vmatpush1.bf16.msra.mxu0 %v1149
        %5674 = vmatprep.subr.bf16.mxu0 0
        %5675 = vmatpush1.bf16.msra.mxu0 %v1152
        %5676 = vmatprep.subr.bf16.mxu0 0
        %5677 = vmatpush1.bf16.msra.mxu0 %v1155
        %5678 = vmatprep.subr.bf16.mxu0 0
        %5679 = vmatpush1.bf16.msra.mxu0 %v1158
        %5680 = vmatprep.subr.bf16.mxu0 0
        %5681 = vmatpush1.bf16.msra.mxu0 %v1161
        %5682 = vmatprep.subr.bf16.mxu0 0
        %5683 = vmatpush1.bf16.msra.mxu0 %v1164
        %5684 = vmatprep.subr.bf16.mxu0 0
        %5685 = vmatpush1.bf16.msra.mxu0 %v1167
        %5686 = vmatprep.subr.bf16.mxu0 0
        %5687 = vmatpush1.bf16.msra.mxu0 %v1170
        %5688 = vmatprep.mubr.bf16.mxu0 %v5390
        %5689 = vmatmul.mubr.bf16.gmra.mrb[0].mxu0 %v5389
        %v5690 = vpop.f32.mrb[0].mxu0
        %v5691 = vadd.f32 %v5426, %v5690
        %v5692 = vpop.f32.mrb[0].mxu0
        %v5693 = vpop.f32.mrb[0].mxu0
        %v5694 = vadd.f32 %v5426, %v5693
        %v5695 = vpop.f32.mrb[0].mxu0
        %5696 = vmatprep.mubr.bf16.mxu0 %v5393
        %5697 = vmatmul.mubr.bf16.gmra.mrb[0].mxu0 %v5392
        %v5698 = vpop.f32.mrb[0].mxu0
        %v5699 = vadd.f32 %v5426, %v5698
        %v5700 = vpop.f32.mrb[0].mxu0
        %v5701 = vpop.f32.mrb[0].mxu0
        %v5702 = vadd.f32 %v5426, %v5701
        %v5703 = vpop.f32.mrb[0].mxu0
        %5704 = vmatprep.mubr.bf16.mxu0 %v5396
        %5705 = vmatmul.mubr.bf16.gmra.mrb[0].mxu0 %v5395
        %v5706 = vpop.f32.mrb[0].mxu0
        %v5707 = vadd.f32 %v5426, %v5706
        %v5708 = vpop.f32.mrb[0].mxu0
        %v5709 = vpop.f32.mrb[0].mxu0
        %v5710 = vadd.f32 %v5426, %v5709
        %v5711 = vpop.f32.mrb[0].mxu0
        %5712 = vmatprep.mubr.bf16.mxu0 %v5399
        %5713 = vmatmul.mubr.bf16.gmra.mrb[0].mxu0 %v5398
        %v5714 = vpop.f32.mrb[0].mxu0
        %v5715 = vadd.f32 %v5426, %v5714
        %v5716 = vpop.f32.mrb[0].mxu0
        %v5717 = vpop.f32.mrb[0].mxu0
        %v5718 = vadd.f32 %v5426, %v5717
        %v5719 = vpop.f32.mrb[0].mxu0
        %5720 = vmatprep.mubr.bf16.mxu0 %v5402
        %5721 = vmatmul.mubr.bf16.gmra.mrb[0].mxu0 %v5401
        %v5722 = vpop.f32.mrb[0].mxu0
        %v5723 = vadd.f32 %v5426, %v5722
        %v5724 = vpop.f32.mrb[0].mxu0
        %v5725 = vpop.f32.mrb[0].mxu0
        %v5726 = vadd.f32 %v5426, %v5725
        %v5727 = vpop.f32.mrb[0].mxu0
        %5728 = vmatprep.mubr.bf16.mxu0 %v5405
        %5729 = vmatmul.mubr.bf16.gmra.mrb[0].mxu0 %v5404
        %v5730 = vpop.f32.mrb[0].mxu0
        %v5731 = vadd.f32 %v5426, %v5730
        %v5732 = vpop.f32.mrb[0].mxu0
        %v5733 = vpop.f32.mrb[0].mxu0
        %v5734 = vadd.f32 %v5426, %v5733
        %v5735 = vpop.f32.mrb[0].mxu0
        %5736 = vmatprep.mubr.bf16.mxu0 %v5408
        %5737 = vmatmul.mubr.bf16.gmra.mrb[0].mxu0 %v5407
        %v5738 = vpop.f32.mrb[0].mxu0
        %v5739 = vadd.f32 %v5426, %v5738
        %v5740 = vpop.f32.mrb[0].mxu0
        %v5741 = vpop.f32.mrb[0].mxu0
        %v5742 = vadd.f32 %v5426, %v5741
        %v5743 = vpop.f32.mrb[0].mxu0
        %5744 = vmatprep.mubr.bf16.mxu0 %v5411
        %5745 = vmatmul.mubr.bf16.gmra.mrb[0].mxu0 %v5410
        %v5746 = vpop.f32.mrb[0].mxu0
        %v5747 = vadd.f32 %v5426, %v5746
        %v5748 = vpop.f32.mrb[0].mxu0
        %v5749 = vpop.f32.mrb[0].mxu0
        %v5750 = vadd.f32 %v5426, %v5749
        %v5751 = vpop.f32.mrb[0].mxu0
        %5752 = vdwg.mxu0
        %5753 = vmatprep.subr.bf16.mxu0 0
        %5754 = vmatpush1.bf16.msra.mxu0 %v1173
        %5755 = vmatprep.subr.bf16.mxu0 0
        %5756 = vmatpush1.bf16.msra.mxu0 %v1176
        %5757 = vmatprep.subr.bf16.mxu0 0
        %5758 = vmatpush1.bf16.msra.mxu0 %v1179
        %5759 = vmatprep.subr.bf16.mxu0 0
        %5760 = vmatpush1.bf16.msra.mxu0 %v1182
        %5761 = vmatprep.subr.bf16.mxu0 0
        %5762 = vmatpush1.bf16.msra.mxu0 %v1185
        %5763 = vmatprep.subr.bf16.mxu0 0
        %5764 = vmatpush1.bf16.msra.mxu0 %v1188
        %5765 = vmatprep.subr.bf16.mxu0 0
        %5766 = vmatpush1.bf16.msra.mxu0 %v1191
        %5767 = vmatprep.subr.bf16.mxu0 0
        %5768 = vmatpush1.bf16.msra.mxu0 %v1194
        %5769 = vmatprep.subr.bf16.mxu0 0
        %5770 = vmatpush1.bf16.msra.mxu0 0
        %5771 = vmatprep.subr.bf16.mxu0 0
        %5772 = vmatpush1.bf16.msra.mxu0 0
        %5773 = vmatprep.subr.bf16.mxu0 0
        %5774 = vmatpush1.bf16.msra.mxu0 0
        %5775 = vmatprep.subr.bf16.mxu0 0
        %5776 = vmatpush1.bf16.msra.mxu0 0
        %5777 = vmatprep.subr.bf16.mxu0 0
        %5778 = vmatpush1.bf16.msra.mxu0 0
        %5779 = vmatprep.subr.bf16.mxu0 0
        %5780 = vmatpush1.bf16.msra.mxu0 0
        %5781 = vmatprep.subr.bf16.mxu0 0
        %5782 = vmatpush1.bf16.msra.mxu0 0
        %5783 = vmatprep.subr.bf16.mxu0 0
        %5784 = vmatpush1.bf16.msra.mxu0 0
        %5785 = vmatprep.mubr.bf16.mxu0 0
        %5786 = vmatmul.mubr.bf16.gmra.mrb[0].mxu0 %v5391
        %v5787 = vpop.f32.mrb[0].mxu0
        %v5788 = vadd.f32 %v5691, %v5787
        %v5789 = vpop.f32.mrb[0].mxu0
        %v5790 = vpop.f32.mrb[0].mxu0
        %v5791 = vadd.f32 %v5694, %v5790
        %v5792 = vpop.f32.mrb[0].mxu0
        %5793 = vmatprep.mubr.bf16.mxu0 0
        %5794 = vmatmul.mubr.bf16.gmra.mrb[0].mxu0 %v5394
        %v5795 = vpop.f32.mrb[0].mxu0
        %v5796 = vadd.f32 %v5699, %v5795
        %v5797 = vpop.f32.mrb[0].mxu0
        %v5798 = vpop.f32.mrb[0].mxu0
        %v5799 = vadd.f32 %v5702, %v5798
        %v5800 = vpop.f32.mrb[0].mxu0
        %5801 = vmatprep.mubr.bf16.mxu0 0
        %5802 = vmatmul.mubr.bf16.gmra.mrb[0].mxu0 %v5397
        %v5803 = vpop.f32.mrb[0].mxu0
        %v5804 = vadd.f32 %v5707, %v5803
        %v5805 = vpop.f32.mrb[0].mxu0
        %v5806 = vpop.f32.mrb[0].mxu0
        %v5807 = vadd.f32 %v5710, %v5806
        %v5808 = vpop.f32.mrb[0].mxu0
        %5809 = vmatprep.mubr.bf16.mxu0 0
        %5810 = vmatmul.mubr.bf16.gmra.mrb[0].mxu0 %v5400
        %v5811 = vpop.f32.mrb[0].mxu0
        %v5812 = vadd.f32 %v5715, %v5811
        %v5813 = vpop.f32.mrb[0].mxu0
        %v5814 = vpop.f32.mrb[0].mxu0
        %v5815 = vadd.f32 %v5718, %v5814
        %v5816 = vpop.f32.mrb[0].mxu0
        %5817 = vmatprep.mubr.bf16.mxu0 0
        %5818 = vmatmul.mubr.bf16.gmra.mrb[0].mxu0 %v5403
        %v5819 = vpop.f32.mrb[0].mxu0
        %v5820 = vadd.f32 %v5723, %v5819
        %v5821 = vpop.f32.mrb[0].mxu0
        %v5822 = vpop.f32.mrb[0].mxu0
        %v5823 = vadd.f32 %v5726, %v5822
        %v5824 = vpop.f32.mrb[0].mxu0
        %5825 = vmatprep.mubr.bf16.mxu0 0
        %5826 = vmatmul.mubr.bf16.gmra.mrb[0].mxu0 %v5406
        %v5827 = vpop.f32.mrb[0].mxu0
        %v5828 = vadd.f32 %v5731, %v5827
        %v5829 = vpop.f32.mrb[0].mxu0
        %v5830 = vpop.f32.mrb[0].mxu0
        %v5831 = vadd.f32 %v5734, %v5830
        %v5832 = vpop.f32.mrb[0].mxu0
        %5833 = vmatprep.mubr.bf16.mxu0 0
        %5834 = vmatmul.mubr.bf16.gmra.mrb[0].mxu0 %v5409
        %v5835 = vpop.f32.mrb[0].mxu0
        %v5836 = vadd.f32 %v5739, %v5835
        %v5837 = vpop.f32.mrb[0].mxu0
        %v5838 = vpop.f32.mrb[0].mxu0
        %v5839 = vadd.f32 %v5742, %v5838
        %v5840 = vpop.f32.mrb[0].mxu0
        %5841 = vmatprep.mubr.bf16.mxu0 0
        %5842 = vmatmul.mubr.bf16.gmra.mrb[0].mxu0 %v5412
        %v5843 = vpop.f32.mrb[0].mxu0
        %v5844 = vadd.f32 %v5747, %v5843
        %v5845 = vpop.f32.mrb[0].mxu0
        %v5846 = vpop.f32.mrb[0].mxu0
        %v5847 = vadd.f32 %v5750, %v5846
        %v5848 = vpop.f32.mrb[0].mxu0
        %5849 = vdwg.mxu0
        %5850 = vst [vmem:[%s257] sm:$0xff] %v5578
        %5851 = vst [vmem:[%s257 + $0x8] sm:$0xff] %v5580
        %5852 = vst [vmem:[%s257 + $0x10] sm:$0xff] %v5788
        %5853 = vst [vmem:[%s257 + $0x18] sm:$0xff] %v5582
        %5854 = vst [vmem:[%s257 + $0x20] sm:$0xff] %v5584
        %5855 = vst [vmem:[%s257 + $0x28] sm:$0xff] %v5791
        %5856 = vst [vmem:[%s257 + $0x30] sm:$0xff] %v5588
        %5857 = vst [vmem:[%s257 + $0x38] sm:$0xff] %v5590
        %5858 = vst [vmem:[%s257 + $0x40] sm:$0xff] %v5796
        %5859 = vst [vmem:[%s257 + $0x48] sm:$0xff] %v5592
        %5860 = vst [vmem:[%s257 + $0x50] sm:$0xff] %v5594
        %5861 = vst [vmem:[%s257 + $0x58] sm:$0xff] %v5799
        %5862 = vst [vmem:[%s257 + $0x60] sm:$0xff] %v5598
        %5863 = vst [vmem:[%s257 + $0x68] sm:$0xff] %v5600
        %5864 = vst [vmem:[%s257 + $0x70] sm:$0xff] %v5804
        %5865 = vst [vmem:[%s257 + $0x78] sm:$0xff] %v5602
        %5866 = vst [vmem:[%s257 + $0x80] sm:$0xff] %v5604
        %5867 = vst [vmem:[%s257 + $0x88] sm:$0xff] %v5807
        %5868 = vst [vmem:[%s257 + $0x90] sm:$0xff] %v5608
        %5869 = vst [vmem:[%s257 + $0x98] sm:$0xff] %v5610
        %5870 = vst [vmem:[%s257 + $0xa0] sm:$0xff] %v5812
        %5871 = vst [vmem:[%s257 + $0xa8] sm:$0xff] %v5612
        %5872 = vst [vmem:[%s257 + $0xb0] sm:$0xff] %v5614
        %5873 = vst [vmem:[%s257 + $0xb8] sm:$0xff] %v5815
        %5874 = vst [vmem:[%s257 + $0xc0] sm:$0xff] %v5618
        %5875 = vst [vmem:[%s257 + $0xc8] sm:$0xff] %v5620
        %5876 = vst [vmem:[%s257 + $0xd0] sm:$0xff] %v5820
        %5877 = vst [vmem:[%s257 + $0xd8] sm:$0xff] %v5622
        %5878 = vst [vmem:[%s257 + $0xe0] sm:$0xff] %v5624
        %5879 = vst [vmem:[%s257 + $0xe8] sm:$0xff] %v5823
        %5880 = vst [vmem:[%s257 + $0xf0] sm:$0xff] %v5628
        %5881 = vst [vmem:[%s257 + $0xf8] sm:$0xff] %v5630
        %5882 = vst [vmem:[%s257 + $0x100] sm:$0xff] %v5828
        %5883 = vst [vmem:[%s257 + $0x108] sm:$0xff] %v5632
        %5884 = vst [vmem:[%s257 + $0x110] sm:$0xff] %v5634
        %5885 = vst [vmem:[%s257 + $0x118] sm:$0xff] %v5831
        %5886 = vst [vmem:[%s257 + $0x120] sm:$0xff] %v5638
        %5887 = vst [vmem:[%s257 + $0x128] sm:$0xff] %v5640
        %5888 = vst [vmem:[%s257 + $0x130] sm:$0xff] %v5836
        %5889 = vst [vmem:[%s257 + $0x138] sm:$0xff] %v5642
        %5890 = vst [vmem:[%s257 + $0x140] sm:$0xff] %v5644
        %5891 = vst [vmem:[%s257 + $0x148] sm:$0xff] %v5839
        %5892 = vst [vmem:[%s257 + $0x150] sm:$0xff] %v5648
        %5893 = vst [vmem:[%s257 + $0x158] sm:$0xff] %v5650
        %5894 = vst [vmem:[%s257 + $0x160] sm:$0xff] %v5844
        %5895 = vst [vmem:[%s257 + $0x168] sm:$0xff] %v5652
        %5896 = vst [vmem:[%s257 + $0x170] sm:$0xff] %v5654
        %5897 = vst [vmem:[%s257 + $0x178] sm:$0xff] %v5847
        %s5898 = sand.u32 %s120, 1
        %s5899 = scalar_lea.sflag [#allocation4], %s5898
        %s5900 = sand.u32 %s120, 1
        %s5901 = smul.addr %s5900, 384
        %s5902 = scalar_lea.vmem [#allocation10], %s5901
        // Predicated region
        $region53: #{tpu_custom_call.1} parent=35 // pred_check
          %p5903 = pneg %p130
        $region54: #{tpu_custom_call.1} parent=35 // pred_check_branch
          %5905 = sbr.rel (%p5903) target = $region56
        $region55: #{tpu_custom_call.1} parent=35 // pred_region
          %s5907 = ssub.s32 6144, 6144
          %5908 = vsyncadd %s5899, %s5907
          %s5909 = smul.addr %s23, 48
          %s5910 = smul.addr %s5909, 128
          %s5911 = scalar_lea.hbm %s4, %s5910
          %s5912 = sshll.u32 %s5902, 4
          %s5913 = int_to_ptr.vmem [resolvable:$true] %s5912
          %5918 = dma.vmem_to_hbm [thread:$0]  %s5913, 6144, %s5911, %s5899, 384, 384, 24
        $region56: #{tpu_custom_call.1} parent=35 // pred_fallthru
          _
      $region36: #{tpu_custom_call.1} parent=5 // pred_fallthru
        _
      %p5919 = scmp.le.s32.totalorder 2, %s18
      // Predicated region
      $region57: #{tpu_custom_call.1} parent=5 // pred_check
        %p5920 = pneg %p5919
      $region58: #{tpu_custom_call.1} parent=5 // pred_check_branch
        %5922 = sbr.rel (%p5920) target = $region60
      $region59: #{tpu_custom_call.1} parent=5 // pred_region
        %s5923 = ssub.s32 %s18, 2
        // Predicated region
        $region61: #{tpu_custom_call.1} parent=59 // pred_check
          %p5924 = pneg %p136
        $region62: #{tpu_custom_call.1} parent=59 // pred_check_branch
          %5926 = sbr.rel (%p5924) target = $region64
        $region63: #{tpu_custom_call.1} parent=59 // pred_region
          %s5927 = sand.u32 %s121, 1
          %s5928 = scalar_lea.sflag [#allocation4], %s5927
          %s5929 = sand.u32 %s121, 1
          %s5930 = smul.addr %s5929, 384
          %s5931 = scalar_lea.vmem [#allocation10], %s5930
          %5932 = dma.done %s5928, 6144
        $region64: #{tpu_custom_call.1} parent=59 // pred_fallthru
          _
      $region60: #{tpu_custom_call.1} parent=5 // pred_fallthru
        _
    $region6: #{tpu_custom_call.1} parent=1 // loop_footer
      %s22 = sadd.s32 1, %s18
    $region7: #{tpu_custom_call.1} parent=1 // loop_footer_branch
      %17 = sbr.rel target = $region3
    $region8: #{tpu_custom_call.1} parent=1 // loop_exit
      _
    %5933 = vsyncpa [#allocation3], 1
    %s5934 = scalar_lea.sflag [#allocation3], 1
    %5935 = vsyncpa %s5934, 1
    %5936 = vsyncpa [#allocation6], 1
    %5937 = vsyncpa [#allocation9], 1
    %5938 = vsyncpa [#allocation4], 1
    %s5939 = scalar_lea.sflag [#allocation4], 1
    %5940 = vsyncpa %s5939, 1

</llo_original>
